<compile_context>
chip_gen: v7x
topology: tpu7x:2x2x1
jax: 0.10.0
libtpu: 0.0.40
codegen_flags: <defaults>
</compile_context>

<pallas_src>
import functools

import jax
import jax.numpy as jnp
from jax.experimental import pallas as pl
from jax.experimental.pallas import tpu as pltpu


_LANE = 128  # lane-dense width for hidden activations and the padded final Linear


def _pad_up(v, m):
    return -(-v // m) * m


def _to_bf16(adj):
    """int8 0/1 adjacency (storage) -> bf16 MXU operand; no-op if already bf16."""
    if adj.dtype == jnp.bfloat16:
        return adj
    return adj.astype(jnp.float32).astype(jnp.bfloat16)


# --------------------------------------------------------------------------
# Kernels
# --------------------------------------------------------------------------
def _gcn_layer1_kernel(adj_ref, feat_ref, dinv_ref, b1_ref, w2_ref,
                       out_ref, acc_ref):
    """acc += (A+I) @ p1 over K;   finalize:
       h1 = relu(dinv_i * acc + b1) ;  out = dinv_i * (h1 @ W2)   (layer-2 input)."""
    k = pl.program_id(1)

    @pl.when(k == 0)
    def _():
        acc_ref[...] = jnp.zeros_like(acc_ref)

    # Exact 0/1 adjacency: int8 storage -> bf16 MXU operand, f32 accumulation.
    acc_ref[...] += jnp.dot(_to_bf16(adj_ref[...]), feat_ref[...],
                            preferred_element_type=jnp.float32)

    @pl.when(k == pl.num_programs(1) - 1)
    def _():
        dinv = dinv_ref[...]                                  # [tile_m, 1] f32
        h1 = jnp.maximum(acc_ref[...] * dinv + b1_ref[...], 0.0)   # f32 VPU
        p2 = jnp.dot(h1.astype(jnp.bfloat16), w2_ref[...],
                     preferred_element_type=jnp.float32) * dinv
        out_ref[...] = p2.astype(out_ref.dtype)


def _gcn_layer2_kernel(adj_ref, feat_ref, dinv_ref, b2_ref, w3_ref, b3_ref,
                       out_ref, acc_ref):
    """acc += (A+I) @ p2 over K;   finalize:
       out = relu(dinv_i * acc + b2) @ W3 + b3   (layer-2 + output Linear fused)."""
    k = pl.program_id(1)

    @pl.when(k == 0)
    def _():
        acc_ref[...] = jnp.zeros_like(acc_ref)

    acc_ref[...] += jnp.dot(_to_bf16(adj_ref[...]), feat_ref[...],
                            preferred_element_type=jnp.float32)

    @pl.when(k == pl.num_programs(1) - 1)
    def _():
        h2 = jnp.maximum(acc_ref[...] * dinv_ref[...] + b2_ref[...], 0.0)
        out_ref[...] = (jnp.dot(h2.astype(jnp.bfloat16), w3_ref[...],
                                preferred_element_type=jnp.float32)
                        + b3_ref[...]).astype(out_ref.dtype)


# --------------------------------------------------------------------------
# Wrapper helpers
# --------------------------------------------------------------------------
def _choose_tiles(n):
    """Padded node count + decoupled (row, K) adjacency tiles."""
    n_pad = 128 if n <= 128 else _pad_up(n, 256)
    # K (reduction) tile: largest of these dividing n_pad, capped at 2048 so the
    # int8 adj block stays <= 1 MiB (x2 buffers) - fits v7x's 64 MiB VMEM easily.
    tile_k = 128
    for cand in (2048, 1024, 512, 256):
        if n_pad % cand == 0:
            tile_k = cand
            break
    # Row tile: big (amortizes the lane-dense feature re-stream) but keep >=2 row
    # blocks for megacore / v7x dual-TC whenever the padded size allows it.
    if n_pad % 512 == 0 and n_pad // 512 >= 2:
        tile_m = 512
    elif n_pad % 256 == 0 and n_pad // 256 >= 2:
        tile_m = 256
    else:
        tile_m = 128
    return n_pad, tile_m, tile_k


def _compiler_params():
    return pltpu.CompilerParams(
        dimension_semantics=("parallel", "arbitrary"),
        vmem_limit_bytes=48 * 1024 * 1024,   # v7x-safe (<64 MiB), fine on v5e/v6e
    )


def prepare_graph(edge_index, n, n_pad, adj_dtype=jnp.int8):
    """Build (A+I) as an exact 0/1 matrix directly in padded, narrow-dtype form,
    plus D^{-1/2} (zero on padded rows).  For a static graph this should be
    computed once and cached across forward calls."""
    src, dst = edge_index[0], edge_index[1]
    # Degree (self-loop + in-degree) straight from the edge list - no O(N^2) pass.
    deg = jnp.ones((n,), jnp.float32).at[dst].add(1.0)
    dinv = jax.lax.rsqrt(deg)                                   # deg >= 1, safe
    dinv_pad = jnp.zeros((n_pad, 1), jnp.float32).at[:n, 0].set(dinv)

    idx = jnp.arange(n, dtype=jnp.int32)
    if jnp.issubdtype(adj_dtype, jnp.integer):
        adj = (jnp.zeros((n_pad, n_pad), adj_dtype)
               .at[dst, src].add(jnp.ones(src.shape, adj_dtype))   # A[i,j]=1, j->i
               .at[idx, idx].add(jnp.ones((n,), adj_dtype)))       # self loops
    else:
        adj = (jnp.zeros((n_pad, n_pad), jnp.float32)
               .at[dst, src].add(1.0)
               .at[idx, idx].add(1.0)).astype(adj_dtype)           # 0/1/2 exact
    return adj, dinv_pad


# --------------------------------------------------------------------------
# Forward
# --------------------------------------------------------------------------
def feature_imputer_forward(x, edge_index, mask_flag, params, adj_dtype=jnp.int8):
    """x: [N, C] f32, edge_index: [2, E] i32, mask_flag: [N] f32 -> [N, 3] f32."""
    n = x.shape[0]
    w1, b1, w2, b2, w3, b3 = params
    hid = w1.shape[1]
    out_dim = w3.shape[1]
    h_pad = _pad_up(hid, _LANE)       # lane-dense hidden width
    o_pad = _pad_up(out_dim, _LANE)   # lane-dense final Linear width

    n_pad, tile_m, tile_k = _choose_tiles(n)

    # ---- graph prep: exact 0/1 (A+I) in int8 + factored-out D^{-1/2} ------
    adj_nar, dinv_pad = prepare_graph(edge_index, n, n_pad, adj_dtype)

    # ---- lane-dense zero-padded weights (padded lanes stay exactly 0) -----
    w1_p = jnp.zeros((w1.shape[0], h_pad), jnp.float32).at[:, :hid].set(w1)
    b1_p = jnp.zeros((1, h_pad), jnp.float32).at[:, :hid].set(b1.reshape(1, -1))
    w2_p = jnp.zeros((h_pad, h_pad), jnp.bfloat16).at[:hid, :hid].set(
        w2.astype(jnp.bfloat16))
    b2_p = jnp.zeros((1, h_pad), jnp.float32).at[:, :hid].set(b2.reshape(1, -1))
    w3_p = jnp.zeros((h_pad, o_pad), jnp.bfloat16).at[:hid, :out_dim].set(
        w3.astype(jnp.bfloat16))
    b3_p = jnp.zeros((1, o_pad), jnp.float32).at[:, :out_dim].set(b3.reshape(1, -1))

    # ---- transform-first layer 1: p1 = D^{-1/2} (xcat @ W1), tiny matmul --
    xcat = jnp.concatenate([x, mask_flag[:, None]], axis=1)          # [N, C+1]
    p1 = dinv_pad[:n] * (xcat @ w1_p)                                # [N, h_pad]
    p1_bf = jnp.zeros((n_pad, h_pad), jnp.bfloat16).at[:n].set(
        p1.astype(jnp.bfloat16))
    # Invariant: dinv_pad is 0 on padded rows and padded adjacency rows/cols are 0,
    # so padded rows of the inter-layer activation p2 are exactly zero.

    grid = (n_pad // tile_m, n_pad // tile_k)
    adj_spec = pl.BlockSpec((tile_m, tile_k), lambda i, k: (i, k))
    feat_spec = pl.BlockSpec((tile_k, h_pad), lambda i, k: (k, 0))
    dinv_spec = pl.BlockSpec((tile_m, 1), lambda i, k: (i, 0))

    def _full(shape):
        return pl.BlockSpec(shape, lambda i, k: (0, 0))

    # ---- layer 1 (+ layer-2 feature prep fused into the finalize) ---------
    p2_bf = pl.pallas_call(
        _gcn_layer1_kernel,
        out_shape=jax.ShapeDtypeStruct((n_pad, h_pad), jnp.bfloat16),
        grid_spec=pltpu.PrefetchScalarGridSpec(
            num_scalar_prefetch=0,
            grid=grid,
            in_specs=[adj_spec, feat_spec, dinv_spec,
                      _full((1, h_pad)), _full((h_pad, h_pad))],
            out_specs=pl.BlockSpec((tile_m, h_pad), lambda i, k: (i, 0)),
            scratch_shapes=[pltpu.VMEM((tile_m, h_pad), jnp.float32)],
        ),
        compiler_params=_compiler_params(),
    )(adj_nar, p1_bf, dinv_pad, b1_p, w2_p)

    # ---- layer 2 + output Linear fused -------------------------------------
    out_p = pl.pallas_call(
        _gcn_layer2_kernel,
        out_shape=jax.ShapeDtypeStruct((n_pad, o_pad), jnp.float32),
        grid_spec=pltpu.PrefetchScalarGridSpec(
            num_scalar_prefetch=0,
            grid=grid,
            in_specs=[adj_spec, feat_spec, dinv_spec,
                      _full((1, h_pad)), _full((h_pad, o_pad)), _full((1, o_pad))],
            out_specs=pl.BlockSpec((tile_m, o_pad), lambda i, k: (i, 0)),
            scratch_shapes=[pltpu.VMEM((tile_m, h_pad), jnp.float32)],
        ),
        compiler_params=_compiler_params(),
    )(adj_nar, p2_bf, dinv_pad, b2_p, w3_p, b3_p)

    return out_p[:n, :out_dim]


# --------------------------------------------------------------------------
# Parameters & reference
# --------------------------------------------------------------------------
def init_params(key, in_channels, hidden_channels):
    """Deterministic synthetic parameters (shapes from FeatureImputer.__init__)."""
    k1, k2, k3 = jax.random.split(key, 3)
    c_in = in_channels + 1
    scale1 = 1.0 / jnp.sqrt(jnp.float32(c_in))
    scale2 = 1.0 / jnp.sqrt(jnp.float32(hidden_channels))
    w1 = jax.random.normal(k1, (c_in, hidden_channels), jnp.float32) * scale1
    b1 = jnp.zeros((1, hidden_channels), jnp.float32)
    w2 = jax.random.normal(k2, (hidden_channels, hidden_channels), jnp.float32) * scale2
    b2 = jnp.zeros((1, hidden_channels), jnp.float32)
    w3 = jax.random.normal(k3, (hidden_channels, 3), jnp.float32) * scale2
    b3 = jnp.zeros((1, 3), jnp.float32)
    return (w1, b1, w2, b2, w3, b3)


def reference_forward(x, edge_index, mask_flag, params):
    """Pure-JAX f32 reference matching the PyTorch module."""
    n = x.shape[0]
    xcat = jnp.concatenate([x, mask_flag[:, None]], axis=1)
    src, dst = edge_index[0], edge_index[1]
    a = jnp.zeros((n, n), jnp.float32).at[dst, src].add(1.0)
    a = a + jnp.eye(n, dtype=jnp.float32)
    dinv = jax.lax.rsqrt(jnp.sum(a, axis=1))
    adj = dinv[:, None] * a * dinv[None, :]
    w1, b1, w2, b2, w3, b3 = params
    h = jnp.maximum(adj @ (xcat @ w1) + b1, 0.0)
    h = jnp.maximum(adj @ (h @ w2) + b2, 0.0)
    return h @ w3 + b3


if __name__ == "__main__":
    # Small shapes: N=16 nodes, in_channels=4, hidden=32, output dim 3.
    N, IN_C, HID = 16, 4, 32

    key = jax.random.PRNGKey(0)
    kx, km, kp = jax.random.split(key, 3)

    x = jax.random.normal(kx, (N, IN_C), jnp.float32)
    mask_flag = (jax.random.uniform(km, (N,)) > 0.5).astype(jnp.float32)

    # Undirected ring graph as edge_index [2, E].
    idx = jnp.arange(N, dtype=jnp.int32)
    e_fwd = jnp.stack([idx, (idx + 1) % N], axis=0)
    e_bwd = jnp.stack([(idx + 1) % N, idx], axis=0)
    edge_index = jnp.concatenate([e_fwd, e_bwd], axis=1)  # [2, 2N]

    params = init_params(kp, IN_C, HID)

    run = jax.jit(feature_imputer_forward)
    try:
        out = jax.block_until_ready(run(x, edge_index, mask_flag, params))
    except Exception:
        # Portability fallback: if this backend rejects the int8 adjacency path
        # (int8 scatter / in-kernel int8->float convert), use an exact 0/1 bf16
        # adjacency instead -- numerically identical, just 2x the HBM stream.
        run = jax.jit(functools.partial(feature_imputer_forward,
                                        adj_dtype=jnp.bfloat16))
        out = jax.block_until_ready(run(x, edge_index, mask_flag, params))

    ref = reference_forward(x, edge_index, mask_flag, params)
    assert out.shape == (N, 3)
    # Only activations/weights are bf16 on the MXU (adjacency is exact 0/1, f32 acc).
    assert jnp.allclose(out, ref, atol=5e-2, rtol=5e-2), (
        float(jnp.max(jnp.abs(out - ref))))

    print("KERNEL_OK")
</pallas_src>

<mosaic_0001>
module attributes {stable_mosaic.version = 11 : i64} {
  func.func private @main(%arg0: i32) attributes {dimension_semantics = [#tpu.dimension_semantics<core_parallel>], iteration_bounds = array<i64: 2>, tpu.core_type = #tpu.core_type<sc_scalar_subcore>, window_params = []} {
    return
  }
}

module attributes {stable_mosaic.version = 11 : i64} {
  func.func private @main(%arg0: i32) attributes {dimension_semantics = [#tpu.dimension_semantics<core_parallel>], iteration_bounds = array<i64: 2>, tpu.core_type = #tpu.core_type<sc_scalar_subcore>, window_params = []} {
    return
  }
}

module attributes {stable_mosaic.version = 11 : i64} {
  func.func @_gcn_layer1_kernel(%arg0: i32, %arg1: i32, %arg2: memref<128x128xi8, #tpu.memory_space<vmem>>, %arg3: memref<128x128xbf16, #tpu.memory_space<vmem>>, %arg4: memref<128x1xf32, #tpu.memory_space<vmem>>, %arg5: memref<1x128xf32, #tpu.memory_space<vmem>>, %arg6: memref<128x128xbf16, #tpu.memory_space<vmem>>, %arg7: memref<128x128xbf16, #tpu.memory_space<vmem>>, %arg8: memref<128x128xf32, #tpu.memory_space<vmem>>) attributes {dimension_semantics = [#tpu.dimension_semantics<parallel>, #tpu.dimension_semantics<arbitrary>], iteration_bounds = array<i64: 1, 1>, scalar_prefetch = 0 : i64, scratch_operands = 1 : i64, tpu.core_type = #tpu.core_type<tc>, window_params = [{transform_indices = @transform_0, window_bounds = array<i64: 128, 128>}, {transform_indices = @transform_1, window_bounds = array<i64: 128, 128>}, {transform_indices = @transform_2, window_bounds = array<i64: 128, 1>}, {pipeline_mode = #tpu.pipeline_mode<synchronous>, transform_indices = @transform_3, window_bounds = array<i64: 1, 128>}, {pipeline_mode = #tpu.pipeline_mode<synchronous>, transform_indices = @transform_4, window_bounds = array<i64: 128, 128>}, {transform_indices = @transform_5, window_bounds = array<i64: 128, 128>}]} {
    %c0_i32 = arith.constant 0 : i32
    %0 = arith.cmpi eq, %arg1, %c0_i32 : i32
    %1 = arith.extui %0 : i1 to i32
    %c0_i32_0 = arith.constant 0 : i32
    %2 = arith.cmpi ne, %1, %c0_i32_0 : i32
    scf.if %2 {
      %cst_10 = arith.constant 0.000000e+00 : f32
      %14 = vector.broadcast %cst_10 : f32 to vector<128x128xf32>
      %c0_11 = arith.constant 0 : index
      %c0_12 = arith.constant 0 : index
      %15 = vector.load %arg8[%c0_11, %c0_12] : memref<128x128xf32, #tpu.memory_space<vmem>>, vector<128x128xf32>
      tpu.vector_store %arg8[%c0_11, %c0_12], %14 {strides = array<i32>} : memref<128x128xf32, #tpu.memory_space<vmem>>, vector<128x128xf32>,
    } else {
    }
    %c0 = arith.constant 0 : index
    %c0_1 = arith.constant 0 : index
    %3 = vector.load %arg8[%c0, %c0_1] : memref<128x128xf32, #tpu.memory_space<vmem>>, vector<128x128xf32>
    %c0_2 = arith.constant 0 : index
    %c0_3 = arith.constant 0 : index
    %4 = vector.load %arg2[%c0_2, %c0_3] : memref<128x128xi8, #tpu.memory_space<vmem>>, vector<128x128xi8>
    %5 = arith.sitofp %4 : vector<128x128xi8> to vector<128x128xf32>
    %6 = arith.truncf %5 : vector<128x128xf32> to vector<128x128xbf16>
    %c0_4 = arith.constant 0 : index
    %c0_5 = arith.constant 0 : index
    %7 = vector.load %arg3[%c0_4, %c0_5] : memref<128x128xbf16, #tpu.memory_space<vmem>>, vector<128x128xbf16>
    %cst = arith.constant dense<0.000000e+00> : vector<128x128xf32>
    %8 = tpu.matmul %6, %7, %cst {dimension_numbers = #tpu.dot_dimension_numbers<[1], [0], [0], [1], [0, 0, 1, 1], [], []>} : vector<128x128xbf16>, vector<128x128xbf16>, vector<128x128xf32> -> vector<128x128xf32>
    %9 = arith.addf %3, %8 : vector<128x128xf32>
    %c0_6 = arith.constant 0 : index
    %c0_7 = arith.constant 0 : index
    %10 = vector.load %arg8[%c0_6, %c0_7] : memref<128x128xf32, #tpu.memory_space<vmem>>, vector<128x128xf32>
    tpu.vector_store %arg8[%c0_6, %c0_7], %9 {strides = array<i32>} : memref<128x128xf32, #tpu.memory_space<vmem>>, vector<128x128xf32>,
    %c0_i32_8 = arith.constant 0 : i32
    %11 = arith.cmpi eq, %arg1, %c0_i32_8 : i32
    %12 = arith.extui %11 : i1 to i32
    %c0_i32_9 = arith.constant 0 : i32
    %13 = arith.cmpi ne, %12, %c0_i32_9 : i32
    scf.if %13 {
      %c0_10 = arith.constant 0 : index
      %c0_11 = arith.constant 0 : index
      %14 = vector.load %arg4[%c0_10, %c0_11] : memref<128x1xf32, #tpu.memory_space<vmem>>, vector<128x1xf32>
      %c0_12 = arith.constant 0 : index
      %c0_13 = arith.constant 0 : index
      %15 = vector.load %arg8[%c0_12, %c0_13] : memref<128x128xf32, #tpu.memory_space<vmem>>, vector<128x128xf32>
      %16 = vector.broadcast %14 : vector<128x1xf32> to vector<128x128xf32>
      %17 = arith.mulf %15, %16 : vector<128x128xf32>
      %c0_14 = arith.constant 0 : index
      %c0_15 = arith.constant 0 : index
      %18 = vector.load %arg5[%c0_14, %c0_15] : memref<1x128xf32, #tpu.memory_space<vmem>>, vector<1x128xf32>
      %19 = vector.broadcast %18 : vector<1x128xf32> to vector<128x128xf32>
      %20 = arith.addf %17, %19 : vector<128x128xf32>
      %cst_16 = arith.constant 0.000000e+00 : f32
      %21 = vector.broadcast %cst_16 : f32 to vector<128x128xf32>
      %22 = arith.maximumf %20, %21 : vector<128x128xf32>
      %23 = arith.truncf %22 : vector<128x128xf32> to vector<128x128xbf16>
      %c0_17 = arith.constant 0 : index
      %c0_18 = arith.constant 0 : index
      %24 = vector.load %arg6[%c0_17, %c0_18] : memref<128x128xbf16, #tpu.memory_space<vmem>>, vector<128x128xbf16>
      %cst_19 = arith.constant dense<0.000000e+00> : vector<128x128xf32>
      %25 = tpu.matmul %23, %24, %cst_19 {dimension_numbers = #tpu.dot_dimension_numbers<[1], [0], [0], [1], [0, 0, 1, 1], [], []>} : vector<128x128xbf16>, vector<128x128xbf16>, vector<128x128xf32> -> vector<128x128xf32>
      %26 = vector.broadcast %14 : vector<128x1xf32> to vector<128x128xf32>
      %27 = arith.mulf %25, %26 : vector<128x128xf32>
      %28 = arith.truncf %27 : vector<128x128xf32> to vector<128x128xbf16>
      %c0_20 = arith.constant 0 : index
      %c0_21 = arith.constant 0 : index
      %29 = vector.load %arg7[%c0_20, %c0_21] : memref<128x128xbf16, #tpu.memory_space<vmem>>, vector<128x128xbf16>
      tpu.vector_store %arg7[%c0_20, %c0_21], %28 {strides = array<i32>} : memref<128x128xbf16, #tpu.memory_space<vmem>>, vector<128x128xbf16>,
    } else {
    }
    return
  }
  func.func @transform_0(%arg0: i32, %arg1: i32) -> (i32, i32) {
    %c0_i32 = arith.constant 0 : i32
    return %arg0, %arg1 : i32, i32
  }
  func.func @transform_1(%arg0: i32, %arg1: i32) -> (i32, i32) {
    %c0_i32 = arith.constant 0 : i32
    %c0_i32_0 = arith.constant 0 : i32
    return %arg1, %c0_i32 : i32, i32
  }
  func.func @transform_2(%arg0: i32, %arg1: i32) -> (i32, i32) {
    %c0_i32 = arith.constant 0 : i32
    %c0_i32_0 = arith.constant 0 : i32
    return %arg0, %c0_i32 : i32, i32
  }
  func.func @transform_3(%arg0: i32, %arg1: i32) -> (i32, i32) {
    %c0_i32 = arith.constant 0 : i32
    %c0_i32_0 = arith.constant 0 : i32
    %c0_i32_1 = arith.constant 0 : i32
    return %c0_i32, %c0_i32_0 : i32, i32
  }
  func.func @transform_4(%arg0: i32, %arg1: i32) -> (i32, i32) {
    %c0_i32 = arith.constant 0 : i32
    %c0_i32_0 = arith.constant 0 : i32
    %c0_i32_1 = arith.constant 0 : i32
    return %c0_i32, %c0_i32_0 : i32, i32
  }
  func.func @transform_5(%arg0: i32, %arg1: i32) -> (i32, i32) {
    %c0_i32 = arith.constant 0 : i32
    %c0_i32_0 = arith.constant 0 : i32
    return %arg0, %c0_i32 : i32, i32
  }
}

module attributes {stable_mosaic.version = 11 : i64} {
  func.func @_gcn_layer2_kernel(%arg0: i32, %arg1: i32, %arg2: memref<128x128xi8, #tpu.memory_space<vmem>>, %arg3: memref<128x128xbf16, #tpu.memory_space<vmem>>, %arg4: memref<128x1xf32, #tpu.memory_space<vmem>>, %arg5: memref<1x128xf32, #tpu.memory_space<vmem>>, %arg6: memref<128x128xbf16, #tpu.memory_space<vmem>>, %arg7: memref<1x128xf32, #tpu.memory_space<vmem>>, %arg8: memref<128x128xf32, #tpu.memory_space<vmem>>, %arg9: memref<128x128xf32, #tpu.memory_space<vmem>>) attributes {dimension_semantics = [#tpu.dimension_semantics<parallel>, #tpu.dimension_semantics<arbitrary>], iteration_bounds = array<i64: 1, 1>, scalar_prefetch = 0 : i64, scratch_operands = 1 : i64, tpu.core_type = #tpu.core_type<tc>, window_params = [{transform_indices = @transform_0, window_bounds = array<i64: 128, 128>}, {transform_indices = @transform_1, window_bounds = array<i64: 128, 128>}, {transform_indices = @transform_2, window_bounds = array<i64: 128, 1>}, {pipeline_mode = #tpu.pipeline_mode<synchronous>, transform_indices = @transform_3, window_bounds = array<i64: 1, 128>}, {pipeline_mode = #tpu.pipeline_mode<synchronous>, transform_indices = @transform_4, window_bounds = array<i64: 128, 128>}, {pipeline_mode = #tpu.pipeline_mode<synchronous>, transform_indices = @transform_5, window_bounds = array<i64: 1, 128>}, {transform_indices = @transform_6, window_bounds = array<i64: 128, 128>}]} {
    %c0_i32 = arith.constant 0 : i32
    %0 = arith.cmpi eq, %arg1, %c0_i32 : i32
    %1 = arith.extui %0 : i1 to i32
    %c0_i32_0 = arith.constant 0 : i32
    %2 = arith.cmpi ne, %1, %c0_i32_0 : i32
    scf.if %2 {
      %cst_10 = arith.constant 0.000000e+00 : f32
      %14 = vector.broadcast %cst_10 : f32 to vector<128x128xf32>
      %c0_11 = arith.constant 0 : index
      %c0_12 = arith.constant 0 : index
      %15 = vector.load %arg9[%c0_11, %c0_12] : memref<128x128xf32, #tpu.memory_space<vmem>>, vector<128x128xf32>
      tpu.vector_store %arg9[%c0_11, %c0_12], %14 {strides = array<i32>} : memref<128x128xf32, #tpu.memory_space<vmem>>, vector<128x128xf32>,
    } else {
    }
    %c0 = arith.constant 0 : index
    %c0_1 = arith.constant 0 : index
    %3 = vector.load %arg9[%c0, %c0_1] : memref<128x128xf32, #tpu.memory_space<vmem>>, vector<128x128xf32>
    %c0_2 = arith.constant 0 : index
    %c0_3 = arith.constant 0 : index
    %4 = vector.load %arg2[%c0_2, %c0_3] : memref<128x128xi8, #tpu.memory_space<vmem>>, vector<128x128xi8>
    %5 = arith.sitofp %4 : vector<128x128xi8> to vector<128x128xf32>
    %6 = arith.truncf %5 : vector<128x128xf32> to vector<128x128xbf16>
    %c0_4 = arith.constant 0 : index
    %c0_5 = arith.constant 0 : index
    %7 = vector.load %arg3[%c0_4, %c0_5] : memref<128x128xbf16, #tpu.memory_space<vmem>>, vector<128x128xbf16>
    %cst = arith.constant dense<0.000000e+00> : vector<128x128xf32>
    %8 = tpu.matmul %6, %7, %cst {dimension_numbers = #tpu.dot_dimension_numbers<[1], [0], [0], [1], [0, 0, 1, 1], [], []>} : vector<128x128xbf16>, vector<128x128xbf16>, vector<128x128xf32> -> vector<128x128xf32>
    %9 = arith.addf %3, %8 : vector<128x128xf32>
    %c0_6 = arith.constant 0 : index
    %c0_7 = arith.constant 0 : index
    %10 = vector.load %arg9[%c0_6, %c0_7] : memref<128x128xf32, #tpu.memory_space<vmem>>, vector<128x128xf32>
    tpu.vector_store %arg9[%c0_6, %c0_7], %9 {strides = array<i32>} : memref<128x128xf32, #tpu.memory_space<vmem>>, vector<128x128xf32>,
    %c0_i32_8 = arith.constant 0 : i32
    %11 = arith.cmpi eq, %arg1, %c0_i32_8 : i32
    %12 = arith.extui %11 : i1 to i32
    %c0_i32_9 = arith.constant 0 : i32
    %13 = arith.cmpi ne, %12, %c0_i32_9 : i32
    scf.if %13 {
      %c0_10 = arith.constant 0 : index
      %c0_11 = arith.constant 0 : index
      %14 = vector.load %arg9[%c0_10, %c0_11] : memref<128x128xf32, #tpu.memory_space<vmem>>, vector<128x128xf32>
      %c0_12 = arith.constant 0 : index
      %c0_13 = arith.constant 0 : index
      %15 = vector.load %arg4[%c0_12, %c0_13] : memref<128x1xf32, #tpu.memory_space<vmem>>, vector<128x1xf32>
      %16 = vector.broadcast %15 : vector<128x1xf32> to vector<128x128xf32>
      %17 = arith.mulf %14, %16 : vector<128x128xf32>
      %c0_14 = arith.constant 0 : index
      %c0_15 = arith.constant 0 : index
      %18 = vector.load %arg5[%c0_14, %c0_15] : memref<1x128xf32, #tpu.memory_space<vmem>>, vector<1x128xf32>
      %19 = vector.broadcast %18 : vector<1x128xf32> to vector<128x128xf32>
      %20 = arith.addf %17, %19 : vector<128x128xf32>
      %cst_16 = arith.constant 0.000000e+00 : f32
      %21 = vector.broadcast %cst_16 : f32 to vector<128x128xf32>
      %22 = arith.maximumf %20, %21 : vector<128x128xf32>
      %23 = arith.truncf %22 : vector<128x128xf32> to vector<128x128xbf16>
      %c0_17 = arith.constant 0 : index
      %c0_18 = arith.constant 0 : index
      %24 = vector.load %arg6[%c0_17, %c0_18] : memref<128x128xbf16, #tpu.memory_space<vmem>>, vector<128x128xbf16>
      %cst_19 = arith.constant dense<0.000000e+00> : vector<128x128xf32>
      %25 = tpu.matmul %23, %24, %cst_19 {dimension_numbers = #tpu.dot_dimension_numbers<[1], [0], [0], [1], [0, 0, 1, 1], [], []>} : vector<128x128xbf16>, vector<128x128xbf16>, vector<128x128xf32> -> vector<128x128xf32>
      %c0_20 = arith.constant 0 : index
      %c0_21 = arith.constant 0 : index
      %26 = vector.load %arg7[%c0_20, %c0_21] : memref<1x128xf32, #tpu.memory_space<vmem>>, vector<1x128xf32>
      %27 = vector.broadcast %26 : vector<1x128xf32> to vector<128x128xf32>
      %28 = arith.addf %25, %27 : vector<128x128xf32>
      %c0_22 = arith.constant 0 : index
      %c0_23 = arith.constant 0 : index
      %29 = vector.load %arg8[%c0_22, %c0_23] : memref<128x128xf32, #tpu.memory_space<vmem>>, vector<128x128xf32>
      tpu.vector_store %arg8[%c0_22, %c0_23], %28 {strides = array<i32>} : memref<128x128xf32, #tpu.memory_space<vmem>>, vector<128x128xf32>,
    } else {
    }
    return
  }
  func.func @transform_0(%arg0: i32, %arg1: i32) -> (i32, i32) {
    %c0_i32 = arith.constant 0 : i32
    return %arg0, %arg1 : i32, i32
  }
  func.func @transform_1(%arg0: i32, %arg1: i32) -> (i32, i32) {
    %c0_i32 = arith.constant 0 : i32
    %c0_i32_0 = arith.constant 0 : i32
    return %arg1, %c0_i32 : i32, i32
  }
  func.func @transform_2(%arg0: i32, %arg1: i32) -> (i32, i32) {
    %c0_i32 = arith.constant 0 : i32
    %c0_i32_0 = arith.constant 0 : i32
    return %arg0, %c0_i32 : i32, i32
  }
  func.func @transform_3(%arg0: i32, %arg1: i32) -> (i32, i32) {
    %c0_i32 = arith.constant 0 : i32
    %c0_i32_0 = arith.constant 0 : i32
    %c0_i32_1 = arith.constant 0 : i32
    return %c0_i32, %c0_i32_0 : i32, i32
  }
  func.func @transform_4(%arg0: i32, %arg1: i32) -> (i32, i32) {
    %c0_i32 = arith.constant 0 : i32
    %c0_i32_0 = arith.constant 0 : i32
    %c0_i32_1 = arith.constant 0 : i32
    return %c0_i32, %c0_i32_0 : i32, i32
  }
  func.func @transform_5(%arg0: i32, %arg1: i32) -> (i32, i32) {
    %c0_i32 = arith.constant 0 : i32
    %c0_i32_0 = arith.constant 0 : i32
    %c0_i32_1 = arith.constant 0 : i32
    return %c0_i32, %c0_i32_0 : i32, i32
  }
  func.func @transform_6(%arg0: i32, %arg1: i32) -> (i32, i32) {
    %c0_i32 = arith.constant 0 : i32
    %c0_i32_0 = arith.constant 0 : i32
    return %arg0, %c0_i32 : i32, i32
  }
}

module attributes {stable_mosaic.version = 11 : i64} {
  func.func private @main(%arg0: i32) attributes {dimension_semantics = [#tpu.dimension_semantics<core_parallel>], iteration_bounds = array<i64: 2>, tpu.core_type = #tpu.core_type<sc_scalar_subcore>, window_params = []} {
    return
  }
}

module attributes {stable_mosaic.version = 11 : i64} {
  func.func private @main(%arg0: i32) attributes {dimension_semantics = [#tpu.dimension_semantics<core_parallel>], iteration_bounds = array<i64: 2>, tpu.core_type = #tpu.core_type<sc_scalar_subcore>, window_params = []} {
    return
  }
}

module attributes {stable_mosaic.version = 11 : i64} {
  func.func @_gcn_layer1_kernel(%arg0: i32, %arg1: i32, %arg2: memref<128x128xbf16, #tpu.memory_space<vmem>>, %arg3: memref<128x128xbf16, #tpu.memory_space<vmem>>, %arg4: memref<128x1xf32, #tpu.memory_space<vmem>>, %arg5: memref<1x128xf32, #tpu.memory_space<vmem>>, %arg6: memref<128x128xbf16, #tpu.memory_space<vmem>>, %arg7: memref<128x128xbf16, #tpu.memory_space<vmem>>, %arg8: memref<128x128xf32, #tpu.memory_space<vmem>>) attributes {dimension_semantics = [#tpu.dimension_semantics<parallel>, #tpu.dimension_semantics<arbitrary>], iteration_bounds = array<i64: 1, 1>, scalar_prefetch = 0 : i64, scratch_operands = 1 : i64, tpu.core_type = #tpu.core_type<tc>, window_params = [{transform_indices = @transform_0, window_bounds = array<i64: 128, 128>}, {transform_indices = @transform_1, window_bounds = array<i64: 128, 128>}, {transform_indices = @transform_2, window_bounds = array<i64: 128, 1>}, {pipeline_mode = #tpu.pipeline_mode<synchronous>, transform_indices = @transform_3, window_bounds = array<i64: 1, 128>}, {pipeline_mode = #tpu.pipeline_mode<synchronous>, transform_indices = @transform_4, window_bounds = array<i64: 128, 128>}, {transform_indices = @transform_5, window_bounds = array<i64: 128, 128>}]} {
    %c0_i32 = arith.constant 0 : i32
    %0 = arith.cmpi eq, %arg1, %c0_i32 : i32
    %1 = arith.extui %0 : i1 to i32
    %c0_i32_0 = arith.constant 0 : i32
    %2 = arith.cmpi ne, %1, %c0_i32_0 : i32
    scf.if %2 {
      %cst_10 = arith.constant 0.000000e+00 : f32
      %12 = vector.broadcast %cst_10 : f32 to vector<128x128xf32>
      %c0_11 = arith.constant 0 : index
      %c0_12 = arith.constant 0 : index
      %13 = vector.load %arg8[%c0_11, %c0_12] : memref<128x128xf32, #tpu.memory_space<vmem>>, vector<128x128xf32>
      tpu.vector_store %arg8[%c0_11, %c0_12], %12 {strides = array<i32>} : memref<128x128xf32, #tpu.memory_space<vmem>>, vector<128x128xf32>,
    } else {
    }
    %c0 = arith.constant 0 : index
    %c0_1 = arith.constant 0 : index
    %3 = vector.load %arg8[%c0, %c0_1] : memref<128x128xf32, #tpu.memory_space<vmem>>, vector<128x128xf32>
    %c0_2 = arith.constant 0 : index
    %c0_3 = arith.constant 0 : index
    %4 = vector.load %arg2[%c0_2, %c0_3] : memref<128x128xbf16, #tpu.memory_space<vmem>>, vector<128x128xbf16>
    %c0_4 = arith.constant 0 : index
    %c0_5 = arith.constant 0 : index
    %5 = vector.load %arg3[%c0_4, %c0_5] : memref<128x128xbf16, #tpu.memory_space<vmem>>, vector<128x128xbf16>
    %cst = arith.constant dense<0.000000e+00> : vector<128x128xf32>
    %6 = tpu.matmul %4, %5, %cst {dimension_numbers = #tpu.dot_dimension_numbers<[1], [0], [0], [1], [0, 0, 1, 1], [], []>} : vector<128x128xbf16>, vector<128x128xbf16>, vector<128x128xf32> -> vector<128x128xf32>
    %7 = arith.addf %3, %6 : vector<128x128xf32>
    %c0_6 = arith.constant 0 : index
    %c0_7 = arith.constant 0 : index
    %8 = vector.load %arg8[%c0_6, %c0_7] : memref<128x128xf32, #tpu.memory_space<vmem>>, vector<128x128xf32>
    tpu.vector_store %arg8[%c0_6, %c0_7], %7 {strides = array<i32>} : memref<128x128xf32, #tpu.memory_space<vmem>>, vector<128x128xf32>,
    %c0_i32_8 = arith.constant 0 : i32
    %9 = arith.cmpi eq, %arg1, %c0_i32_8 : i32
    %10 = arith.extui %9 : i1 to i32
    %c0_i32_9 = arith.constant 0 : i32
    %11 = arith.cmpi ne, %10, %c0_i32_9 : i32
    scf.if %11 {
      %c0_10 = arith.constant 0 : index
      %c0_11 = arith.constant 0 : index
      %12 = vector.load %arg4[%c0_10, %c0_11] : memref<128x1xf32, #tpu.memory_space<vmem>>, vector<128x1xf32>
      %c0_12 = arith.constant 0 : index
      %c0_13 = arith.constant 0 : index
      %13 = vector.load %arg8[%c0_12, %c0_13] : memref<128x128xf32, #tpu.memory_space<vmem>>, vector<128x128xf32>
      %14 = vector.broadcast %12 : vector<128x1xf32> to vector<128x128xf32>
      %15 = arith.mulf %13, %14 : vector<128x128xf32>
      %c0_14 = arith.constant 0 : index
      %c0_15 = arith.constant 0 : index
      %16 = vector.load %arg5[%c0_14, %c0_15] : memref<1x128xf32, #tpu.memory_space<vmem>>, vector<1x128xf32>
      %17 = vector.broadcast %16 : vector<1x128xf32> to vector<128x128xf32>
      %18 = arith.addf %15, %17 : vector<128x128xf32>
      %cst_16 = arith.constant 0.000000e+00 : f32
      %19 = vector.broadcast %cst_16 : f32 to vector<128x128xf32>
      %20 = arith.maximumf %18, %19 : vector<128x128xf32>
      %21 = arith.truncf %20 : vector<128x128xf32> to vector<128x128xbf16>
      %c0_17 = arith.constant 0 : index
      %c0_18 = arith.constant 0 : index
      %22 = vector.load %arg6[%c0_17, %c0_18] : memref<128x128xbf16, #tpu.memory_space<vmem>>, vector<128x128xbf16>
      %cst_19 = arith.constant dense<0.000000e+00> : vector<128x128xf32>
      %23 = tpu.matmul %21, %22, %cst_19 {dimension_numbers = #tpu.dot_dimension_numbers<[1], [0], [0], [1], [0, 0, 1, 1], [], []>} : vector<128x128xbf16>, vector<128x128xbf16>, vector<128x128xf32> -> vector<128x128xf32>
      %24 = vector.broadcast %12 : vector<128x1xf32> to vector<128x128xf32>
      %25 = arith.mulf %23, %24 : vector<128x128xf32>
      %26 = arith.truncf %25 : vector<128x128xf32> to vector<128x128xbf16>
      %c0_20 = arith.constant 0 : index
      %c0_21 = arith.constant 0 : index
      %27 = vector.load %arg7[%c0_20, %c0_21] : memref<128x128xbf16, #tpu.memory_space<vmem>>, vector<128x128xbf16>
      tpu.vector_store %arg7[%c0_20, %c0_21], %26 {strides = array<i32>} : memref<128x128xbf16, #tpu.memory_space<vmem>>, vector<128x128xbf16>,
    } else {
    }
    return
  }
  func.func @transform_0(%arg0: i32, %arg1: i32) -> (i32, i32) {
    %c0_i32 = arith.constant 0 : i32
    return %arg0, %arg1 : i32, i32
  }
  func.func @transform_1(%arg0: i32, %arg1: i32) -> (i32, i32) {
    %c0_i32 = arith.constant 0 : i32
    %c0_i32_0 = arith.constant 0 : i32
    return %arg1, %c0_i32 : i32, i32
  }
  func.func @transform_2(%arg0: i32, %arg1: i32) -> (i32, i32) {
    %c0_i32 = arith.constant 0 : i32
    %c0_i32_0 = arith.constant 0 : i32
    return %arg0, %c0_i32 : i32, i32
  }
  func.func @transform_3(%arg0: i32, %arg1: i32) -> (i32, i32) {
    %c0_i32 = arith.constant 0 : i32
    %c0_i32_0 = arith.constant 0 : i32
    %c0_i32_1 = arith.constant 0 : i32
    return %c0_i32, %c0_i32_0 : i32, i32
  }
  func.func @transform_4(%arg0: i32, %arg1: i32) -> (i32, i32) {
    %c0_i32 = arith.constant 0 : i32
    %c0_i32_0 = arith.constant 0 : i32
    %c0_i32_1 = arith.constant 0 : i32
    return %c0_i32, %c0_i32_0 : i32, i32
  }
  func.func @transform_5(%arg0: i32, %arg1: i32) -> (i32, i32) {
    %c0_i32 = arith.constant 0 : i32
    %c0_i32_0 = arith.constant 0 : i32
    return %arg0, %c0_i32 : i32, i32
  }
}

module attributes {stable_mosaic.version = 11 : i64} {
  func.func @_gcn_layer2_kernel(%arg0: i32, %arg1: i32, %arg2: memref<128x128xbf16, #tpu.memory_space<vmem>>, %arg3: memref<128x128xbf16, #tpu.memory_space<vmem>>, %arg4: memref<128x1xf32, #tpu.memory_space<vmem>>, %arg5: memref<1x128xf32, #tpu.memory_space<vmem>>, %arg6: memref<128x128xbf16, #tpu.memory_space<vmem>>, %arg7: memref<1x128xf32, #tpu.memory_space<vmem>>, %arg8: memref<128x128xf32, #tpu.memory_space<vmem>>, %arg9: memref<128x128xf32, #tpu.memory_space<vmem>>) attributes {dimension_semantics = [#tpu.dimension_semantics<parallel>, #tpu.dimension_semantics<arbitrary>], iteration_bounds = array<i64: 1, 1>, scalar_prefetch = 0 : i64, scratch_operands = 1 : i64, tpu.core_type = #tpu.core_type<tc>, window_params = [{transform_indices = @transform_0, window_bounds = array<i64: 128, 128>}, {transform_indices = @transform_1, window_bounds = array<i64: 128, 128>}, {transform_indices = @transform_2, window_bounds = array<i64: 128, 1>}, {pipeline_mode = #tpu.pipeline_mode<synchronous>, transform_indices = @transform_3, window_bounds = array<i64: 1, 128>}, {pipeline_mode = #tpu.pipeline_mode<synchronous>, transform_indices = @transform_4, window_bounds = array<i64: 128, 128>}, {pipeline_mode = #tpu.pipeline_mode<synchronous>, transform_indices = @transform_5, window_bounds = array<i64: 1, 128>}, {transform_indices = @transform_6, window_bounds = array<i64: 128, 128>}]} {
    %c0_i32 = arith.constant 0 : i32
    %0 = arith.cmpi eq, %arg1, %c0_i32 : i32
    %1 = arith.extui %0 : i1 to i32
    %c0_i32_0 = arith.constant 0 : i32
    %2 = arith.cmpi ne, %1, %c0_i32_0 : i32
    scf.if %2 {
      %cst_10 = arith.constant 0.000000e+00 : f32
      %12 = vector.broadcast %cst_10 : f32 to vector<128x128xf32>
      %c0_11 = arith.constant 0 : index
      %c0_12 = arith.constant 0 : index
      %13 = vector.load %arg9[%c0_11, %c0_12] : memref<128x128xf32, #tpu.memory_space<vmem>>, vector<128x128xf32>
      tpu.vector_store %arg9[%c0_11, %c0_12], %12 {strides = array<i32>} : memref<128x128xf32, #tpu.memory_space<vmem>>, vector<128x128xf32>,
    } else {
    }
    %c0 = arith.constant 0 : index
    %c0_1 = arith.constant 0 : index
    %3 = vector.load %arg9[%c0, %c0_1] : memref<128x128xf32, #tpu.memory_space<vmem>>, vector<128x128xf32>
    %c0_2 = arith.constant 0 : index
    %c0_3 = arith.constant 0 : index
    %4 = vector.load %arg2[%c0_2, %c0_3] : memref<128x128xbf16, #tpu.memory_space<vmem>>, vector<128x128xbf16>
    %c0_4 = arith.constant 0 : index
    %c0_5 = arith.constant 0 : index
    %5 = vector.load %arg3[%c0_4, %c0_5] : memref<128x128xbf16, #tpu.memory_space<vmem>>, vector<128x128xbf16>
    %cst = arith.constant dense<0.000000e+00> : vector<128x128xf32>
    %6 = tpu.matmul %4, %5, %cst {dimension_numbers = #tpu.dot_dimension_numbers<[1], [0], [0], [1], [0, 0, 1, 1], [], []>} : vector<128x128xbf16>, vector<128x128xbf16>, vector<128x128xf32> -> vector<128x128xf32>
    %7 = arith.addf %3, %6 : vector<128x128xf32>
    %c0_6 = arith.constant 0 : index
    %c0_7 = arith.constant 0 : index
    %8 = vector.load %arg9[%c0_6, %c0_7] : memref<128x128xf32, #tpu.memory_space<vmem>>, vector<128x128xf32>
    tpu.vector_store %arg9[%c0_6, %c0_7], %7 {strides = array<i32>} : memref<128x128xf32, #tpu.memory_space<vmem>>, vector<128x128xf32>,
    %c0_i32_8 = arith.constant 0 : i32
    %9 = arith.cmpi eq, %arg1, %c0_i32_8 : i32
    %10 = arith.extui %9 : i1 to i32
    %c0_i32_9 = arith.constant 0 : i32
    %11 = arith.cmpi ne, %10, %c0_i32_9 : i32
    scf.if %11 {
      %c0_10 = arith.constant 0 : index
      %c0_11 = arith.constant 0 : index
      %12 = vector.load %arg9[%c0_10, %c0_11] : memref<128x128xf32, #tpu.memory_space<vmem>>, vector<128x128xf32>
      %c0_12 = arith.constant 0 : index
      %c0_13 = arith.constant 0 : index
      %13 = vector.load %arg4[%c0_12, %c0_13] : memref<128x1xf32, #tpu.memory_space<vmem>>, vector<128x1xf32>
      %14 = vector.broadcast %13 : vector<128x1xf32> to vector<128x128xf32>
      %15 = arith.mulf %12, %14 : vector<128x128xf32>
      %c0_14 = arith.constant 0 : index
      %c0_15 = arith.constant 0 : index
      %16 = vector.load %arg5[%c0_14, %c0_15] : memref<1x128xf32, #tpu.memory_space<vmem>>, vector<1x128xf32>
      %17 = vector.broadcast %16 : vector<1x128xf32> to vector<128x128xf32>
      %18 = arith.addf %15, %17 : vector<128x128xf32>
      %cst_16 = arith.constant 0.000000e+00 : f32
      %19 = vector.broadcast %cst_16 : f32 to vector<128x128xf32>
      %20 = arith.maximumf %18, %19 : vector<128x128xf32>
      %21 = arith.truncf %20 : vector<128x128xf32> to vector<128x128xbf16>
      %c0_17 = arith.constant 0 : index
      %c0_18 = arith.constant 0 : index
      %22 = vector.load %arg6[%c0_17, %c0_18] : memref<128x128xbf16, #tpu.memory_space<vmem>>, vector<128x128xbf16>
      %cst_19 = arith.constant dense<0.000000e+00> : vector<128x128xf32>
      %23 = tpu.matmul %21, %22, %cst_19 {dimension_numbers = #tpu.dot_dimension_numbers<[1], [0], [0], [1], [0, 0, 1, 1], [], []>} : vector<128x128xbf16>, vector<128x128xbf16>, vector<128x128xf32> -> vector<128x128xf32>
      %c0_20 = arith.constant 0 : index
      %c0_21 = arith.constant 0 : index
      %24 = vector.load %arg7[%c0_20, %c0_21] : memref<1x128xf32, #tpu.memory_space<vmem>>, vector<1x128xf32>
      %25 = vector.broadcast %24 : vector<1x128xf32> to vector<128x128xf32>
      %26 = arith.addf %23, %25 : vector<128x128xf32>
      %c0_22 = arith.constant 0 : index
      %c0_23 = arith.constant 0 : index
      %27 = vector.load %arg8[%c0_22, %c0_23] : memref<128x128xf32, #tpu.memory_space<vmem>>, vector<128x128xf32>
      tpu.vector_store %arg8[%c0_22, %c0_23], %26 {strides = array<i32>} : memref<128x128xf32, #tpu.memory_space<vmem>>, vector<128x128xf32>,
    } else {
    }
    return
  }
  func.func @transform_0(%arg0: i32, %arg1: i32) -> (i32, i32) {
    %c0_i32 = arith.constant 0 : i32
    return %arg0, %arg1 : i32, i32
  }
  func.func @transform_1(%arg0: i32, %arg1: i32) -> (i32, i32) {
    %c0_i32 = arith.constant 0 : i32
    %c0_i32_0 = arith.constant 0 : i32
    return %arg1, %c0_i32 : i32, i32
  }
  func.func @transform_2(%arg0: i32, %arg1: i32) -> (i32, i32) {
    %c0_i32 = arith.constant 0 : i32
    %c0_i32_0 = arith.constant 0 : i32
    return %arg0, %c0_i32 : i32, i32
  }
  func.func @transform_3(%arg0: i32, %arg1: i32) -> (i32, i32) {
    %c0_i32 = arith.constant 0 : i32
    %c0_i32_0 = arith.constant 0 : i32
    %c0_i32_1 = arith.constant 0 : i32
    return %c0_i32, %c0_i32_0 : i32, i32
  }
  func.func @transform_4(%arg0: i32, %arg1: i32) -> (i32, i32) {
    %c0_i32 = arith.constant 0 : i32
    %c0_i32_0 = arith.constant 0 : i32
    %c0_i32_1 = arith.constant 0 : i32
    return %c0_i32, %c0_i32_0 : i32, i32
  }
  func.func @transform_5(%arg0: i32, %arg1: i32) -> (i32, i32) {
    %c0_i32 = arith.constant 0 : i32
    %c0_i32_0 = arith.constant 0 : i32
    %c0_i32_1 = arith.constant 0 : i32
    return %c0_i32, %c0_i32_0 : i32, i32
  }
  func.func @transform_6(%arg0: i32, %arg1: i32) -> (i32, i32) {
    %c0_i32 = arith.constant 0 : i32
    %c0_i32_0 = arith.constant 0 : i32
    return %arg0, %c0_i32 : i32, i32
  }
}

</mosaic_0001>

<llo_original>
// kernel: feature_imputer_forward.2
$region0: #{feature_imputer_forward.2}
  #allocation0 [shape = 'u32[]', space=smem, size = 0x4, offset = 0x4, fixed_abs, tag = 'smem constant byte address 0x4 - core index']
  #allocation1 [shape = 'u32[144,128]{1,0:T(1,128)}', space=vmem, size = 0x12000, scoped, tag = 'internal scratch']
  #allocation2 [shape = 'f32[128,128]{1,0:T(8,128)}', space=vmem, size = 0x10000, scoped, tag = 'scratch operand']
  %s0 = inlined_call_operand.vmem [shape: s8[128,128], index: 0, kind: input, shape index: {}]
  %s1 = inlined_call_operand.vmem [shape: bf16[128,128], index: 1, kind: input, shape index: {}]
  %s2 = inlined_call_operand.vmem [shape: f32[128,1], index: 2, kind: input, shape index: {}]
  %s3 = inlined_call_operand.vmem [shape: f32[1,128], index: 3, kind: input, shape index: {}]
  %s4 = inlined_call_operand.vmem [shape: bf16[128,128], index: 4, kind: input, shape index: {}]
  %s5 = inlined_call_operand.vmem [shape: bf16[128,128], index: 5, kind: output, shape index: {}]
  %s6 = sld [smem:[#allocation0]]
  $region38: #{feature_imputer_forward.2} parent=0
    _
  %s8 = ssub.s32 1, %s6
  %s9 = scalar_select 0, %s8, %s6
  // Predicated region
  $region2: #{feature_imputer_forward.2} parent=0 // pred_check
    _
  $region3: #{feature_imputer_forward.2} parent=0 // pred_check_branch
    %11 = sbr.rel (0) target = $region5
  $region4: #{feature_imputer_forward.2} parent=0 // pred_region
    _
  $region5: #{feature_imputer_forward.2} parent=0 // pred_fallthru
    _
  // Predicated region
  $region6: #{feature_imputer_forward.2} parent=0 // pred_check
    _
  $region7: #{feature_imputer_forward.2} parent=0 // pred_check_branch
    %13 = sbr.rel (0) target = $region9
  $region8: #{feature_imputer_forward.2} parent=0 // pred_region
    _
  $region9: #{feature_imputer_forward.2} parent=0 // pred_fallthru
    _
  // Predicated region
  $region10: #{feature_imputer_forward.2} parent=0 // pred_check
    _
  $region11: #{feature_imputer_forward.2} parent=0 // pred_check_branch
    %15 = sbr.rel (0) target = $region13
  $region12: #{feature_imputer_forward.2} parent=0 // pred_region
    _
  $region13: #{feature_imputer_forward.2} parent=0 // pred_fallthru
    _
  // Predicated region
  $region14: #{feature_imputer_forward.2} parent=0 // pred_check
    _
  $region15: #{feature_imputer_forward.2} parent=0 // pred_check_branch
    %17 = sbr.rel (0) target = $region17
  $region16: #{feature_imputer_forward.2} parent=0 // pred_region
    _
  $region17: #{feature_imputer_forward.2} parent=0 // pred_fallthru
    _
  // Predicated region
  $region18: #{feature_imputer_forward.2} parent=0 // pred_check
    _
  $region19: #{feature_imputer_forward.2} parent=0 // pred_check_branch
    %19 = sbr.rel (0) target = $region21
  $region20: #{feature_imputer_forward.2} parent=0 // pred_region
    _
  $region21: #{feature_imputer_forward.2} parent=0 // pred_fallthru
    _
  %p21 = scmp.eq.s32.totalorder 0, 0
  // Predicated region
  $region22: #{feature_imputer_forward.2} parent=0 // pred_check
    %p22 = pneg %p21
  $region23: #{feature_imputer_forward.2} parent=0 // pred_check_branch
    %24 = sbr.rel (%p22) target = $region25
  $region24: #{feature_imputer_forward.2} parent=0 // pred_region
    %25 = vst [vmem:[#allocation2] sm:$0xff] 0.0
    %26 = vst [vmem:[#allocation2 + $0x8] sm:$0xff] 0.0
    %27 = vst [vmem:[#allocation2 + $0x10] sm:$0xff] 0.0
    %28 = vst [vmem:[#allocation2 + $0x18] sm:$0xff] 0.0
    %29 = vst [vmem:[#allocation2 + $0x20] sm:$0xff] 0.0
    %30 = vst [vmem:[#allocation2 + $0x28] sm:$0xff] 0.0
    %31 = vst [vmem:[#allocation2 + $0x30] sm:$0xff] 0.0
    %32 = vst [vmem:[#allocation2 + $0x38] sm:$0xff] 0.0
    %33 = vst [vmem:[#allocation2 + $0x40] sm:$0xff] 0.0
    %34 = vst [vmem:[#allocation2 + $0x48] sm:$0xff] 0.0
    %35 = vst [vmem:[#allocation2 + $0x50] sm:$0xff] 0.0
    %36 = vst [vmem:[#allocation2 + $0x58] sm:$0xff] 0.0
    %37 = vst [vmem:[#allocation2 + $0x60] sm:$0xff] 0.0
    %38 = vst [vmem:[#allocation2 + $0x68] sm:$0xff] 0.0
    %39 = vst [vmem:[#allocation2 + $0x70] sm:$0xff] 0.0
    %40 = vst [vmem:[#allocation2 + $0x78] sm:$0xff] 0.0
  $region25: #{feature_imputer_forward.2} parent=0 // pred_fallthru
    _
  %v41 = vld [vmem:[#allocation2] sm:$0xff]
  %v42 = vld [vmem:[#allocation2 + $0x8] sm:$0xff]
  %v43 = vld [vmem:[#allocation2 + $0x10] sm:$0xff]
  %v44 = vld [vmem:[#allocation2 + $0x18] sm:$0xff]
  %v45 = vld [vmem:[#allocation2 + $0x20] sm:$0xff]
  %v46 = vld [vmem:[#allocation2 + $0x28] sm:$0xff]
  %v47 = vld [vmem:[#allocation2 + $0x30] sm:$0xff]
  %v48 = vld [vmem:[#allocation2 + $0x38] sm:$0xff]
  %v49 = vld [vmem:[#allocation2 + $0x40] sm:$0xff]
  %v50 = vld [vmem:[#allocation2 + $0x48] sm:$0xff]
  %v51 = vld [vmem:[#allocation2 + $0x50] sm:$0xff]
  %v52 = vld [vmem:[#allocation2 + $0x58] sm:$0xff]
  %v53 = vld [vmem:[#allocation2 + $0x60] sm:$0xff]
  %v54 = vld [vmem:[#allocation2 + $0x68] sm:$0xff]
  %v55 = vld [vmem:[#allocation2 + $0x70] sm:$0xff]
  %v56 = vld [vmem:[#allocation2 + $0x78] sm:$0xff]
  %v57 = vld [vmem:[%s0] sm:$0x3]
  %v58 = vld [vmem:[%s0 + $0x2] sm:$0x3]
  %v59 = vld [vmem:[%s0 + $0x4] sm:$0x3]
  %v60 = vld [vmem:[%s0 + $0x6] sm:$0x3]
  %v61 = vld [vmem:[%s0 + $0x8] sm:$0x3]
  %v62 = vld [vmem:[%s0 + $0xa] sm:$0x3]
  %v63 = vld [vmem:[%s0 + $0xc] sm:$0x3]
  %v64 = vld [vmem:[%s0 + $0xe] sm:$0x3]
  %v65 = vld [vmem:[%s0 + $0x10] sm:$0x3]
  %v66 = vld [vmem:[%s0 + $0x12] sm:$0x3]
  %v67 = vld [vmem:[%s0 + $0x14] sm:$0x3]
  %v68 = vld [vmem:[%s0 + $0x16] sm:$0x3]
  %v69 = vld [vmem:[%s0 + $0x18] sm:$0x3]
  %v70 = vld [vmem:[%s0 + $0x1a] sm:$0x3]
  %v71 = vld [vmem:[%s0 + $0x1c] sm:$0x3]
  %v72 = vld [vmem:[%s0 + $0x1e] sm:$0x3]
  %v73 = vunpack.c.l.s8.bf16 %v57
  %v74 = vunpack.c.l.s8.bf16 %v58
  %v75 = vunpack.c.l.s8.bf16 %v59
  %v76 = vunpack.c.l.s8.bf16 %v60
  %v77 = vunpack.c.l.s8.bf16 %v61
  %v78 = vunpack.c.l.s8.bf16 %v62
  %v79 = vunpack.c.l.s8.bf16 %v63
  %v80 = vunpack.c.l.s8.bf16 %v64
  %v81 = vunpack.c.l.s8.bf16 %v65
  %v82 = vunpack.c.l.s8.bf16 %v66
  %v83 = vunpack.c.l.s8.bf16 %v67
  %v84 = vunpack.c.l.s8.bf16 %v68
  %v85 = vunpack.c.l.s8.bf16 %v69
  %v86 = vunpack.c.l.s8.bf16 %v70
  %v87 = vunpack.c.l.s8.bf16 %v71
  %v88 = vunpack.c.l.s8.bf16 %v72
  %v89 = vld [vmem:[%s1] sm:$0xf]
  %v90 = vld [vmem:[%s1 + $0x4] sm:$0xf]
  %v91 = vld [vmem:[%s1 + $0x8] sm:$0xf]
  %v92 = vld [vmem:[%s1 + $0xc] sm:$0xf]
  %v93 = vld [vmem:[%s1 + $0x10] sm:$0xf]
  %v94 = vld [vmem:[%s1 + $0x14] sm:$0xf]
  %v95 = vld [vmem:[%s1 + $0x18] sm:$0xf]
  %v96 = vld [vmem:[%s1 + $0x1c] sm:$0xf]
  %v97 = vld [vmem:[%s1 + $0x20] sm:$0xf]
  %v98 = vld [vmem:[%s1 + $0x24] sm:$0xf]
  %v99 = vld [vmem:[%s1 + $0x28] sm:$0xf]
  %v100 = vld [vmem:[%s1 + $0x2c] sm:$0xf]
  %v101 = vld [vmem:[%s1 + $0x30] sm:$0xf]
  %v102 = vld [vmem:[%s1 + $0x34] sm:$0xf]
  %v103 = vld [vmem:[%s1 + $0x38] sm:$0xf]
  %v104 = vld [vmem:[%s1 + $0x3c] sm:$0xf]
  %v121 = vunpack.c.l.b16 %v73
  %v122 = vunpack.c.l.b16 %v74
  %v123 = vunpack.c.l.b16 %v75
  %v124 = vunpack.c.l.b16 %v76
  %v125 = vunpack.c.l.b16 %v77
  %v126 = vunpack.c.l.b16 %v78
  %v127 = vunpack.c.l.b16 %v79
  %v128 = vunpack.c.l.b16 %v80
  %v129 = vunpack.c.l.b16 %v81
  %v130 = vunpack.c.l.b16 %v82
  %v131 = vunpack.c.l.b16 %v83
  %v132 = vunpack.c.l.b16 %v84
  %v133 = vunpack.c.l.b16 %v85
  %v134 = vunpack.c.l.b16 %v86
  %v135 = vunpack.c.l.b16 %v87
  %v136 = vunpack.c.l.b16 %v88
  %v137 = vpack.c.b16 %v122, %v121
  %v138 = vpack.c.b16 %v124, %v123
  %v139 = vpack.c.b16 %v126, %v125
  %v140 = vpack.c.b16 %v128, %v127
  %v141 = vpack.c.b16 %v130, %v129
  %v142 = vpack.c.b16 %v132, %v131
  %v143 = vpack.c.b16 %v134, %v133
  %v144 = vpack.c.b16 %v136, %v135
  %v169 = vunpack.c.l.b16 %v89
  %v170 = vunpack.c.l.b16 %v90
  %v171 = vunpack.c.l.b16 %v91
  %v172 = vunpack.c.l.b16 %v92
  %v173 = vunpack.c.l.b16 %v93
  %v174 = vunpack.c.l.b16 %v94
  %v175 = vunpack.c.l.b16 %v95
  %v176 = vunpack.c.l.b16 %v96
  %v177 = vunpack.c.l.b16 %v97
  %v178 = vunpack.c.l.b16 %v98
  %v179 = vunpack.c.l.b16 %v99
  %v180 = vunpack.c.l.b16 %v100
  %v181 = vunpack.c.l.b16 %v101
  %v182 = vunpack.c.l.b16 %v102
  %v183 = vunpack.c.l.b16 %v103
  %v184 = vunpack.c.l.b16 %v104
  %v185 = vpack.c.b16 %v170, %v169
  %v186 = vpack.c.b16 %v172, %v171
  %v187 = vpack.c.b16 %v174, %v173
  %v188 = vpack.c.b16 %v176, %v175
  %v189 = vpack.c.b16 %v178, %v177
  %v190 = vpack.c.b16 %v180, %v179
  %v191 = vpack.c.b16 %v182, %v181
  %v192 = vpack.c.b16 %v184, %v183
  %201 = vmatprep.subr.bf16.mxu0 0
  %202 = vmatpush1.bf16.msra.mxu0 %v185
  %203 = vmatprep.subr.bf16.mxu0 0
  %204 = vmatpush1.bf16.msra.mxu0 %v186
  %205 = vmatprep.subr.bf16.mxu0 0
  %206 = vmatpush1.bf16.msra.mxu0 %v187
  %207 = vmatprep.subr.bf16.mxu0 0
  %208 = vmatpush1.bf16.msra.mxu0 %v188
  %209 = vmatprep.subr.bf16.mxu0 0
  %210 = vmatpush1.bf16.msra.mxu0 %v189
  %211 = vmatprep.subr.bf16.mxu0 0
  %212 = vmatpush1.bf16.msra.mxu0 %v190
  %213 = vmatprep.subr.bf16.mxu0 0
  %214 = vmatpush1.bf16.msra.mxu0 %v191
  %215 = vmatprep.subr.bf16.mxu0 0
  %216 = vmatpush1.bf16.msra.mxu0 %v192
  %217 = vmatprep.subr.bf16.mxu0 0
  %218 = vmatpush1.bf16.msra.mxu0 0
  %219 = vmatprep.subr.bf16.mxu0 0
  %220 = vmatpush1.bf16.msra.mxu0 0
  %221 = vmatprep.subr.bf16.mxu0 0
  %222 = vmatpush1.bf16.msra.mxu0 0
  %223 = vmatprep.subr.bf16.mxu0 0
  %224 = vmatpush1.bf16.msra.mxu0 0
  %225 = vmatprep.subr.bf16.mxu0 0
  %226 = vmatpush1.bf16.msra.mxu0 0
  %227 = vmatprep.subr.bf16.mxu0 0
  %228 = vmatpush1.bf16.msra.mxu0 0
  %229 = vmatprep.subr.bf16.mxu0 0
  %230 = vmatpush1.bf16.msra.mxu0 0
  %231 = vmatprep.subr.bf16.mxu0 0
  %232 = vmatpush1.bf16.msra.mxu0 0
  %233 = vmatprep.mubr.bf16.mxu0 0
  %234 = vmatmul.mubr.bf16.gmra.mrb[0].mxu0 %v137
  %v235 = vpop.f32.mrb[0].mxu0
  %v236 = vadd.f32 0.0, %v235
  %v237 = vpop.f32.mrb[0].mxu0
  %v238 = vpop.f32.mrb[0].mxu0
  %v239 = vadd.f32 0.0, %v238
  %v240 = vpop.f32.mrb[0].mxu0
  %241 = vmatprep.mubr.bf16.mxu0 0
  %242 = vmatmul.mubr.bf16.gmra.mrb[0].mxu0 %v138
  %v243 = vpop.f32.mrb[0].mxu0
  %v244 = vadd.f32 0.0, %v243
  %v245 = vpop.f32.mrb[0].mxu0
  %v246 = vpop.f32.mrb[0].mxu0
  %v247 = vadd.f32 0.0, %v246
  %v248 = vpop.f32.mrb[0].mxu0
  %249 = vmatprep.mubr.bf16.mxu0 0
  %250 = vmatmul.mubr.bf16.gmra.mrb[0].mxu0 %v139
  %v251 = vpop.f32.mrb[0].mxu0
  %v252 = vadd.f32 0.0, %v251
  %v253 = vpop.f32.mrb[0].mxu0
  %v254 = vpop.f32.mrb[0].mxu0
  %v255 = vadd.f32 0.0, %v254
  %v256 = vpop.f32.mrb[0].mxu0
  %257 = vmatprep.mubr.bf16.mxu0 0
  %258 = vmatmul.mubr.bf16.gmra.mrb[0].mxu0 %v140
  %v259 = vpop.f32.mrb[0].mxu0
  %v260 = vadd.f32 0.0, %v259
  %v261 = vpop.f32.mrb[0].mxu0
  %v262 = vpop.f32.mrb[0].mxu0
  %v263 = vadd.f32 0.0, %v262
  %v264 = vpop.f32.mrb[0].mxu0
  %265 = vmatprep.mubr.bf16.mxu0 0
  %266 = vmatmul.mubr.bf16.gmra.mrb[0].mxu0 %v141
  %v267 = vpop.f32.mrb[0].mxu0
  %v268 = vadd.f32 0.0, %v267
  %v269 = vpop.f32.mrb[0].mxu0
  %v270 = vpop.f32.mrb[0].mxu0
  %v271 = vadd.f32 0.0, %v270
  %v272 = vpop.f32.mrb[0].mxu0
  %273 = vmatprep.mubr.bf16.mxu0 0
  %274 = vmatmul.mubr.bf16.gmra.mrb[0].mxu0 %v142
  %v275 = vpop.f32.mrb[0].mxu0
  %v276 = vadd.f32 0.0, %v275
  %v277 = vpop.f32.mrb[0].mxu0
  %v278 = vpop.f32.mrb[0].mxu0
  %v279 = vadd.f32 0.0, %v278
  %v280 = vpop.f32.mrb[0].mxu0
  %281 = vmatprep.mubr.bf16.mxu0 0
  %282 = vmatmul.mubr.bf16.gmra.mrb[0].mxu0 %v143
  %v283 = vpop.f32.mrb[0].mxu0
  %v284 = vadd.f32 0.0, %v283
  %v285 = vpop.f32.mrb[0].mxu0
  %v286 = vpop.f32.mrb[0].mxu0
  %v287 = vadd.f32 0.0, %v286
  %v288 = vpop.f32.mrb[0].mxu0
  %289 = vmatprep.mubr.bf16.mxu0 0
  %290 = vmatmul.mubr.bf16.gmra.mrb[0].mxu0 %v144
  %v291 = vpop.f32.mrb[0].mxu0
  %v292 = vadd.f32 0.0, %v291
  %v293 = vpop.f32.mrb[0].mxu0
  %v294 = vpop.f32.mrb[0].mxu0
  %v295 = vadd.f32 0.0, %v294
  %v296 = vpop.f32.mrb[0].mxu0
  %297 = vdwg.mxu0
  %v298 = vadd.f32 %v41, %v236
  %v299 = vadd.f32 %v42, %v239
  %v300 = vadd.f32 %v43, %v244
  %v301 = vadd.f32 %v44, %v247
  %v302 = vadd.f32 %v45, %v252
  %v303 = vadd.f32 %v46, %v255
  %v304 = vadd.f32 %v47, %v260
  %v305 = vadd.f32 %v48, %v263
  %v306 = vadd.f32 %v49, %v268
  %v307 = vadd.f32 %v50, %v271
  %v308 = vadd.f32 %v51, %v276
  %v309 = vadd.f32 %v52, %v279
  %v310 = vadd.f32 %v53, %v284
  %v311 = vadd.f32 %v54, %v287
  %v312 = vadd.f32 %v55, %v292
  %v313 = vadd.f32 %v56, %v295
  %314 = vst [vmem:[#allocation2] sm:$0xff] %v298
  %315 = vst [vmem:[#allocation2 + $0x8] sm:$0xff] %v299
  %316 = vst [vmem:[#allocation2 + $0x10] sm:$0xff] %v300
  %317 = vst [vmem:[#allocation2 + $0x18] sm:$0xff] %v301
  %318 = vst [vmem:[#allocation2 + $0x20] sm:$0xff] %v302
  %319 = vst [vmem:[#allocation2 + $0x28] sm:$0xff] %v303
  %320 = vst [vmem:[#allocation2 + $0x30] sm:$0xff] %v304
  %321 = vst [vmem:[#allocation2 + $0x38] sm:$0xff] %v305
  %322 = vst [vmem:[#allocation2 + $0x40] sm:$0xff] %v306
  %323 = vst [vmem:[#allocation2 + $0x48] sm:$0xff] %v307
  %324 = vst [vmem:[#allocation2 + $0x50] sm:$0xff] %v308
  %325 = vst [vmem:[#allocation2 + $0x58] sm:$0xff] %v309
  %326 = vst [vmem:[#allocation2 + $0x60] sm:$0xff] %v310
  %327 = vst [vmem:[#allocation2 + $0x68] sm:$0xff] %v311
  %328 = vst [vmem:[#allocation2 + $0x70] sm:$0xff] %v312
  %329 = vst [vmem:[#allocation2 + $0x78] sm:$0xff] %v313
  // Predicated region
  $region26: #{feature_imputer_forward.2} parent=0 // pred_check
    %p330 = pneg %p21
  $region27: #{feature_imputer_forward.2} parent=0 // pred_check_branch
    %332 = sbr.rel (%p330) target = $region29
  $region28: #{feature_imputer_forward.2} parent=0 // pred_region
    %v333 = vld [vmem:[%s2] sm:$0xff]
    %v334 = vld [vmem:[%s2 + $0x8] sm:$0xff]
    %v335 = vld [vmem:[%s2 + $0x10] sm:$0xff]
    %v336 = vld [vmem:[%s2 + $0x18] sm:$0xff]
    %v337 = vld [vmem:[%s2 + $0x20] sm:$0xff]
    %v338 = vld [vmem:[%s2 + $0x28] sm:$0xff]
    %v339 = vld [vmem:[%s2 + $0x30] sm:$0xff]
    %v340 = vld [vmem:[%s2 + $0x38] sm:$0xff]
    %v341 = vld [vmem:[%s2 + $0x40] sm:$0xff]
    %v342 = vld [vmem:[%s2 + $0x48] sm:$0xff]
    %v343 = vld [vmem:[%s2 + $0x50] sm:$0xff]
    %v344 = vld [vmem:[%s2 + $0x58] sm:$0xff]
    %v345 = vld [vmem:[%s2 + $0x60] sm:$0xff]
    %v346 = vld [vmem:[%s2 + $0x68] sm:$0xff]
    %v347 = vld [vmem:[%s2 + $0x70] sm:$0xff]
    %v348 = vld [vmem:[%s2 + $0x78] sm:$0xff]
    %v349 = vld [vmem:[#allocation2] sm:$0xff]
    %v350 = vld [vmem:[#allocation2 + $0x8] sm:$0xff]
    %v351 = vld [vmem:[#allocation2 + $0x10] sm:$0xff]
    %v352 = vld [vmem:[#allocation2 + $0x18] sm:$0xff]
    %v353 = vld [vmem:[#allocation2 + $0x20] sm:$0xff]
    %v354 = vld [vmem:[#allocation2 + $0x28] sm:$0xff]
    %v355 = vld [vmem:[#allocation2 + $0x30] sm:$0xff]
    %v356 = vld [vmem:[#allocation2 + $0x38] sm:$0xff]
    %v357 = vld [vmem:[#allocation2 + $0x40] sm:$0xff]
    %v358 = vld [vmem:[#allocation2 + $0x48] sm:$0xff]
    %v359 = vld [vmem:[#allocation2 + $0x50] sm:$0xff]
    %v360 = vld [vmem:[#allocation2 + $0x58] sm:$0xff]
    %v361 = vld [vmem:[#allocation2 + $0x60] sm:$0xff]
    %v362 = vld [vmem:[#allocation2 + $0x68] sm:$0xff]
    %v363 = vld [vmem:[#allocation2 + $0x70] sm:$0xff]
    %v364 = vld [vmem:[#allocation2 + $0x78] sm:$0xff]
    %366 = vset.pattern.permute.xlu0 0
    %367 = vperm.xlu0 %366, %v333
    %v368 = vpop.permute.xlu0 %367
    %371 = vset.pattern.permute.xlu0 0
    %372 = vperm.xlu0 %371, %v334
    %v373 = vpop.permute.xlu0 %372
    %376 = vset.pattern.permute.xlu0 0
    %377 = vperm.xlu0 %376, %v335
    %v378 = vpop.permute.xlu0 %377
    %381 = vset.pattern.permute.xlu0 0
    %382 = vperm.xlu0 %381, %v336
    %v383 = vpop.permute.xlu0 %382
    %386 = vset.pattern.permute.xlu0 0
    %387 = vperm.xlu0 %386, %v337
    %v388 = vpop.permute.xlu0 %387
    %391 = vset.pattern.permute.xlu0 0
    %392 = vperm.xlu0 %391, %v338
    %v393 = vpop.permute.xlu0 %392
    %396 = vset.pattern.permute.xlu0 0
    %397 = vperm.xlu0 %396, %v339
    %v398 = vpop.permute.xlu0 %397
    %401 = vset.pattern.permute.xlu0 0
    %402 = vperm.xlu0 %401, %v340
    %v403 = vpop.permute.xlu0 %402
    %406 = vset.pattern.permute.xlu0 0
    %407 = vperm.xlu0 %406, %v341
    %v408 = vpop.permute.xlu0 %407
    %411 = vset.pattern.permute.xlu0 0
    %412 = vperm.xlu0 %411, %v342
    %v413 = vpop.permute.xlu0 %412
    %416 = vset.pattern.permute.xlu0 0
    %417 = vperm.xlu0 %416, %v343
    %v418 = vpop.permute.xlu0 %417
    %421 = vset.pattern.permute.xlu0 0
    %422 = vperm.xlu0 %421, %v344
    %v423 = vpop.permute.xlu0 %422
    %426 = vset.pattern.permute.xlu0 0
    %427 = vperm.xlu0 %426, %v345
    %v428 = vpop.permute.xlu0 %427
    %431 = vset.pattern.permute.xlu0 0
    %432 = vperm.xlu0 %431, %v346
    %v433 = vpop.permute.xlu0 %432
    %436 = vset.pattern.permute.xlu0 0
    %437 = vperm.xlu0 %436, %v347
    %v438 = vpop.permute.xlu0 %437
    %441 = vset.pattern.permute.xlu0 0
    %442 = vperm.xlu0 %441, %v348
    %v443 = vpop.permute.xlu0 %442
    %v445 = vmul.f32 %v349, %v368
    %v446 = vmul.f32 %v350, %v373
    %v447 = vmul.f32 %v351, %v378
    %v448 = vmul.f32 %v352, %v383
    %v449 = vmul.f32 %v353, %v388
    %v450 = vmul.f32 %v354, %v393
    %v451 = vmul.f32 %v355, %v398
    %v452 = vmul.f32 %v356, %v403
    %v453 = vmul.f32 %v357, %v408
    %v454 = vmul.f32 %v358, %v413
    %v455 = vmul.f32 %v359, %v418
    %v456 = vmul.f32 %v360, %v423
    %v457 = vmul.f32 %v361, %v428
    %v458 = vmul.f32 %v362, %v433
    %v459 = vmul.f32 %v363, %v438
    %v460 = vmul.f32 %v364, %v443
    %v461 = vld [vmem:[%s3] sm:$0x1]
    %v463 = vlaneseq
    %v464 = vshrl.u32 %v463, 7
    %v465 = vsub.s32 0, %v464
    %v466 = vrot.slane %v461, %v465
    %v468 = vadd.f32 %v445, %v466
    %v469 = vadd.f32 %v446, %v466
    %v470 = vadd.f32 %v447, %v466
    %v471 = vadd.f32 %v448, %v466
    %v472 = vadd.f32 %v449, %v466
    %v473 = vadd.f32 %v450, %v466
    %v474 = vadd.f32 %v451, %v466
    %v475 = vadd.f32 %v452, %v466
    %v476 = vadd.f32 %v453, %v466
    %v477 = vadd.f32 %v454, %v466
    %v478 = vadd.f32 %v455, %v466
    %v479 = vadd.f32 %v456, %v466
    %v480 = vadd.f32 %v457, %v466
    %v481 = vadd.f32 %v458, %v466
    %v482 = vadd.f32 %v459, %v466
    %v483 = vadd.f32 %v460, %v466
    %v484 = vmax.f32 %v468, 0.0
    %v485 = vmax.f32 %v469, 0.0
    %v486 = vmax.f32 %v470, 0.0
    %v487 = vmax.f32 %v471, 0.0
    %v488 = vmax.f32 %v472, 0.0
    %v489 = vmax.f32 %v473, 0.0
    %v490 = vmax.f32 %v474, 0.0
    %v491 = vmax.f32 %v475, 0.0
    %v492 = vmax.f32 %v476, 0.0
    %v493 = vmax.f32 %v477, 0.0
    %v494 = vmax.f32 %v478, 0.0
    %v495 = vmax.f32 %v479, 0.0
    %v496 = vmax.f32 %v480, 0.0
    %v497 = vmax.f32 %v481, 0.0
    %v498 = vmax.f32 %v482, 0.0
    %v499 = vmax.f32 %v483, 0.0
    %v500 = vpack.c.bf16 %v485, %v484
    %v501 = vpack.c.bf16 %v487, %v486
    %v502 = vpack.c.bf16 %v489, %v488
    %v503 = vpack.c.bf16 %v491, %v490
    %v504 = vpack.c.bf16 %v493, %v492
    %v505 = vpack.c.bf16 %v495, %v494
    %v506 = vpack.c.bf16 %v497, %v496
    %v507 = vpack.c.bf16 %v499, %v498
    %v508 = vld [vmem:[%s4] sm:$0xf]
    %v509 = vld [vmem:[%s4 + $0x4] sm:$0xf]
    %v510 = vld [vmem:[%s4 + $0x8] sm:$0xf]
    %v511 = vld [vmem:[%s4 + $0xc] sm:$0xf]
    %v512 = vld [vmem:[%s4 + $0x10] sm:$0xf]
    %v513 = vld [vmem:[%s4 + $0x14] sm:$0xf]
    %v514 = vld [vmem:[%s4 + $0x18] sm:$0xf]
    %v515 = vld [vmem:[%s4 + $0x1c] sm:$0xf]
    %v516 = vld [vmem:[%s4 + $0x20] sm:$0xf]
    %v517 = vld [vmem:[%s4 + $0x24] sm:$0xf]
    %v518 = vld [vmem:[%s4 + $0x28] sm:$0xf]
    %v519 = vld [vmem:[%s4 + $0x2c] sm:$0xf]
    %v520 = vld [vmem:[%s4 + $0x30] sm:$0xf]
    %v521 = vld [vmem:[%s4 + $0x34] sm:$0xf]
    %v522 = vld [vmem:[%s4 + $0x38] sm:$0xf]
    %v523 = vld [vmem:[%s4 + $0x3c] sm:$0xf]
    %v540 = vunpack.c.l.b16 %v508
    %v541 = vunpack.c.l.b16 %v509
    %v542 = vunpack.c.l.b16 %v510
    %v543 = vunpack.c.l.b16 %v511
    %v544 = vunpack.c.l.b16 %v512
    %v545 = vunpack.c.l.b16 %v513
    %v546 = vunpack.c.l.b16 %v514
    %v547 = vunpack.c.l.b16 %v515
    %v548 = vunpack.c.l.b16 %v516
    %v549 = vunpack.c.l.b16 %v517
    %v550 = vunpack.c.l.b16 %v518
    %v551 = vunpack.c.l.b16 %v519
    %v552 = vunpack.c.l.b16 %v520
    %v553 = vunpack.c.l.b16 %v521
    %v554 = vunpack.c.l.b16 %v522
    %v555 = vunpack.c.l.b16 %v523
    %v556 = vpack.c.b16 %v541, %v540
    %v557 = vpack.c.b16 %v543, %v542
    %v558 = vpack.c.b16 %v545, %v544
    %v559 = vpack.c.b16 %v547, %v546
    %v560 = vpack.c.b16 %v549, %v548
    %v561 = vpack.c.b16 %v551, %v550
    %v562 = vpack.c.b16 %v553, %v552
    %v563 = vpack.c.b16 %v555, %v554
    %572 = vmatprep.subr.bf16.mxu0 0
    %573 = vmatpush1.bf16.msra.mxu0 %v556
    %574 = vmatprep.subr.bf16.mxu0 0
    %575 = vmatpush1.bf16.msra.mxu0 %v557
    %576 = vmatprep.subr.bf16.mxu0 0
    %577 = vmatpush1.bf16.msra.mxu0 %v558
    %578 = vmatprep.subr.bf16.mxu0 0
    %579 = vmatpush1.bf16.msra.mxu0 %v559
    %580 = vmatprep.subr.bf16.mxu0 0
    %581 = vmatpush1.bf16.msra.mxu0 %v560
    %582 = vmatprep.subr.bf16.mxu0 0
    %583 = vmatpush1.bf16.msra.mxu0 %v561
    %584 = vmatprep.subr.bf16.mxu0 0
    %585 = vmatpush1.bf16.msra.mxu0 %v562
    %586 = vmatprep.subr.bf16.mxu0 0
    %587 = vmatpush1.bf16.msra.mxu0 %v563
    %588 = vmatprep.subr.bf16.mxu0 0
    %589 = vmatpush1.bf16.msra.mxu0 0
    %590 = vmatprep.subr.bf16.mxu0 0
    %591 = vmatpush1.bf16.msra.mxu0 0
    %592 = vmatprep.subr.bf16.mxu0 0
    %593 = vmatpush1.bf16.msra.mxu0 0
    %594 = vmatprep.subr.bf16.mxu0 0
    %595 = vmatpush1.bf16.msra.mxu0 0
    %596 = vmatprep.subr.bf16.mxu0 0
    %597 = vmatpush1.bf16.msra.mxu0 0
    %598 = vmatprep.subr.bf16.mxu0 0
    %599 = vmatpush1.bf16.msra.mxu0 0
    %600 = vmatprep.subr.bf16.mxu0 0
    %601 = vmatpush1.bf16.msra.mxu0 0
    %602 = vmatprep.subr.bf16.mxu0 0
    %603 = vmatpush1.bf16.msra.mxu0 0
    %604 = vmatprep.mubr.bf16.mxu0 0
    %605 = vmatmul.mubr.bf16.gmra.mrb[0].mxu0 %v500
    %v606 = vpop.f32.mrb[0].mxu0
    %v607 = vadd.f32 0.0, %v606
    %v608 = vpop.f32.mrb[0].mxu0
    %v609 = vpop.f32.mrb[0].mxu0
    %v610 = vadd.f32 0.0, %v609
    %v611 = vpop.f32.mrb[0].mxu0
    %612 = vmatprep.mubr.bf16.mxu0 0
    %613 = vmatmul.mubr.bf16.gmra.mrb[0].mxu0 %v501
    %v614 = vpop.f32.mrb[0].mxu0
    %v615 = vadd.f32 0.0, %v614
    %v616 = vpop.f32.mrb[0].mxu0
    %v617 = vpop.f32.mrb[0].mxu0
    %v618 = vadd.f32 0.0, %v617
    %v619 = vpop.f32.mrb[0].mxu0
    %620 = vmatprep.mubr.bf16.mxu0 0
    %621 = vmatmul.mubr.bf16.gmra.mrb[0].mxu0 %v502
    %v622 = vpop.f32.mrb[0].mxu0
    %v623 = vadd.f32 0.0, %v622
    %v624 = vpop.f32.mrb[0].mxu0
    %v625 = vpop.f32.mrb[0].mxu0
    %v626 = vadd.f32 0.0, %v625
    %v627 = vpop.f32.mrb[0].mxu0
    %628 = vmatprep.mubr.bf16.mxu0 0
    %629 = vmatmul.mubr.bf16.gmra.mrb[0].mxu0 %v503
    %v630 = vpop.f32.mrb[0].mxu0
    %v631 = vadd.f32 0.0, %v630
    %v632 = vpop.f32.mrb[0].mxu0
    %v633 = vpop.f32.mrb[0].mxu0
    %v634 = vadd.f32 0.0, %v633
    %v635 = vpop.f32.mrb[0].mxu0
    %636 = vmatprep.mubr.bf16.mxu0 0
    %637 = vmatmul.mubr.bf16.gmra.mrb[0].mxu0 %v504
    %v638 = vpop.f32.mrb[0].mxu0
    %v639 = vadd.f32 0.0, %v638
    %v640 = vpop.f32.mrb[0].mxu0
    %v641 = vpop.f32.mrb[0].mxu0
    %v642 = vadd.f32 0.0, %v641
    %v643 = vpop.f32.mrb[0].mxu0
    %644 = vmatprep.mubr.bf16.mxu0 0
    %645 = vmatmul.mubr.bf16.gmra.mrb[0].mxu0 %v505
    %v646 = vpop.f32.mrb[0].mxu0
    %v647 = vadd.f32 0.0, %v646
    %v648 = vpop.f32.mrb[0].mxu0
    %v649 = vpop.f32.mrb[0].mxu0
    %v650 = vadd.f32 0.0, %v649
    %v651 = vpop.f32.mrb[0].mxu0
    %652 = vmatprep.mubr.bf16.mxu0 0
    %653 = vmatmul.mubr.bf16.gmra.mrb[0].mxu0 %v506
    %v654 = vpop.f32.mrb[0].mxu0
    %v655 = vadd.f32 0.0, %v654
    %v656 = vpop.f32.mrb[0].mxu0
    %v657 = vpop.f32.mrb[0].mxu0
    %v658 = vadd.f32 0.0, %v657
    %v659 = vpop.f32.mrb[0].mxu0
    %660 = vmatprep.mubr.bf16.mxu0 0
    %661 = vmatmul.mubr.bf16.gmra.mrb[0].mxu0 %v507
    %v662 = vpop.f32.mrb[0].mxu0
    %v663 = vadd.f32 0.0, %v662
    %v664 = vpop.f32.mrb[0].mxu0
    %v665 = vpop.f32.mrb[0].mxu0
    %v666 = vadd.f32 0.0, %v665
    %v667 = vpop.f32.mrb[0].mxu0
    %668 = vdwg.mxu0
    %v669 = vmul.f32 %v607, %v368
    %v670 = vmul.f32 %v610, %v373
    %v671 = vmul.f32 %v615, %v378
    %v672 = vmul.f32 %v618, %v383
    %v673 = vmul.f32 %v623, %v388
    %v674 = vmul.f32 %v626, %v393
    %v675 = vmul.f32 %v631, %v398
    %v676 = vmul.f32 %v634, %v403
    %v677 = vmul.f32 %v639, %v408
    %v678 = vmul.f32 %v642, %v413
    %v679 = vmul.f32 %v647, %v418
    %v680 = vmul.f32 %v650, %v423
    %v681 = vmul.f32 %v655, %v428
    %v682 = vmul.f32 %v658, %v433
    %v683 = vmul.f32 %v663, %v438
    %v684 = vmul.f32 %v666, %v443
    %v685 = vpack.c.bf16 %v670, %v669
    %v686 = vpack.c.bf16 %v672, %v671
    %v687 = vpack.c.bf16 %v674, %v673
    %v688 = vpack.c.bf16 %v676, %v675
    %v689 = vpack.c.bf16 %v678, %v677
    %v690 = vpack.c.bf16 %v680, %v679
    %v691 = vpack.c.bf16 %v682, %v681
    %v692 = vpack.c.bf16 %v684, %v683
    %v701 = vunpack.c.l.b16 %v685
    %v702 = vunpack.c.h.b16 %v685
    %v703 = vunpack.c.l.b16 %v686
    %v704 = vunpack.c.h.b16 %v686
    %v705 = vunpack.c.l.b16 %v687
    %v706 = vunpack.c.h.b16 %v687
    %v707 = vunpack.c.l.b16 %v688
    %v708 = vunpack.c.h.b16 %v688
    %v709 = vunpack.c.l.b16 %v689
    %v710 = vunpack.c.h.b16 %v689
    %v711 = vunpack.c.l.b16 %v690
    %v712 = vunpack.c.h.b16 %v690
    %v713 = vunpack.c.l.b16 %v691
    %v714 = vunpack.c.h.b16 %v691
    %v715 = vunpack.c.l.b16 %v692
    %v716 = vunpack.c.h.b16 %v692
    %v717 = vpack.c.b16 %v701, %v701
    %v718 = vpack.c.b16 %v702, %v702
    %v719 = vpack.c.b16 %v703, %v703
    %v720 = vpack.c.b16 %v704, %v704
    %v721 = vpack.c.b16 %v705, %v705
    %v722 = vpack.c.b16 %v706, %v706
    %v723 = vpack.c.b16 %v707, %v707
    %v724 = vpack.c.b16 %v708, %v708
    %v725 = vpack.c.b16 %v709, %v709
    %v726 = vpack.c.b16 %v710, %v710
    %v727 = vpack.c.b16 %v711, %v711
    %v728 = vpack.c.b16 %v712, %v712
    %v729 = vpack.c.b16 %v713, %v713
    %v730 = vpack.c.b16 %v714, %v714
    %v731 = vpack.c.b16 %v715, %v715
    %v732 = vpack.c.b16 %v716, %v716
    %749 = vst [vmem:[%s5] sm:$0xf] %v717
    %750 = vst [vmem:[%s5 + $0x4] sm:$0xf] %v718
    %751 = vst [vmem:[%s5 + $0x8] sm:$0xf] %v719
    %752 = vst [vmem:[%s5 + $0xc] sm:$0xf] %v720
    %753 = vst [vmem:[%s5 + $0x10] sm:$0xf] %v721
    %754 = vst [vmem:[%s5 + $0x14] sm:$0xf] %v722
    %755 = vst [vmem:[%s5 + $0x18] sm:$0xf] %v723
    %756 = vst [vmem:[%s5 + $0x1c] sm:$0xf] %v724
    %757 = vst [vmem:[%s5 + $0x20] sm:$0xf] %v725
    %758 = vst [vmem:[%s5 + $0x24] sm:$0xf] %v726
    %759 = vst [vmem:[%s5 + $0x28] sm:$0xf] %v727
    %760 = vst [vmem:[%s5 + $0x2c] sm:$0xf] %v728
    %761 = vst [vmem:[%s5 + $0x30] sm:$0xf] %v729
    %762 = vst [vmem:[%s5 + $0x34] sm:$0xf] %v730
    %763 = vst [vmem:[%s5 + $0x38] sm:$0xf] %v731
    %764 = vst [vmem:[%s5 + $0x3c] sm:$0xf] %v732
  $region29: #{feature_imputer_forward.2} parent=0 // pred_fallthru
    _
  // Predicated region
  $region30: #{feature_imputer_forward.2} parent=0 // pred_check
    _
  $region31: #{feature_imputer_forward.2} parent=0 // pred_check_branch
    %766 = sbr.rel (0) target = $region33
  $region32: #{feature_imputer_forward.2} parent=0 // pred_region
    _
  $region33: #{feature_imputer_forward.2} parent=0 // pred_fallthru
    _
  // Predicated region
  $region34: #{feature_imputer_forward.2} parent=0 // pred_check
    _
  $region35: #{feature_imputer_forward.2} parent=0 // pred_check_branch
    %768 = sbr.rel (0) target = $region37
  $region36: #{feature_imputer_forward.2} parent=0 // pred_region
    _
  $region37: #{feature_imputer_forward.2} parent=0 // pred_fallthru
    _

// kernel: feature_imputer_forward.3
$region0: #{feature_imputer_forward.3}
  #allocation0 [shape = 'u32[]', space=smem, size = 0x4, offset = 0x4, fixed_abs, tag = 'smem constant byte address 0x4 - core index']
  #allocation1 [shape = 'u32[144,128]{1,0:T(1,128)}', space=vmem, size = 0x12000, scoped, tag = 'internal scratch']
  #allocation2 [shape = 'f32[128,128]{1,0:T(8,128)}', space=vmem, size = 0x10000, scoped, tag = 'scratch operand']
  %s0 = inlined_call_operand.vmem [shape: s8[128,128], index: 0, kind: input, shape index: {}]
  %s1 = inlined_call_operand.vmem [shape: bf16[128,128], index: 1, kind: input, shape index: {}]
  %s2 = inlined_call_operand.vmem [shape: f32[128,1], index: 2, kind: input, shape index: {}]
  %s3 = inlined_call_operand.vmem [shape: f32[1,128], index: 3, kind: input, shape index: {}]
  %s4 = inlined_call_operand.vmem [shape: bf16[128,128], index: 4, kind: input, shape index: {}]
  %s5 = inlined_call_operand.vmem [shape: f32[1,128], index: 5, kind: input, shape index: {}]
  %s6 = inlined_call_operand.vmem [shape: f32[128,128], index: 6, kind: output, shape index: {}]
  %s7 = sld [smem:[#allocation0]]
  $region42: #{feature_imputer_forward.3} parent=0
    _
  %s9 = ssub.s32 1, %s7
  %s10 = scalar_select 0, %s9, %s7
  // Predicated region
  $region2: #{feature_imputer_forward.3} parent=0 // pred_check
    _
  $region3: #{feature_imputer_forward.3} parent=0 // pred_check_branch
    %12 = sbr.rel (0) target = $region5
  $region4: #{feature_imputer_forward.3} parent=0 // pred_region
    _
  $region5: #{feature_imputer_forward.3} parent=0 // pred_fallthru
    _
  // Predicated region
  $region6: #{feature_imputer_forward.3} parent=0 // pred_check
    _
  $region7: #{feature_imputer_forward.3} parent=0 // pred_check_branch
    %14 = sbr.rel (0) target = $region9
  $region8: #{feature_imputer_forward.3} parent=0 // pred_region
    _
  $region9: #{feature_imputer_forward.3} parent=0 // pred_fallthru
    _
  // Predicated region
  $region10: #{feature_imputer_forward.3} parent=0 // pred_check
    _
  $region11: #{feature_imputer_forward.3} parent=0 // pred_check_branch
    %16 = sbr.rel (0) target = $region13
  $region12: #{feature_imputer_forward.3} parent=0 // pred_region
    _
  $region13: #{feature_imputer_forward.3} parent=0 // pred_fallthru
    _
  // Predicated region
  $region14: #{feature_imputer_forward.3} parent=0 // pred_check
    _
  $region15: #{feature_imputer_forward.3} parent=0 // pred_check_branch
    %18 = sbr.rel (0) target = $region17
  $region16: #{feature_imputer_forward.3} parent=0 // pred_region
    _
  $region17: #{feature_imputer_forward.3} parent=0 // pred_fallthru
    _
  // Predicated region
  $region18: #{feature_imputer_forward.3} parent=0 // pred_check
    _
  $region19: #{feature_imputer_forward.3} parent=0 // pred_check_branch
    %20 = sbr.rel (0) target = $region21
  $region20: #{feature_imputer_forward.3} parent=0 // pred_region
    _
  $region21: #{feature_imputer_forward.3} parent=0 // pred_fallthru
    _
  // Predicated region
  $region22: #{feature_imputer_forward.3} parent=0 // pred_check
    _
  $region23: #{feature_imputer_forward.3} parent=0 // pred_check_branch
    %22 = sbr.rel (0) target = $region25
  $region24: #{feature_imputer_forward.3} parent=0 // pred_region
    _
  $region25: #{feature_imputer_forward.3} parent=0 // pred_fallthru
    _
  %p24 = scmp.eq.s32.totalorder 0, 0
  // Predicated region
  $region26: #{feature_imputer_forward.3} parent=0 // pred_check
    %p25 = pneg %p24
  $region27: #{feature_imputer_forward.3} parent=0 // pred_check_branch
    %27 = sbr.rel (%p25) target = $region29
  $region28: #{feature_imputer_forward.3} parent=0 // pred_region
    %28 = vst [vmem:[#allocation2] sm:$0xff] 0.0
    %29 = vst [vmem:[#allocation2 + $0x8] sm:$0xff] 0.0
    %30 = vst [vmem:[#allocation2 + $0x10] sm:$0xff] 0.0
    %31 = vst [vmem:[#allocation2 + $0x18] sm:$0xff] 0.0
    %32 = vst [vmem:[#allocation2 + $0x20] sm:$0xff] 0.0
    %33 = vst [vmem:[#allocation2 + $0x28] sm:$0xff] 0.0
    %34 = vst [vmem:[#allocation2 + $0x30] sm:$0xff] 0.0
    %35 = vst [vmem:[#allocation2 + $0x38] sm:$0xff] 0.0
    %36 = vst [vmem:[#allocation2 + $0x40] sm:$0xff] 0.0
    %37 = vst [vmem:[#allocation2 + $0x48] sm:$0xff] 0.0
    %38 = vst [vmem:[#allocation2 + $0x50] sm:$0xff] 0.0
    %39 = vst [vmem:[#allocation2 + $0x58] sm:$0xff] 0.0
    %40 = vst [vmem:[#allocation2 + $0x60] sm:$0xff] 0.0
    %41 = vst [vmem:[#allocation2 + $0x68] sm:$0xff] 0.0
    %42 = vst [vmem:[#allocation2 + $0x70] sm:$0xff] 0.0
    %43 = vst [vmem:[#allocation2 + $0x78] sm:$0xff] 0.0
  $region29: #{feature_imputer_forward.3} parent=0 // pred_fallthru
    _
  %v44 = vld [vmem:[#allocation2] sm:$0xff]
  %v45 = vld [vmem:[#allocation2 + $0x8] sm:$0xff]
  %v46 = vld [vmem:[#allocation2 + $0x10] sm:$0xff]
  %v47 = vld [vmem:[#allocation2 + $0x18] sm:$0xff]
  %v48 = vld [vmem:[#allocation2 + $0x20] sm:$0xff]
  %v49 = vld [vmem:[#allocation2 + $0x28] sm:$0xff]
  %v50 = vld [vmem:[#allocation2 + $0x30] sm:$0xff]
  %v51 = vld [vmem:[#allocation2 + $0x38] sm:$0xff]
  %v52 = vld [vmem:[#allocation2 + $0x40] sm:$0xff]
  %v53 = vld [vmem:[#allocation2 + $0x48] sm:$0xff]
  %v54 = vld [vmem:[#allocation2 + $0x50] sm:$0xff]
  %v55 = vld [vmem:[#allocation2 + $0x58] sm:$0xff]
  %v56 = vld [vmem:[#allocation2 + $0x60] sm:$0xff]
  %v57 = vld [vmem:[#allocation2 + $0x68] sm:$0xff]
  %v58 = vld [vmem:[#allocation2 + $0x70] sm:$0xff]
  %v59 = vld [vmem:[#allocation2 + $0x78] sm:$0xff]
  %v60 = vld [vmem:[%s0] sm:$0x3]
  %v61 = vld [vmem:[%s0 + $0x2] sm:$0x3]
  %v62 = vld [vmem:[%s0 + $0x4] sm:$0x3]
  %v63 = vld [vmem:[%s0 + $0x6] sm:$0x3]
  %v64 = vld [vmem:[%s0 + $0x8] sm:$0x3]
  %v65 = vld [vmem:[%s0 + $0xa] sm:$0x3]
  %v66 = vld [vmem:[%s0 + $0xc] sm:$0x3]
  %v67 = vld [vmem:[%s0 + $0xe] sm:$0x3]
  %v68 = vld [vmem:[%s0 + $0x10] sm:$0x3]
  %v69 = vld [vmem:[%s0 + $0x12] sm:$0x3]
  %v70 = vld [vmem:[%s0 + $0x14] sm:$0x3]
  %v71 = vld [vmem:[%s0 + $0x16] sm:$0x3]
  %v72 = vld [vmem:[%s0 + $0x18] sm:$0x3]
  %v73 = vld [vmem:[%s0 + $0x1a] sm:$0x3]
  %v74 = vld [vmem:[%s0 + $0x1c] sm:$0x3]
  %v75 = vld [vmem:[%s0 + $0x1e] sm:$0x3]
  %v76 = vunpack.c.l.s8.bf16 %v60
  %v77 = vunpack.c.l.s8.bf16 %v61
  %v78 = vunpack.c.l.s8.bf16 %v62
  %v79 = vunpack.c.l.s8.bf16 %v63
  %v80 = vunpack.c.l.s8.bf16 %v64
  %v81 = vunpack.c.l.s8.bf16 %v65
  %v82 = vunpack.c.l.s8.bf16 %v66
  %v83 = vunpack.c.l.s8.bf16 %v67
  %v84 = vunpack.c.l.s8.bf16 %v68
  %v85 = vunpack.c.l.s8.bf16 %v69
  %v86 = vunpack.c.l.s8.bf16 %v70
  %v87 = vunpack.c.l.s8.bf16 %v71
  %v88 = vunpack.c.l.s8.bf16 %v72
  %v89 = vunpack.c.l.s8.bf16 %v73
  %v90 = vunpack.c.l.s8.bf16 %v74
  %v91 = vunpack.c.l.s8.bf16 %v75
  %v92 = vld [vmem:[%s1] sm:$0xf]
  %v93 = vld [vmem:[%s1 + $0x4] sm:$0xf]
  %v94 = vld [vmem:[%s1 + $0x8] sm:$0xf]
  %v95 = vld [vmem:[%s1 + $0xc] sm:$0xf]
  %v96 = vld [vmem:[%s1 + $0x10] sm:$0xf]
  %v97 = vld [vmem:[%s1 + $0x14] sm:$0xf]
  %v98 = vld [vmem:[%s1 + $0x18] sm:$0xf]
  %v99 = vld [vmem:[%s1 + $0x1c] sm:$0xf]
  %v100 = vld [vmem:[%s1 + $0x20] sm:$0xf]
  %v101 = vld [vmem:[%s1 + $0x24] sm:$0xf]
  %v102 = vld [vmem:[%s1 + $0x28] sm:$0xf]
  %v103 = vld [vmem:[%s1 + $0x2c] sm:$0xf]
  %v104 = vld [vmem:[%s1 + $0x30] sm:$0xf]
  %v105 = vld [vmem:[%s1 + $0x34] sm:$0xf]
  %v106 = vld [vmem:[%s1 + $0x38] sm:$0xf]
  %v107 = vld [vmem:[%s1 + $0x3c] sm:$0xf]
  %v124 = vunpack.c.l.b16 %v76
  %v125 = vunpack.c.l.b16 %v77
  %v126 = vunpack.c.l.b16 %v78
  %v127 = vunpack.c.l.b16 %v79
  %v128 = vunpack.c.l.b16 %v80
  %v129 = vunpack.c.l.b16 %v81
  %v130 = vunpack.c.l.b16 %v82
  %v131 = vunpack.c.l.b16 %v83
  %v132 = vunpack.c.l.b16 %v84
  %v133 = vunpack.c.l.b16 %v85
  %v134 = vunpack.c.l.b16 %v86
  %v135 = vunpack.c.l.b16 %v87
  %v136 = vunpack.c.l.b16 %v88
  %v137 = vunpack.c.l.b16 %v89
  %v138 = vunpack.c.l.b16 %v90
  %v139 = vunpack.c.l.b16 %v91
  %v140 = vpack.c.b16 %v125, %v124
  %v141 = vpack.c.b16 %v127, %v126
  %v142 = vpack.c.b16 %v129, %v128
  %v143 = vpack.c.b16 %v131, %v130
  %v144 = vpack.c.b16 %v133, %v132
  %v145 = vpack.c.b16 %v135, %v134
  %v146 = vpack.c.b16 %v137, %v136
  %v147 = vpack.c.b16 %v139, %v138
  %v172 = vunpack.c.l.b16 %v92
  %v173 = vunpack.c.l.b16 %v93
  %v174 = vunpack.c.l.b16 %v94
  %v175 = vunpack.c.l.b16 %v95
  %v176 = vunpack.c.l.b16 %v96
  %v177 = vunpack.c.l.b16 %v97
  %v178 = vunpack.c.l.b16 %v98
  %v179 = vunpack.c.l.b16 %v99
  %v180 = vunpack.c.l.b16 %v100
  %v181 = vunpack.c.l.b16 %v101
  %v182 = vunpack.c.l.b16 %v102
  %v183 = vunpack.c.l.b16 %v103
  %v184 = vunpack.c.l.b16 %v104
  %v185 = vunpack.c.l.b16 %v105
  %v186 = vunpack.c.l.b16 %v106
  %v187 = vunpack.c.l.b16 %v107
  %v188 = vpack.c.b16 %v173, %v172
  %v189 = vpack.c.b16 %v175, %v174
  %v190 = vpack.c.b16 %v177, %v176
  %v191 = vpack.c.b16 %v179, %v178
  %v192 = vpack.c.b16 %v181, %v180
  %v193 = vpack.c.b16 %v183, %v182
  %v194 = vpack.c.b16 %v185, %v184
  %v195 = vpack.c.b16 %v187, %v186
  %204 = vmatprep.subr.bf16.mxu0 0
  %205 = vmatpush1.bf16.msra.mxu0 %v188
  %206 = vmatprep.subr.bf16.mxu0 0
  %207 = vmatpush1.bf16.msra.mxu0 %v189
  %208 = vmatprep.subr.bf16.mxu0 0
  %209 = vmatpush1.bf16.msra.mxu0 %v190
  %210 = vmatprep.subr.bf16.mxu0 0
  %211 = vmatpush1.bf16.msra.mxu0 %v191
  %212 = vmatprep.subr.bf16.mxu0 0
  %213 = vmatpush1.bf16.msra.mxu0 %v192
  %214 = vmatprep.subr.bf16.mxu0 0
  %215 = vmatpush1.bf16.msra.mxu0 %v193
  %216 = vmatprep.subr.bf16.mxu0 0
  %217 = vmatpush1.bf16.msra.mxu0 %v194
  %218 = vmatprep.subr.bf16.mxu0 0
  %219 = vmatpush1.bf16.msra.mxu0 %v195
  %220 = vmatprep.subr.bf16.mxu0 0
  %221 = vmatpush1.bf16.msra.mxu0 0
  %222 = vmatprep.subr.bf16.mxu0 0
  %223 = vmatpush1.bf16.msra.mxu0 0
  %224 = vmatprep.subr.bf16.mxu0 0
  %225 = vmatpush1.bf16.msra.mxu0 0
  %226 = vmatprep.subr.bf16.mxu0 0
  %227 = vmatpush1.bf16.msra.mxu0 0
  %228 = vmatprep.subr.bf16.mxu0 0
  %229 = vmatpush1.bf16.msra.mxu0 0
  %230 = vmatprep.subr.bf16.mxu0 0
  %231 = vmatpush1.bf16.msra.mxu0 0
  %232 = vmatprep.subr.bf16.mxu0 0
  %233 = vmatpush1.bf16.msra.mxu0 0
  %234 = vmatprep.subr.bf16.mxu0 0
  %235 = vmatpush1.bf16.msra.mxu0 0
  %236 = vmatprep.mubr.bf16.mxu0 0
  %237 = vmatmul.mubr.bf16.gmra.mrb[0].mxu0 %v140
  %v238 = vpop.f32.mrb[0].mxu0
  %v239 = vadd.f32 0.0, %v238
  %v240 = vpop.f32.mrb[0].mxu0
  %v241 = vpop.f32.mrb[0].mxu0
  %v242 = vadd.f32 0.0, %v241
  %v243 = vpop.f32.mrb[0].mxu0
  %244 = vmatprep.mubr.bf16.mxu0 0
  %245 = vmatmul.mubr.bf16.gmra.mrb[0].mxu0 %v141
  %v246 = vpop.f32.mrb[0].mxu0
  %v247 = vadd.f32 0.0, %v246
  %v248 = vpop.f32.mrb[0].mxu0
  %v249 = vpop.f32.mrb[0].mxu0
  %v250 = vadd.f32 0.0, %v249
  %v251 = vpop.f32.mrb[0].mxu0
  %252 = vmatprep.mubr.bf16.mxu0 0
  %253 = vmatmul.mubr.bf16.gmra.mrb[0].mxu0 %v142
  %v254 = vpop.f32.mrb[0].mxu0
  %v255 = vadd.f32 0.0, %v254
  %v256 = vpop.f32.mrb[0].mxu0
  %v257 = vpop.f32.mrb[0].mxu0
  %v258 = vadd.f32 0.0, %v257
  %v259 = vpop.f32.mrb[0].mxu0
  %260 = vmatprep.mubr.bf16.mxu0 0
  %261 = vmatmul.mubr.bf16.gmra.mrb[0].mxu0 %v143
  %v262 = vpop.f32.mrb[0].mxu0
  %v263 = vadd.f32 0.0, %v262
  %v264 = vpop.f32.mrb[0].mxu0
  %v265 = vpop.f32.mrb[0].mxu0
  %v266 = vadd.f32 0.0, %v265
  %v267 = vpop.f32.mrb[0].mxu0
  %268 = vmatprep.mubr.bf16.mxu0 0
  %269 = vmatmul.mubr.bf16.gmra.mrb[0].mxu0 %v144
  %v270 = vpop.f32.mrb[0].mxu0
  %v271 = vadd.f32 0.0, %v270
  %v272 = vpop.f32.mrb[0].mxu0
  %v273 = vpop.f32.mrb[0].mxu0
  %v274 = vadd.f32 0.0, %v273
  %v275 = vpop.f32.mrb[0].mxu0
  %276 = vmatprep.mubr.bf16.mxu0 0
  %277 = vmatmul.mubr.bf16.gmra.mrb[0].mxu0 %v145
  %v278 = vpop.f32.mrb[0].mxu0
  %v279 = vadd.f32 0.0, %v278
  %v280 = vpop.f32.mrb[0].mxu0
  %v281 = vpop.f32.mrb[0].mxu0
  %v282 = vadd.f32 0.0, %v281
  %v283 = vpop.f32.mrb[0].mxu0
  %284 = vmatprep.mubr.bf16.mxu0 0
  %285 = vmatmul.mubr.bf16.gmra.mrb[0].mxu0 %v146
  %v286 = vpop.f32.mrb[0].mxu0
  %v287 = vadd.f32 0.0, %v286
  %v288 = vpop.f32.mrb[0].mxu0
  %v289 = vpop.f32.mrb[0].mxu0
  %v290 = vadd.f32 0.0, %v289
  %v291 = vpop.f32.mrb[0].mxu0
  %292 = vmatprep.mubr.bf16.mxu0 0
  %293 = vmatmul.mubr.bf16.gmra.mrb[0].mxu0 %v147
  %v294 = vpop.f32.mrb[0].mxu0
  %v295 = vadd.f32 0.0, %v294
  %v296 = vpop.f32.mrb[0].mxu0
  %v297 = vpop.f32.mrb[0].mxu0
  %v298 = vadd.f32 0.0, %v297
  %v299 = vpop.f32.mrb[0].mxu0
  %300 = vdwg.mxu0
  %v301 = vadd.f32 %v44, %v239
  %v302 = vadd.f32 %v45, %v242
  %v303 = vadd.f32 %v46, %v247
  %v304 = vadd.f32 %v47, %v250
  %v305 = vadd.f32 %v48, %v255
  %v306 = vadd.f32 %v49, %v258
  %v307 = vadd.f32 %v50, %v263
  %v308 = vadd.f32 %v51, %v266
  %v309 = vadd.f32 %v52, %v271
  %v310 = vadd.f32 %v53, %v274
  %v311 = vadd.f32 %v54, %v279
  %v312 = vadd.f32 %v55, %v282
  %v313 = vadd.f32 %v56, %v287
  %v314 = vadd.f32 %v57, %v290
  %v315 = vadd.f32 %v58, %v295
  %v316 = vadd.f32 %v59, %v298
  %317 = vst [vmem:[#allocation2] sm:$0xff] %v301
  %318 = vst [vmem:[#allocation2 + $0x8] sm:$0xff] %v302
  %319 = vst [vmem:[#allocation2 + $0x10] sm:$0xff] %v303
  %320 = vst [vmem:[#allocation2 + $0x18] sm:$0xff] %v304
  %321 = vst [vmem:[#allocation2 + $0x20] sm:$0xff] %v305
  %322 = vst [vmem:[#allocation2 + $0x28] sm:$0xff] %v306
  %323 = vst [vmem:[#allocation2 + $0x30] sm:$0xff] %v307
  %324 = vst [vmem:[#allocation2 + $0x38] sm:$0xff] %v308
  %325 = vst [vmem:[#allocation2 + $0x40] sm:$0xff] %v309
  %326 = vst [vmem:[#allocation2 + $0x48] sm:$0xff] %v310
  %327 = vst [vmem:[#allocation2 + $0x50] sm:$0xff] %v311
  %328 = vst [vmem:[#allocation2 + $0x58] sm:$0xff] %v312
  %329 = vst [vmem:[#allocation2 + $0x60] sm:$0xff] %v313
  %330 = vst [vmem:[#allocation2 + $0x68] sm:$0xff] %v314
  %331 = vst [vmem:[#allocation2 + $0x70] sm:$0xff] %v315
  %332 = vst [vmem:[#allocation2 + $0x78] sm:$0xff] %v316
  // Predicated region
  $region30: #{feature_imputer_forward.3} parent=0 // pred_check
    %p333 = pneg %p24
  $region31: #{feature_imputer_forward.3} parent=0 // pred_check_branch
    %335 = sbr.rel (%p333) target = $region33
  $region32: #{feature_imputer_forward.3} parent=0 // pred_region
    %v336 = vld [vmem:[#allocation2] sm:$0xff]
    %v337 = vld [vmem:[#allocation2 + $0x8] sm:$0xff]
    %v338 = vld [vmem:[#allocation2 + $0x10] sm:$0xff]
    %v339 = vld [vmem:[#allocation2 + $0x18] sm:$0xff]
    %v340 = vld [vmem:[#allocation2 + $0x20] sm:$0xff]
    %v341 = vld [vmem:[#allocation2 + $0x28] sm:$0xff]
    %v342 = vld [vmem:[#allocation2 + $0x30] sm:$0xff]
    %v343 = vld [vmem:[#allocation2 + $0x38] sm:$0xff]
    %v344 = vld [vmem:[#allocation2 + $0x40] sm:$0xff]
    %v345 = vld [vmem:[#allocation2 + $0x48] sm:$0xff]
    %v346 = vld [vmem:[#allocation2 + $0x50] sm:$0xff]
    %v347 = vld [vmem:[#allocation2 + $0x58] sm:$0xff]
    %v348 = vld [vmem:[#allocation2 + $0x60] sm:$0xff]
    %v349 = vld [vmem:[#allocation2 + $0x68] sm:$0xff]
    %v350 = vld [vmem:[#allocation2 + $0x70] sm:$0xff]
    %v351 = vld [vmem:[#allocation2 + $0x78] sm:$0xff]
    %v352 = vld [vmem:[%s2] sm:$0xff]
    %v353 = vld [vmem:[%s2 + $0x8] sm:$0xff]
    %v354 = vld [vmem:[%s2 + $0x10] sm:$0xff]
    %v355 = vld [vmem:[%s2 + $0x18] sm:$0xff]
    %v356 = vld [vmem:[%s2 + $0x20] sm:$0xff]
    %v357 = vld [vmem:[%s2 + $0x28] sm:$0xff]
    %v358 = vld [vmem:[%s2 + $0x30] sm:$0xff]
    %v359 = vld [vmem:[%s2 + $0x38] sm:$0xff]
    %v360 = vld [vmem:[%s2 + $0x40] sm:$0xff]
    %v361 = vld [vmem:[%s2 + $0x48] sm:$0xff]
    %v362 = vld [vmem:[%s2 + $0x50] sm:$0xff]
    %v363 = vld [vmem:[%s2 + $0x58] sm:$0xff]
    %v364 = vld [vmem:[%s2 + $0x60] sm:$0xff]
    %v365 = vld [vmem:[%s2 + $0x68] sm:$0xff]
    %v366 = vld [vmem:[%s2 + $0x70] sm:$0xff]
    %v367 = vld [vmem:[%s2 + $0x78] sm:$0xff]
    %369 = vset.pattern.permute.xlu0 0
    %370 = vperm.xlu0 %369, %v352
    %v371 = vpop.permute.xlu0 %370
    %374 = vset.pattern.permute.xlu0 0
    %375 = vperm.xlu0 %374, %v353
    %v376 = vpop.permute.xlu0 %375
    %379 = vset.pattern.permute.xlu0 0
    %380 = vperm.xlu0 %379, %v354
    %v381 = vpop.permute.xlu0 %380
    %384 = vset.pattern.permute.xlu0 0
    %385 = vperm.xlu0 %384, %v355
    %v386 = vpop.permute.xlu0 %385
    %389 = vset.pattern.permute.xlu0 0
    %390 = vperm.xlu0 %389, %v356
    %v391 = vpop.permute.xlu0 %390
    %394 = vset.pattern.permute.xlu0 0
    %395 = vperm.xlu0 %394, %v357
    %v396 = vpop.permute.xlu0 %395
    %399 = vset.pattern.permute.xlu0 0
    %400 = vperm.xlu0 %399, %v358
    %v401 = vpop.permute.xlu0 %400
    %404 = vset.pattern.permute.xlu0 0
    %405 = vperm.xlu0 %404, %v359
    %v406 = vpop.permute.xlu0 %405
    %409 = vset.pattern.permute.xlu0 0
    %410 = vperm.xlu0 %409, %v360
    %v411 = vpop.permute.xlu0 %410
    %414 = vset.pattern.permute.xlu0 0
    %415 = vperm.xlu0 %414, %v361
    %v416 = vpop.permute.xlu0 %415
    %419 = vset.pattern.permute.xlu0 0
    %420 = vperm.xlu0 %419, %v362
    %v421 = vpop.permute.xlu0 %420
    %424 = vset.pattern.permute.xlu0 0
    %425 = vperm.xlu0 %424, %v363
    %v426 = vpop.permute.xlu0 %425
    %429 = vset.pattern.permute.xlu0 0
    %430 = vperm.xlu0 %429, %v364
    %v431 = vpop.permute.xlu0 %430
    %434 = vset.pattern.permute.xlu0 0
    %435 = vperm.xlu0 %434, %v365
    %v436 = vpop.permute.xlu0 %435
    %439 = vset.pattern.permute.xlu0 0
    %440 = vperm.xlu0 %439, %v366
    %v441 = vpop.permute.xlu0 %440
    %444 = vset.pattern.permute.xlu0 0
    %445 = vperm.xlu0 %444, %v367
    %v446 = vpop.permute.xlu0 %445
    %v448 = vmul.f32 %v336, %v371
    %v449 = vmul.f32 %v337, %v376
    %v450 = vmul.f32 %v338, %v381
    %v451 = vmul.f32 %v339, %v386
    %v452 = vmul.f32 %v340, %v391
    %v453 = vmul.f32 %v341, %v396
    %v454 = vmul.f32 %v342, %v401
    %v455 = vmul.f32 %v343, %v406
    %v456 = vmul.f32 %v344, %v411
    %v457 = vmul.f32 %v345, %v416
    %v458 = vmul.f32 %v346, %v421
    %v459 = vmul.f32 %v347, %v426
    %v460 = vmul.f32 %v348, %v431
    %v461 = vmul.f32 %v349, %v436
    %v462 = vmul.f32 %v350, %v441
    %v463 = vmul.f32 %v351, %v446
    %v464 = vld [vmem:[%s3] sm:$0x1]
    %v466 = vlaneseq
    %v467 = vshrl.u32 %v466, 7
    %v468 = vsub.s32 0, %v467
    %v469 = vrot.slane %v464, %v468
    %v471 = vadd.f32 %v448, %v469
    %v472 = vadd.f32 %v449, %v469
    %v473 = vadd.f32 %v450, %v469
    %v474 = vadd.f32 %v451, %v469
    %v475 = vadd.f32 %v452, %v469
    %v476 = vadd.f32 %v453, %v469
    %v477 = vadd.f32 %v454, %v469
    %v478 = vadd.f32 %v455, %v469
    %v479 = vadd.f32 %v456, %v469
    %v480 = vadd.f32 %v457, %v469
    %v481 = vadd.f32 %v458, %v469
    %v482 = vadd.f32 %v459, %v469
    %v483 = vadd.f32 %v460, %v469
    %v484 = vadd.f32 %v461, %v469
    %v485 = vadd.f32 %v462, %v469
    %v486 = vadd.f32 %v463, %v469
    %v487 = vmax.f32 %v471, 0.0
    %v488 = vmax.f32 %v472, 0.0
    %v489 = vmax.f32 %v473, 0.0
    %v490 = vmax.f32 %v474, 0.0
    %v491 = vmax.f32 %v475, 0.0
    %v492 = vmax.f32 %v476, 0.0
    %v493 = vmax.f32 %v477, 0.0
    %v494 = vmax.f32 %v478, 0.0
    %v495 = vmax.f32 %v479, 0.0
    %v496 = vmax.f32 %v480, 0.0
    %v497 = vmax.f32 %v481, 0.0
    %v498 = vmax.f32 %v482, 0.0
    %v499 = vmax.f32 %v483, 0.0
    %v500 = vmax.f32 %v484, 0.0
    %v501 = vmax.f32 %v485, 0.0
    %v502 = vmax.f32 %v486, 0.0
    %v503 = vpack.c.bf16 %v488, %v487
    %v504 = vpack.c.bf16 %v490, %v489
    %v505 = vpack.c.bf16 %v492, %v491
    %v506 = vpack.c.bf16 %v494, %v493
    %v507 = vpack.c.bf16 %v496, %v495
    %v508 = vpack.c.bf16 %v498, %v497
    %v509 = vpack.c.bf16 %v500, %v499
    %v510 = vpack.c.bf16 %v502, %v501
    %v511 = vld [vmem:[%s4] sm:$0xf]
    %v512 = vld [vmem:[%s4 + $0x4] sm:$0xf]
    %v513 = vld [vmem:[%s4 + $0x8] sm:$0xf]
    %v514 = vld [vmem:[%s4 + $0xc] sm:$0xf]
    %v515 = vld [vmem:[%s4 + $0x10] sm:$0xf]
    %v516 = vld [vmem:[%s4 + $0x14] sm:$0xf]
    %v517 = vld [vmem:[%s4 + $0x18] sm:$0xf]
    %v518 = vld [vmem:[%s4 + $0x1c] sm:$0xf]
    %v519 = vld [vmem:[%s4 + $0x20] sm:$0xf]
    %v520 = vld [vmem:[%s4 + $0x24] sm:$0xf]
    %v521 = vld [vmem:[%s4 + $0x28] sm:$0xf]
    %v522 = vld [vmem:[%s4 + $0x2c] sm:$0xf]
    %v523 = vld [vmem:[%s4 + $0x30] sm:$0xf]
    %v524 = vld [vmem:[%s4 + $0x34] sm:$0xf]
    %v525 = vld [vmem:[%s4 + $0x38] sm:$0xf]
    %v526 = vld [vmem:[%s4 + $0x3c] sm:$0xf]
    %v527 = vld [vmem:[%s5] sm:$0x1]
    %v529 = vlaneseq
    %v530 = vshrl.u32 %v529, 7
    %v531 = vsub.s32 0, %v530
    %v532 = vrot.slane %v527, %v531
    %v550 = vunpack.c.l.b16 %v511
    %v551 = vunpack.c.l.b16 %v512
    %v552 = vunpack.c.l.b16 %v513
    %v553 = vunpack.c.l.b16 %v514
    %v554 = vunpack.c.l.b16 %v515
    %v555 = vunpack.c.l.b16 %v516
    %v556 = vunpack.c.l.b16 %v517
    %v557 = vunpack.c.l.b16 %v518
    %v558 = vunpack.c.l.b16 %v519
    %v559 = vunpack.c.l.b16 %v520
    %v560 = vunpack.c.l.b16 %v521
    %v561 = vunpack.c.l.b16 %v522
    %v562 = vunpack.c.l.b16 %v523
    %v563 = vunpack.c.l.b16 %v524
    %v564 = vunpack.c.l.b16 %v525
    %v565 = vunpack.c.l.b16 %v526
    %v566 = vpack.c.b16 %v551, %v550
    %v567 = vpack.c.b16 %v553, %v552
    %v568 = vpack.c.b16 %v555, %v554
    %v569 = vpack.c.b16 %v557, %v556
    %v570 = vpack.c.b16 %v559, %v558
    %v571 = vpack.c.b16 %v561, %v560
    %v572 = vpack.c.b16 %v563, %v562
    %v573 = vpack.c.b16 %v565, %v564
    %582 = vmatprep.subr.bf16.mxu0 0
    %583 = vmatpush1.bf16.msra.mxu0 %v566
    %584 = vmatprep.subr.bf16.mxu0 0
    %585 = vmatpush1.bf16.msra.mxu0 %v567
    %586 = vmatprep.subr.bf16.mxu0 0
    %587 = vmatpush1.bf16.msra.mxu0 %v568
    %588 = vmatprep.subr.bf16.mxu0 0
    %589 = vmatpush1.bf16.msra.mxu0 %v569
    %590 = vmatprep.subr.bf16.mxu0 0
    %591 = vmatpush1.bf16.msra.mxu0 %v570
    %592 = vmatprep.subr.bf16.mxu0 0
    %593 = vmatpush1.bf16.msra.mxu0 %v571
    %594 = vmatprep.subr.bf16.mxu0 0
    %595 = vmatpush1.bf16.msra.mxu0 %v572
    %596 = vmatprep.subr.bf16.mxu0 0
    %597 = vmatpush1.bf16.msra.mxu0 %v573
    %598 = vmatprep.subr.bf16.mxu0 0
    %599 = vmatpush1.bf16.msra.mxu0 0
    %600 = vmatprep.subr.bf16.mxu0 0
    %601 = vmatpush1.bf16.msra.mxu0 0
    %602 = vmatprep.subr.bf16.mxu0 0
    %603 = vmatpush1.bf16.msra.mxu0 0
    %604 = vmatprep.subr.bf16.mxu0 0
    %605 = vmatpush1.bf16.msra.mxu0 0
    %606 = vmatprep.subr.bf16.mxu0 0
    %607 = vmatpush1.bf16.msra.mxu0 0
    %608 = vmatprep.subr.bf16.mxu0 0
    %609 = vmatpush1.bf16.msra.mxu0 0
    %610 = vmatprep.subr.bf16.mxu0 0
    %611 = vmatpush1.bf16.msra.mxu0 0
    %612 = vmatprep.subr.bf16.mxu0 0
    %613 = vmatpush1.bf16.msra.mxu0 0
    %614 = vmatprep.mubr.bf16.mxu0 0
    %615 = vmatmul.mubr.bf16.gmra.mrb[0].mxu0 %v503
    %v616 = vpop.f32.mrb[0].mxu0
    %v617 = vadd.f32 %v532, %v616
    %v618 = vpop.f32.mrb[0].mxu0
    %v619 = vpop.f32.mrb[0].mxu0
    %v620 = vadd.f32 %v532, %v619
    %v621 = vpop.f32.mrb[0].mxu0
    %622 = vmatprep.mubr.bf16.mxu0 0
    %623 = vmatmul.mubr.bf16.gmra.mrb[0].mxu0 %v504
    %v624 = vpop.f32.mrb[0].mxu0
    %v625 = vadd.f32 %v532, %v624
    %v626 = vpop.f32.mrb[0].mxu0
    %v627 = vpop.f32.mrb[0].mxu0
    %v628 = vadd.f32 %v532, %v627
    %v629 = vpop.f32.mrb[0].mxu0
    %630 = vmatprep.mubr.bf16.mxu0 0
    %631 = vmatmul.mubr.bf16.gmra.mrb[0].mxu0 %v505
    %v632 = vpop.f32.mrb[0].mxu0
    %v633 = vadd.f32 %v532, %v632
    %v634 = vpop.f32.mrb[0].mxu0
    %v635 = vpop.f32.mrb[0].mxu0
    %v636 = vadd.f32 %v532, %v635
    %v637 = vpop.f32.mrb[0].mxu0
    %638 = vmatprep.mubr.bf16.mxu0 0
    %639 = vmatmul.mubr.bf16.gmra.mrb[0].mxu0 %v506
    %v640 = vpop.f32.mrb[0].mxu0
    %v641 = vadd.f32 %v532, %v640
    %v642 = vpop.f32.mrb[0].mxu0
    %v643 = vpop.f32.mrb[0].mxu0
    %v644 = vadd.f32 %v532, %v643
    %v645 = vpop.f32.mrb[0].mxu0
    %646 = vmatprep.mubr.bf16.mxu0 0
    %647 = vmatmul.mubr.bf16.gmra.mrb[0].mxu0 %v507
    %v648 = vpop.f32.mrb[0].mxu0
    %v649 = vadd.f32 %v532, %v648
    %v650 = vpop.f32.mrb[0].mxu0
    %v651 = vpop.f32.mrb[0].mxu0
    %v652 = vadd.f32 %v532, %v651
    %v653 = vpop.f32.mrb[0].mxu0
    %654 = vmatprep.mubr.bf16.mxu0 0
    %655 = vmatmul.mubr.bf16.gmra.mrb[0].mxu0 %v508
    %v656 = vpop.f32.mrb[0].mxu0
    %v657 = vadd.f32 %v532, %v656
    %v658 = vpop.f32.mrb[0].mxu0
    %v659 = vpop.f32.mrb[0].mxu0
    %v660 = vadd.f32 %v532, %v659
    %v661 = vpop.f32.mrb[0].mxu0
    %662 = vmatprep.mubr.bf16.mxu0 0
    %663 = vmatmul.mubr.bf16.gmra.mrb[0].mxu0 %v509
    %v664 = vpop.f32.mrb[0].mxu0
    %v665 = vadd.f32 %v532, %v664
    %v666 = vpop.f32.mrb[0].mxu0
    %v667 = vpop.f32.mrb[0].mxu0
    %v668 = vadd.f32 %v532, %v667
    %v669 = vpop.f32.mrb[0].mxu0
    %670 = vmatprep.mubr.bf16.mxu0 0
    %671 = vmatmul.mubr.bf16.gmra.mrb[0].mxu0 %v510
    %v672 = vpop.f32.mrb[0].mxu0
    %v673 = vadd.f32 %v532, %v672
    %v674 = vpop.f32.mrb[0].mxu0
    %v675 = vpop.f32.mrb[0].mxu0
    %v676 = vadd.f32 %v532, %v675
    %v677 = vpop.f32.mrb[0].mxu0
    %678 = vdwg.mxu0
    %679 = vst [vmem:[%s6] sm:$0xff] %v617
    %680 = vst [vmem:[%s6 + $0x8] sm:$0xff] %v620
    %681 = vst [vmem:[%s6 + $0x10] sm:$0xff] %v625
    %682 = vst [vmem:[%s6 + $0x18] sm:$0xff] %v628
    %683 = vst [vmem:[%s6 + $0x20] sm:$0xff] %v633
    %684 = vst [vmem:[%s6 + $0x28] sm:$0xff] %v636
    %685 = vst [vmem:[%s6 + $0x30] sm:$0xff] %v641
    %686 = vst [vmem:[%s6 + $0x38] sm:$0xff] %v644
    %687 = vst [vmem:[%s6 + $0x40] sm:$0xff] %v649
    %688 = vst [vmem:[%s6 + $0x48] sm:$0xff] %v652
    %689 = vst [vmem:[%s6 + $0x50] sm:$0xff] %v657
    %690 = vst [vmem:[%s6 + $0x58] sm:$0xff] %v660
    %691 = vst [vmem:[%s6 + $0x60] sm:$0xff] %v665
    %692 = vst [vmem:[%s6 + $0x68] sm:$0xff] %v668
    %693 = vst [vmem:[%s6 + $0x70] sm:$0xff] %v673
    %694 = vst [vmem:[%s6 + $0x78] sm:$0xff] %v676
  $region33: #{feature_imputer_forward.3} parent=0 // pred_fallthru
    _
  // Predicated region
  $region34: #{feature_imputer_forward.3} parent=0 // pred_check
    _
  $region35: #{feature_imputer_forward.3} parent=0 // pred_check_branch
    %696 = sbr.rel (0) target = $region37
  $region36: #{feature_imputer_forward.3} parent=0 // pred_region
    _
  $region37: #{feature_imputer_forward.3} parent=0 // pred_fallthru
    _
  // Predicated region
  $region38: #{feature_imputer_forward.3} parent=0 // pred_check
    _
  $region39: #{feature_imputer_forward.3} parent=0 // pred_check_branch
    %698 = sbr.rel (0) target = $region41
  $region40: #{feature_imputer_forward.3} parent=0 // pred_region
    _
  $region41: #{feature_imputer_forward.3} parent=0 // pred_fallthru
    _

// kernel: feature_imputer_forward.2
$region0: #{feature_imputer_forward.2}
  #allocation0 [shape = 'u32[]', space=smem, size = 0x4, offset = 0x4, fixed_abs, tag = 'smem constant byte address 0x4 - core index']
  #allocation1 [shape = 'u32[144,128]{1,0:T(1,128)}', space=vmem, size = 0x12000, scoped, tag = 'internal scratch']
  #allocation2 [shape = 'f32[128,128]{1,0:T(8,128)}', space=vmem, size = 0x10000, scoped, tag = 'scratch operand']
  %s0 = inlined_call_operand.vmem [shape: bf16[128,128], index: 0, kind: input, shape index: {}]
  %s1 = inlined_call_operand.vmem [shape: bf16[128,128], index: 1, kind: input, shape index: {}]
  %s2 = inlined_call_operand.vmem [shape: f32[128,1], index: 2, kind: input, shape index: {}]
  %s3 = inlined_call_operand.vmem [shape: f32[1,128], index: 3, kind: input, shape index: {}]
  %s4 = inlined_call_operand.vmem [shape: bf16[128,128], index: 4, kind: input, shape index: {}]
  %s5 = inlined_call_operand.vmem [shape: bf16[128,128], index: 5, kind: output, shape index: {}]
  %s6 = sld [smem:[#allocation0]]
  $region38: #{feature_imputer_forward.2} parent=0
    _
  %s8 = ssub.s32 1, %s6
  %s9 = scalar_select 0, %s8, %s6
  // Predicated region
  $region2: #{feature_imputer_forward.2} parent=0 // pred_check
    _
  $region3: #{feature_imputer_forward.2} parent=0 // pred_check_branch
    %11 = sbr.rel (0) target = $region5
  $region4: #{feature_imputer_forward.2} parent=0 // pred_region
    _
  $region5: #{feature_imputer_forward.2} parent=0 // pred_fallthru
    _
  // Predicated region
  $region6: #{feature_imputer_forward.2} parent=0 // pred_check
    _
  $region7: #{feature_imputer_forward.2} parent=0 // pred_check_branch
    %13 = sbr.rel (0) target = $region9
  $region8: #{feature_imputer_forward.2} parent=0 // pred_region
    _
  $region9: #{feature_imputer_forward.2} parent=0 // pred_fallthru
    _
  // Predicated region
  $region10: #{feature_imputer_forward.2} parent=0 // pred_check
    _
  $region11: #{feature_imputer_forward.2} parent=0 // pred_check_branch
    %15 = sbr.rel (0) target = $region13
  $region12: #{feature_imputer_forward.2} parent=0 // pred_region
    _
  $region13: #{feature_imputer_forward.2} parent=0 // pred_fallthru
    _
  // Predicated region
  $region14: #{feature_imputer_forward.2} parent=0 // pred_check
    _
  $region15: #{feature_imputer_forward.2} parent=0 // pred_check_branch
    %17 = sbr.rel (0) target = $region17
  $region16: #{feature_imputer_forward.2} parent=0 // pred_region
    _
  $region17: #{feature_imputer_forward.2} parent=0 // pred_fallthru
    _
  // Predicated region
  $region18: #{feature_imputer_forward.2} parent=0 // pred_check
    _
  $region19: #{feature_imputer_forward.2} parent=0 // pred_check_branch
    %19 = sbr.rel (0) target = $region21
  $region20: #{feature_imputer_forward.2} parent=0 // pred_region
    _
  $region21: #{feature_imputer_forward.2} parent=0 // pred_fallthru
    _
  %p21 = scmp.eq.s32.totalorder 0, 0
  // Predicated region
  $region22: #{feature_imputer_forward.2} parent=0 // pred_check
    %p22 = pneg %p21
  $region23: #{feature_imputer_forward.2} parent=0 // pred_check_branch
    %24 = sbr.rel (%p22) target = $region25
  $region24: #{feature_imputer_forward.2} parent=0 // pred_region
    %25 = vst [vmem:[#allocation2] sm:$0xff] 0.0
    %26 = vst [vmem:[#allocation2 + $0x8] sm:$0xff] 0.0
    %27 = vst [vmem:[#allocation2 + $0x10] sm:$0xff] 0.0
    %28 = vst [vmem:[#allocation2 + $0x18] sm:$0xff] 0.0
    %29 = vst [vmem:[#allocation2 + $0x20] sm:$0xff] 0.0
    %30 = vst [vmem:[#allocation2 + $0x28] sm:$0xff] 0.0
    %31 = vst [vmem:[#allocation2 + $0x30] sm:$0xff] 0.0
    %32 = vst [vmem:[#allocation2 + $0x38] sm:$0xff] 0.0
    %33 = vst [vmem:[#allocation2 + $0x40] sm:$0xff] 0.0
    %34 = vst [vmem:[#allocation2 + $0x48] sm:$0xff] 0.0
    %35 = vst [vmem:[#allocation2 + $0x50] sm:$0xff] 0.0
    %36 = vst [vmem:[#allocation2 + $0x58] sm:$0xff] 0.0
    %37 = vst [vmem:[#allocation2 + $0x60] sm:$0xff] 0.0
    %38 = vst [vmem:[#allocation2 + $0x68] sm:$0xff] 0.0
    %39 = vst [vmem:[#allocation2 + $0x70] sm:$0xff] 0.0
    %40 = vst [vmem:[#allocation2 + $0x78] sm:$0xff] 0.0
  $region25: #{feature_imputer_forward.2} parent=0 // pred_fallthru
    _
  %v41 = vld [vmem:[#allocation2] sm:$0xff]
  %v42 = vld [vmem:[#allocation2 + $0x8] sm:$0xff]
  %v43 = vld [vmem:[#allocation2 + $0x10] sm:$0xff]
  %v44 = vld [vmem:[#allocation2 + $0x18] sm:$0xff]
  %v45 = vld [vmem:[#allocation2 + $0x20] sm:$0xff]
  %v46 = vld [vmem:[#allocation2 + $0x28] sm:$0xff]
  %v47 = vld [vmem:[#allocation2 + $0x30] sm:$0xff]
  %v48 = vld [vmem:[#allocation2 + $0x38] sm:$0xff]
  %v49 = vld [vmem:[#allocation2 + $0x40] sm:$0xff]
  %v50 = vld [vmem:[#allocation2 + $0x48] sm:$0xff]
  %v51 = vld [vmem:[#allocation2 + $0x50] sm:$0xff]
  %v52 = vld [vmem:[#allocation2 + $0x58] sm:$0xff]
  %v53 = vld [vmem:[#allocation2 + $0x60] sm:$0xff]
  %v54 = vld [vmem:[#allocation2 + $0x68] sm:$0xff]
  %v55 = vld [vmem:[#allocation2 + $0x70] sm:$0xff]
  %v56 = vld [vmem:[#allocation2 + $0x78] sm:$0xff]
  %v57 = vld [vmem:[%s0] sm:$0xf]
  %v58 = vld [vmem:[%s0 + $0x4] sm:$0xf]
  %v59 = vld [vmem:[%s0 + $0x8] sm:$0xf]
  %v60 = vld [vmem:[%s0 + $0xc] sm:$0xf]
  %v61 = vld [vmem:[%s0 + $0x10] sm:$0xf]
  %v62 = vld [vmem:[%s0 + $0x14] sm:$0xf]
  %v63 = vld [vmem:[%s0 + $0x18] sm:$0xf]
  %v64 = vld [vmem:[%s0 + $0x1c] sm:$0xf]
  %v65 = vld [vmem:[%s0 + $0x20] sm:$0xf]
  %v66 = vld [vmem:[%s0 + $0x24] sm:$0xf]
  %v67 = vld [vmem:[%s0 + $0x28] sm:$0xf]
  %v68 = vld [vmem:[%s0 + $0x2c] sm:$0xf]
  %v69 = vld [vmem:[%s0 + $0x30] sm:$0xf]
  %v70 = vld [vmem:[%s0 + $0x34] sm:$0xf]
  %v71 = vld [vmem:[%s0 + $0x38] sm:$0xf]
  %v72 = vld [vmem:[%s0 + $0x3c] sm:$0xf]
  %v73 = vld [vmem:[%s1] sm:$0xf]
  %v74 = vld [vmem:[%s1 + $0x4] sm:$0xf]
  %v75 = vld [vmem:[%s1 + $0x8] sm:$0xf]
  %v76 = vld [vmem:[%s1 + $0xc] sm:$0xf]
  %v77 = vld [vmem:[%s1 + $0x10] sm:$0xf]
  %v78 = vld [vmem:[%s1 + $0x14] sm:$0xf]
  %v79 = vld [vmem:[%s1 + $0x18] sm:$0xf]
  %v80 = vld [vmem:[%s1 + $0x1c] sm:$0xf]
  %v81 = vld [vmem:[%s1 + $0x20] sm:$0xf]
  %v82 = vld [vmem:[%s1 + $0x24] sm:$0xf]
  %v83 = vld [vmem:[%s1 + $0x28] sm:$0xf]
  %v84 = vld [vmem:[%s1 + $0x2c] sm:$0xf]
  %v85 = vld [vmem:[%s1 + $0x30] sm:$0xf]
  %v86 = vld [vmem:[%s1 + $0x34] sm:$0xf]
  %v87 = vld [vmem:[%s1 + $0x38] sm:$0xf]
  %v88 = vld [vmem:[%s1 + $0x3c] sm:$0xf]
  %v105 = vunpack.c.l.b16 %v57
  %v106 = vunpack.c.l.b16 %v58
  %v107 = vunpack.c.l.b16 %v59
  %v108 = vunpack.c.l.b16 %v60
  %v109 = vunpack.c.l.b16 %v61
  %v110 = vunpack.c.l.b16 %v62
  %v111 = vunpack.c.l.b16 %v63
  %v112 = vunpack.c.l.b16 %v64
  %v113 = vunpack.c.l.b16 %v65
  %v114 = vunpack.c.l.b16 %v66
  %v115 = vunpack.c.l.b16 %v67
  %v116 = vunpack.c.l.b16 %v68
  %v117 = vunpack.c.l.b16 %v69
  %v118 = vunpack.c.l.b16 %v70
  %v119 = vunpack.c.l.b16 %v71
  %v120 = vunpack.c.l.b16 %v72
  %v121 = vpack.c.b16 %v106, %v105
  %v122 = vpack.c.b16 %v108, %v107
  %v123 = vpack.c.b16 %v110, %v109
  %v124 = vpack.c.b16 %v112, %v111
  %v125 = vpack.c.b16 %v114, %v113
  %v126 = vpack.c.b16 %v116, %v115
  %v127 = vpack.c.b16 %v118, %v117
  %v128 = vpack.c.b16 %v120, %v119
  %v153 = vunpack.c.l.b16 %v73
  %v154 = vunpack.c.l.b16 %v74
  %v155 = vunpack.c.l.b16 %v75
  %v156 = vunpack.c.l.b16 %v76
  %v157 = vunpack.c.l.b16 %v77
  %v158 = vunpack.c.l.b16 %v78
  %v159 = vunpack.c.l.b16 %v79
  %v160 = vunpack.c.l.b16 %v80
  %v161 = vunpack.c.l.b16 %v81
  %v162 = vunpack.c.l.b16 %v82
  %v163 = vunpack.c.l.b16 %v83
  %v164 = vunpack.c.l.b16 %v84
  %v165 = vunpack.c.l.b16 %v85
  %v166 = vunpack.c.l.b16 %v86
  %v167 = vunpack.c.l.b16 %v87
  %v168 = vunpack.c.l.b16 %v88
  %v169 = vpack.c.b16 %v154, %v153
  %v170 = vpack.c.b16 %v156, %v155
  %v171 = vpack.c.b16 %v158, %v157
  %v172 = vpack.c.b16 %v160, %v159
  %v173 = vpack.c.b16 %v162, %v161
  %v174 = vpack.c.b16 %v164, %v163
  %v175 = vpack.c.b16 %v166, %v165
  %v176 = vpack.c.b16 %v168, %v167
  %185 = vmatprep.subr.bf16.mxu0 0
  %186 = vmatpush1.bf16.msra.mxu0 %v169
  %187 = vmatprep.subr.bf16.mxu0 0
  %188 = vmatpush1.bf16.msra.mxu0 %v170
  %189 = vmatprep.subr.bf16.mxu0 0
  %190 = vmatpush1.bf16.msra.mxu0 %v171
  %191 = vmatprep.subr.bf16.mxu0 0
  %192 = vmatpush1.bf16.msra.mxu0 %v172
  %193 = vmatprep.subr.bf16.mxu0 0
  %194 = vmatpush1.bf16.msra.mxu0 %v173
  %195 = vmatprep.subr.bf16.mxu0 0
  %196 = vmatpush1.bf16.msra.mxu0 %v174
  %197 = vmatprep.subr.bf16.mxu0 0
  %198 = vmatpush1.bf16.msra.mxu0 %v175
  %199 = vmatprep.subr.bf16.mxu0 0
  %200 = vmatpush1.bf16.msra.mxu0 %v176
  %201 = vmatprep.subr.bf16.mxu0 0
  %202 = vmatpush1.bf16.msra.mxu0 0
  %203 = vmatprep.subr.bf16.mxu0 0
  %204 = vmatpush1.bf16.msra.mxu0 0
  %205 = vmatprep.subr.bf16.mxu0 0
  %206 = vmatpush1.bf16.msra.mxu0 0
  %207 = vmatprep.subr.bf16.mxu0 0
  %208 = vmatpush1.bf16.msra.mxu0 0
  %209 = vmatprep.subr.bf16.mxu0 0
  %210 = vmatpush1.bf16.msra.mxu0 0
  %211 = vmatprep.subr.bf16.mxu0 0
  %212 = vmatpush1.bf16.msra.mxu0 0
  %213 = vmatprep.subr.bf16.mxu0 0
  %214 = vmatpush1.bf16.msra.mxu0 0
  %215 = vmatprep.subr.bf16.mxu0 0
  %216 = vmatpush1.bf16.msra.mxu0 0
  %217 = vmatprep.mubr.bf16.mxu0 0
  %218 = vmatmul.mubr.bf16.gmra.mrb[0].mxu0 %v121
  %v219 = vpop.f32.mrb[0].mxu0
  %v220 = vadd.f32 0.0, %v219
  %v221 = vpop.f32.mrb[0].mxu0
  %v222 = vpop.f32.mrb[0].mxu0
  %v223 = vadd.f32 0.0, %v222
  %v224 = vpop.f32.mrb[0].mxu0
  %225 = vmatprep.mubr.bf16.mxu0 0
  %226 = vmatmul.mubr.bf16.gmra.mrb[0].mxu0 %v122
  %v227 = vpop.f32.mrb[0].mxu0
  %v228 = vadd.f32 0.0, %v227
  %v229 = vpop.f32.mrb[0].mxu0
  %v230 = vpop.f32.mrb[0].mxu0
  %v231 = vadd.f32 0.0, %v230
  %v232 = vpop.f32.mrb[0].mxu0
  %233 = vmatprep.mubr.bf16.mxu0 0
  %234 = vmatmul.mubr.bf16.gmra.mrb[0].mxu0 %v123
  %v235 = vpop.f32.mrb[0].mxu0
  %v236 = vadd.f32 0.0, %v235
  %v237 = vpop.f32.mrb[0].mxu0
  %v238 = vpop.f32.mrb[0].mxu0
  %v239 = vadd.f32 0.0, %v238
  %v240 = vpop.f32.mrb[0].mxu0
  %241 = vmatprep.mubr.bf16.mxu0 0
  %242 = vmatmul.mubr.bf16.gmra.mrb[0].mxu0 %v124
  %v243 = vpop.f32.mrb[0].mxu0
  %v244 = vadd.f32 0.0, %v243
  %v245 = vpop.f32.mrb[0].mxu0
  %v246 = vpop.f32.mrb[0].mxu0
  %v247 = vadd.f32 0.0, %v246
  %v248 = vpop.f32.mrb[0].mxu0
  %249 = vmatprep.mubr.bf16.mxu0 0
  %250 = vmatmul.mubr.bf16.gmra.mrb[0].mxu0 %v125
  %v251 = vpop.f32.mrb[0].mxu0
  %v252 = vadd.f32 0.0, %v251
  %v253 = vpop.f32.mrb[0].mxu0
  %v254 = vpop.f32.mrb[0].mxu0
  %v255 = vadd.f32 0.0, %v254
  %v256 = vpop.f32.mrb[0].mxu0
  %257 = vmatprep.mubr.bf16.mxu0 0
  %258 = vmatmul.mubr.bf16.gmra.mrb[0].mxu0 %v126
  %v259 = vpop.f32.mrb[0].mxu0
  %v260 = vadd.f32 0.0, %v259
  %v261 = vpop.f32.mrb[0].mxu0
  %v262 = vpop.f32.mrb[0].mxu0
  %v263 = vadd.f32 0.0, %v262
  %v264 = vpop.f32.mrb[0].mxu0
  %265 = vmatprep.mubr.bf16.mxu0 0
  %266 = vmatmul.mubr.bf16.gmra.mrb[0].mxu0 %v127
  %v267 = vpop.f32.mrb[0].mxu0
  %v268 = vadd.f32 0.0, %v267
  %v269 = vpop.f32.mrb[0].mxu0
  %v270 = vpop.f32.mrb[0].mxu0
  %v271 = vadd.f32 0.0, %v270
  %v272 = vpop.f32.mrb[0].mxu0
  %273 = vmatprep.mubr.bf16.mxu0 0
  %274 = vmatmul.mubr.bf16.gmra.mrb[0].mxu0 %v128
  %v275 = vpop.f32.mrb[0].mxu0
  %v276 = vadd.f32 0.0, %v275
  %v277 = vpop.f32.mrb[0].mxu0
  %v278 = vpop.f32.mrb[0].mxu0
  %v279 = vadd.f32 0.0, %v278
  %v280 = vpop.f32.mrb[0].mxu0
  %281 = vdwg.mxu0
  %v282 = vadd.f32 %v41, %v220
  %v283 = vadd.f32 %v42, %v223
  %v284 = vadd.f32 %v43, %v228
  %v285 = vadd.f32 %v44, %v231
  %v286 = vadd.f32 %v45, %v236
  %v287 = vadd.f32 %v46, %v239
  %v288 = vadd.f32 %v47, %v244
  %v289 = vadd.f32 %v48, %v247
  %v290 = vadd.f32 %v49, %v252
  %v291 = vadd.f32 %v50, %v255
  %v292 = vadd.f32 %v51, %v260
  %v293 = vadd.f32 %v52, %v263
  %v294 = vadd.f32 %v53, %v268
  %v295 = vadd.f32 %v54, %v271
  %v296 = vadd.f32 %v55, %v276
  %v297 = vadd.f32 %v56, %v279
  %298 = vst [vmem:[#allocation2] sm:$0xff] %v282
  %299 = vst [vmem:[#allocation2 + $0x8] sm:$0xff] %v283
  %300 = vst [vmem:[#allocation2 + $0x10] sm:$0xff] %v284
  %301 = vst [vmem:[#allocation2 + $0x18] sm:$0xff] %v285
  %302 = vst [vmem:[#allocation2 + $0x20] sm:$0xff] %v286
  %303 = vst [vmem:[#allocation2 + $0x28] sm:$0xff] %v287
  %304 = vst [vmem:[#allocation2 + $0x30] sm:$0xff] %v288
  %305 = vst [vmem:[#allocation2 + $0x38] sm:$0xff] %v289
  %306 = vst [vmem:[#allocation2 + $0x40] sm:$0xff] %v290
  %307 = vst [vmem:[#allocation2 + $0x48] sm:$0xff] %v291
  %308 = vst [vmem:[#allocation2 + $0x50] sm:$0xff] %v292
  %309 = vst [vmem:[#allocation2 + $0x58] sm:$0xff] %v293
  %310 = vst [vmem:[#allocation2 + $0x60] sm:$0xff] %v294
  %311 = vst [vmem:[#allocation2 + $0x68] sm:$0xff] %v295
  %312 = vst [vmem:[#allocation2 + $0x70] sm:$0xff] %v296
  %313 = vst [vmem:[#allocation2 + $0x78] sm:$0xff] %v297
  // Predicated region
  $region26: #{feature_imputer_forward.2} parent=0 // pred_check
    %p314 = pneg %p21
  $region27: #{feature_imputer_forward.2} parent=0 // pred_check_branch
    %316 = sbr.rel (%p314) target = $region29
  $region28: #{feature_imputer_forward.2} parent=0 // pred_region
    %v317 = vld [vmem:[%s2] sm:$0xff]
    %v318 = vld [vmem:[%s2 + $0x8] sm:$0xff]
    %v319 = vld [vmem:[%s2 + $0x10] sm:$0xff]
    %v320 = vld [vmem:[%s2 + $0x18] sm:$0xff]
    %v321 = vld [vmem:[%s2 + $0x20] sm:$0xff]
    %v322 = vld [vmem:[%s2 + $0x28] sm:$0xff]
    %v323 = vld [vmem:[%s2 + $0x30] sm:$0xff]
    %v324 = vld [vmem:[%s2 + $0x38] sm:$0xff]
    %v325 = vld [vmem:[%s2 + $0x40] sm:$0xff]
    %v326 = vld [vmem:[%s2 + $0x48] sm:$0xff]
    %v327 = vld [vmem:[%s2 + $0x50] sm:$0xff]
    %v328 = vld [vmem:[%s2 + $0x58] sm:$0xff]
    %v329 = vld [vmem:[%s2 + $0x60] sm:$0xff]
    %v330 = vld [vmem:[%s2 + $0x68] sm:$0xff]
    %v331 = vld [vmem:[%s2 + $0x70] sm:$0xff]
    %v332 = vld [vmem:[%s2 + $0x78] sm:$0xff]
    %v333 = vld [vmem:[#allocation2] sm:$0xff]
    %v334 = vld [vmem:[#allocation2 + $0x8] sm:$0xff]
    %v335 = vld [vmem:[#allocation2 + $0x10] sm:$0xff]
    %v336 = vld [vmem:[#allocation2 + $0x18] sm:$0xff]
    %v337 = vld [vmem:[#allocation2 + $0x20] sm:$0xff]
    %v338 = vld [vmem:[#allocation2 + $0x28] sm:$0xff]
    %v339 = vld [vmem:[#allocation2 + $0x30] sm:$0xff]
    %v340 = vld [vmem:[#allocation2 + $0x38] sm:$0xff]
    %v341 = vld [vmem:[#allocation2 + $0x40] sm:$0xff]
    %v342 = vld [vmem:[#allocation2 + $0x48] sm:$0xff]
    %v343 = vld [vmem:[#allocation2 + $0x50] sm:$0xff]
    %v344 = vld [vmem:[#allocation2 + $0x58] sm:$0xff]
    %v345 = vld [vmem:[#allocation2 + $0x60] sm:$0xff]
    %v346 = vld [vmem:[#allocation2 + $0x68] sm:$0xff]
    %v347 = vld [vmem:[#allocation2 + $0x70] sm:$0xff]
    %v348 = vld [vmem:[#allocation2 + $0x78] sm:$0xff]
    %350 = vset.pattern.permute.xlu0 0
    %351 = vperm.xlu0 %350, %v317
    %v352 = vpop.permute.xlu0 %351
    %355 = vset.pattern.permute.xlu0 0
    %356 = vperm.xlu0 %355, %v318
    %v357 = vpop.permute.xlu0 %356
    %360 = vset.pattern.permute.xlu0 0
    %361 = vperm.xlu0 %360, %v319
    %v362 = vpop.permute.xlu0 %361
    %365 = vset.pattern.permute.xlu0 0
    %366 = vperm.xlu0 %365, %v320
    %v367 = vpop.permute.xlu0 %366
    %370 = vset.pattern.permute.xlu0 0
    %371 = vperm.xlu0 %370, %v321
    %v372 = vpop.permute.xlu0 %371
    %375 = vset.pattern.permute.xlu0 0
    %376 = vperm.xlu0 %375, %v322
    %v377 = vpop.permute.xlu0 %376
    %380 = vset.pattern.permute.xlu0 0
    %381 = vperm.xlu0 %380, %v323
    %v382 = vpop.permute.xlu0 %381
    %385 = vset.pattern.permute.xlu0 0
    %386 = vperm.xlu0 %385, %v324
    %v387 = vpop.permute.xlu0 %386
    %390 = vset.pattern.permute.xlu0 0
    %391 = vperm.xlu0 %390, %v325
    %v392 = vpop.permute.xlu0 %391
    %395 = vset.pattern.permute.xlu0 0
    %396 = vperm.xlu0 %395, %v326
    %v397 = vpop.permute.xlu0 %396
    %400 = vset.pattern.permute.xlu0 0
    %401 = vperm.xlu0 %400, %v327
    %v402 = vpop.permute.xlu0 %401
    %405 = vset.pattern.permute.xlu0 0
    %406 = vperm.xlu0 %405, %v328
    %v407 = vpop.permute.xlu0 %406
    %410 = vset.pattern.permute.xlu0 0
    %411 = vperm.xlu0 %410, %v329
    %v412 = vpop.permute.xlu0 %411
    %415 = vset.pattern.permute.xlu0 0
    %416 = vperm.xlu0 %415, %v330
    %v417 = vpop.permute.xlu0 %416
    %420 = vset.pattern.permute.xlu0 0
    %421 = vperm.xlu0 %420, %v331
    %v422 = vpop.permute.xlu0 %421
    %425 = vset.pattern.permute.xlu0 0
    %426 = vperm.xlu0 %425, %v332
    %v427 = vpop.permute.xlu0 %426
    %v429 = vmul.f32 %v333, %v352
    %v430 = vmul.f32 %v334, %v357
    %v431 = vmul.f32 %v335, %v362
    %v432 = vmul.f32 %v336, %v367
    %v433 = vmul.f32 %v337, %v372
    %v434 = vmul.f32 %v338, %v377
    %v435 = vmul.f32 %v339, %v382
    %v436 = vmul.f32 %v340, %v387
    %v437 = vmul.f32 %v341, %v392
    %v438 = vmul.f32 %v342, %v397
    %v439 = vmul.f32 %v343, %v402
    %v440 = vmul.f32 %v344, %v407
    %v441 = vmul.f32 %v345, %v412
    %v442 = vmul.f32 %v346, %v417
    %v443 = vmul.f32 %v347, %v422
    %v444 = vmul.f32 %v348, %v427
    %v445 = vld [vmem:[%s3] sm:$0x1]
    %v447 = vlaneseq
    %v448 = vshrl.u32 %v447, 7
    %v449 = vsub.s32 0, %v448
    %v450 = vrot.slane %v445, %v449
    %v452 = vadd.f32 %v429, %v450
    %v453 = vadd.f32 %v430, %v450
    %v454 = vadd.f32 %v431, %v450
    %v455 = vadd.f32 %v432, %v450
    %v456 = vadd.f32 %v433, %v450
    %v457 = vadd.f32 %v434, %v450
    %v458 = vadd.f32 %v435, %v450
    %v459 = vadd.f32 %v436, %v450
    %v460 = vadd.f32 %v437, %v450
    %v461 = vadd.f32 %v438, %v450
    %v462 = vadd.f32 %v439, %v450
    %v463 = vadd.f32 %v440, %v450
    %v464 = vadd.f32 %v441, %v450
    %v465 = vadd.f32 %v442, %v450
    %v466 = vadd.f32 %v443, %v450
    %v467 = vadd.f32 %v444, %v450
    %v468 = vmax.f32 %v452, 0.0
    %v469 = vmax.f32 %v453, 0.0
    %v470 = vmax.f32 %v454, 0.0
    %v471 = vmax.f32 %v455, 0.0
    %v472 = vmax.f32 %v456, 0.0
    %v473 = vmax.f32 %v457, 0.0
    %v474 = vmax.f32 %v458, 0.0
    %v475 = vmax.f32 %v459, 0.0
    %v476 = vmax.f32 %v460, 0.0
    %v477 = vmax.f32 %v461, 0.0
    %v478 = vmax.f32 %v462, 0.0
    %v479 = vmax.f32 %v463, 0.0
    %v480 = vmax.f32 %v464, 0.0
    %v481 = vmax.f32 %v465, 0.0
    %v482 = vmax.f32 %v466, 0.0
    %v483 = vmax.f32 %v467, 0.0
    %v484 = vpack.c.bf16 %v469, %v468
    %v485 = vpack.c.bf16 %v471, %v470
    %v486 = vpack.c.bf16 %v473, %v472
    %v487 = vpack.c.bf16 %v475, %v474
    %v488 = vpack.c.bf16 %v477, %v476
    %v489 = vpack.c.bf16 %v479, %v478
    %v490 = vpack.c.bf16 %v481, %v480
    %v491 = vpack.c.bf16 %v483, %v482
    %v492 = vld [vmem:[%s4] sm:$0xf]
    %v493 = vld [vmem:[%s4 + $0x4] sm:$0xf]
    %v494 = vld [vmem:[%s4 + $0x8] sm:$0xf]
    %v495 = vld [vmem:[%s4 + $0xc] sm:$0xf]
    %v496 = vld [vmem:[%s4 + $0x10] sm:$0xf]
    %v497 = vld [vmem:[%s4 + $0x14] sm:$0xf]
    %v498 = vld [vmem:[%s4 + $0x18] sm:$0xf]
    %v499 = vld [vmem:[%s4 + $0x1c] sm:$0xf]
    %v500 = vld [vmem:[%s4 + $0x20] sm:$0xf]
    %v501 = vld [vmem:[%s4 + $0x24] sm:$0xf]
    %v502 = vld [vmem:[%s4 + $0x28] sm:$0xf]
    %v503 = vld [vmem:[%s4 + $0x2c] sm:$0xf]
    %v504 = vld [vmem:[%s4 + $0x30] sm:$0xf]
    %v505 = vld [vmem:[%s4 + $0x34] sm:$0xf]
    %v506 = vld [vmem:[%s4 + $0x38] sm:$0xf]
    %v507 = vld [vmem:[%s4 + $0x3c] sm:$0xf]
    %v524 = vunpack.c.l.b16 %v492
    %v525 = vunpack.c.l.b16 %v493
    %v526 = vunpack.c.l.b16 %v494
    %v527 = vunpack.c.l.b16 %v495
    %v528 = vunpack.c.l.b16 %v496
    %v529 = vunpack.c.l.b16 %v497
    %v530 = vunpack.c.l.b16 %v498
    %v531 = vunpack.c.l.b16 %v499
    %v532 = vunpack.c.l.b16 %v500
    %v533 = vunpack.c.l.b16 %v501
    %v534 = vunpack.c.l.b16 %v502
    %v535 = vunpack.c.l.b16 %v503
    %v536 = vunpack.c.l.b16 %v504
    %v537 = vunpack.c.l.b16 %v505
    %v538 = vunpack.c.l.b16 %v506
    %v539 = vunpack.c.l.b16 %v507
    %v540 = vpack.c.b16 %v525, %v524
    %v541 = vpack.c.b16 %v527, %v526
    %v542 = vpack.c.b16 %v529, %v528
    %v543 = vpack.c.b16 %v531, %v530
    %v544 = vpack.c.b16 %v533, %v532
    %v545 = vpack.c.b16 %v535, %v534
    %v546 = vpack.c.b16 %v537, %v536
    %v547 = vpack.c.b16 %v539, %v538
    %556 = vmatprep.subr.bf16.mxu0 0
    %557 = vmatpush1.bf16.msra.mxu0 %v540
    %558 = vmatprep.subr.bf16.mxu0 0
    %559 = vmatpush1.bf16.msra.mxu0 %v541
    %560 = vmatprep.subr.bf16.mxu0 0
    %561 = vmatpush1.bf16.msra.mxu0 %v542
    %562 = vmatprep.subr.bf16.mxu0 0
    %563 = vmatpush1.bf16.msra.mxu0 %v543
    %564 = vmatprep.subr.bf16.mxu0 0
    %565 = vmatpush1.bf16.msra.mxu0 %v544
    %566 = vmatprep.subr.bf16.mxu0 0
    %567 = vmatpush1.bf16.msra.mxu0 %v545
    %568 = vmatprep.subr.bf16.mxu0 0
    %569 = vmatpush1.bf16.msra.mxu0 %v546
    %570 = vmatprep.subr.bf16.mxu0 0
    %571 = vmatpush1.bf16.msra.mxu0 %v547
    %572 = vmatprep.subr.bf16.mxu0 0
    %573 = vmatpush1.bf16.msra.mxu0 0
    %574 = vmatprep.subr.bf16.mxu0 0
    %575 = vmatpush1.bf16.msra.mxu0 0
    %576 = vmatprep.subr.bf16.mxu0 0
    %577 = vmatpush1.bf16.msra.mxu0 0
    %578 = vmatprep.subr.bf16.mxu0 0
    %579 = vmatpush1.bf16.msra.mxu0 0
    %580 = vmatprep.subr.bf16.mxu0 0
    %581 = vmatpush1.bf16.msra.mxu0 0
    %582 = vmatprep.subr.bf16.mxu0 0
    %583 = vmatpush1.bf16.msra.mxu0 0
    %584 = vmatprep.subr.bf16.mxu0 0
    %585 = vmatpush1.bf16.msra.mxu0 0
    %586 = vmatprep.subr.bf16.mxu0 0
    %587 = vmatpush1.bf16.msra.mxu0 0
    %588 = vmatprep.mubr.bf16.mxu0 0
    %589 = vmatmul.mubr.bf16.gmra.mrb[0].mxu0 %v484
    %v590 = vpop.f32.mrb[0].mxu0
    %v591 = vadd.f32 0.0, %v590
    %v592 = vpop.f32.mrb[0].mxu0
    %v593 = vpop.f32.mrb[0].mxu0
    %v594 = vadd.f32 0.0, %v593
    %v595 = vpop.f32.mrb[0].mxu0
    %596 = vmatprep.mubr.bf16.mxu0 0
    %597 = vmatmul.mubr.bf16.gmra.mrb[0].mxu0 %v485
    %v598 = vpop.f32.mrb[0].mxu0
    %v599 = vadd.f32 0.0, %v598
    %v600 = vpop.f32.mrb[0].mxu0
    %v601 = vpop.f32.mrb[0].mxu0
    %v602 = vadd.f32 0.0, %v601
    %v603 = vpop.f32.mrb[0].mxu0
    %604 = vmatprep.mubr.bf16.mxu0 0
    %605 = vmatmul.mubr.bf16.gmra.mrb[0].mxu0 %v486
    %v606 = vpop.f32.mrb[0].mxu0
    %v607 = vadd.f32 0.0, %v606
    %v608 = vpop.f32.mrb[0].mxu0
    %v609 = vpop.f32.mrb[0].mxu0
    %v610 = vadd.f32 0.0, %v609
    %v611 = vpop.f32.mrb[0].mxu0
    %612 = vmatprep.mubr.bf16.mxu0 0
    %613 = vmatmul.mubr.bf16.gmra.mrb[0].mxu0 %v487
    %v614 = vpop.f32.mrb[0].mxu0
    %v615 = vadd.f32 0.0, %v614
    %v616 = vpop.f32.mrb[0].mxu0
    %v617 = vpop.f32.mrb[0].mxu0
    %v618 = vadd.f32 0.0, %v617
    %v619 = vpop.f32.mrb[0].mxu0
    %620 = vmatprep.mubr.bf16.mxu0 0
    %621 = vmatmul.mubr.bf16.gmra.mrb[0].mxu0 %v488
    %v622 = vpop.f32.mrb[0].mxu0
    %v623 = vadd.f32 0.0, %v622
    %v624 = vpop.f32.mrb[0].mxu0
    %v625 = vpop.f32.mrb[0].mxu0
    %v626 = vadd.f32 0.0, %v625
    %v627 = vpop.f32.mrb[0].mxu0
    %628 = vmatprep.mubr.bf16.mxu0 0
    %629 = vmatmul.mubr.bf16.gmra.mrb[0].mxu0 %v489
    %v630 = vpop.f32.mrb[0].mxu0
    %v631 = vadd.f32 0.0, %v630
    %v632 = vpop.f32.mrb[0].mxu0
    %v633 = vpop.f32.mrb[0].mxu0
    %v634 = vadd.f32 0.0, %v633
    %v635 = vpop.f32.mrb[0].mxu0
    %636 = vmatprep.mubr.bf16.mxu0 0
    %637 = vmatmul.mubr.bf16.gmra.mrb[0].mxu0 %v490
    %v638 = vpop.f32.mrb[0].mxu0
    %v639 = vadd.f32 0.0, %v638
    %v640 = vpop.f32.mrb[0].mxu0
    %v641 = vpop.f32.mrb[0].mxu0
    %v642 = vadd.f32 0.0, %v641
    %v643 = vpop.f32.mrb[0].mxu0
    %644 = vmatprep.mubr.bf16.mxu0 0
    %645 = vmatmul.mubr.bf16.gmra.mrb[0].mxu0 %v491
    %v646 = vpop.f32.mrb[0].mxu0
    %v647 = vadd.f32 0.0, %v646
    %v648 = vpop.f32.mrb[0].mxu0
    %v649 = vpop.f32.mrb[0].mxu0
    %v650 = vadd.f32 0.0, %v649
    %v651 = vpop.f32.mrb[0].mxu0
    %652 = vdwg.mxu0
    %v653 = vmul.f32 %v591, %v352
    %v654 = vmul.f32 %v594, %v357
    %v655 = vmul.f32 %v599, %v362
    %v656 = vmul.f32 %v602, %v367
    %v657 = vmul.f32 %v607, %v372
    %v658 = vmul.f32 %v610, %v377
    %v659 = vmul.f32 %v615, %v382
    %v660 = vmul.f32 %v618, %v387
    %v661 = vmul.f32 %v623, %v392
    %v662 = vmul.f32 %v626, %v397
    %v663 = vmul.f32 %v631, %v402
    %v664 = vmul.f32 %v634, %v407
    %v665 = vmul.f32 %v639, %v412
    %v666 = vmul.f32 %v642, %v417
    %v667 = vmul.f32 %v647, %v422
    %v668 = vmul.f32 %v650, %v427
    %v669 = vpack.c.bf16 %v654, %v653
    %v670 = vpack.c.bf16 %v656, %v655
    %v671 = vpack.c.bf16 %v658, %v657
    %v672 = vpack.c.bf16 %v660, %v659
    %v673 = vpack.c.bf16 %v662, %v661
    %v674 = vpack.c.bf16 %v664, %v663
    %v675 = vpack.c.bf16 %v666, %v665
    %v676 = vpack.c.bf16 %v668, %v667
    %v685 = vunpack.c.l.b16 %v669
    %v686 = vunpack.c.h.b16 %v669
    %v687 = vunpack.c.l.b16 %v670
    %v688 = vunpack.c.h.b16 %v670
    %v689 = vunpack.c.l.b16 %v671
    %v690 = vunpack.c.h.b16 %v671
    %v691 = vunpack.c.l.b16 %v672
    %v692 = vunpack.c.h.b16 %v672
    %v693 = vunpack.c.l.b16 %v673
    %v694 = vunpack.c.h.b16 %v673
    %v695 = vunpack.c.l.b16 %v674
    %v696 = vunpack.c.h.b16 %v674
    %v697 = vunpack.c.l.b16 %v675
    %v698 = vunpack.c.h.b16 %v675
    %v699 = vunpack.c.l.b16 %v676
    %v700 = vunpack.c.h.b16 %v676
    %v701 = vpack.c.b16 %v685, %v685
    %v702 = vpack.c.b16 %v686, %v686
    %v703 = vpack.c.b16 %v687, %v687
    %v704 = vpack.c.b16 %v688, %v688
    %v705 = vpack.c.b16 %v689, %v689
    %v706 = vpack.c.b16 %v690, %v690
    %v707 = vpack.c.b16 %v691, %v691
    %v708 = vpack.c.b16 %v692, %v692
    %v709 = vpack.c.b16 %v693, %v693
    %v710 = vpack.c.b16 %v694, %v694
    %v711 = vpack.c.b16 %v695, %v695
    %v712 = vpack.c.b16 %v696, %v696
    %v713 = vpack.c.b16 %v697, %v697
    %v714 = vpack.c.b16 %v698, %v698
    %v715 = vpack.c.b16 %v699, %v699
    %v716 = vpack.c.b16 %v700, %v700
    %733 = vst [vmem:[%s5] sm:$0xf] %v701
    %734 = vst [vmem:[%s5 + $0x4] sm:$0xf] %v702
    %735 = vst [vmem:[%s5 + $0x8] sm:$0xf] %v703
    %736 = vst [vmem:[%s5 + $0xc] sm:$0xf] %v704
    %737 = vst [vmem:[%s5 + $0x10] sm:$0xf] %v705
    %738 = vst [vmem:[%s5 + $0x14] sm:$0xf] %v706
    %739 = vst [vmem:[%s5 + $0x18] sm:$0xf] %v707
    %740 = vst [vmem:[%s5 + $0x1c] sm:$0xf] %v708
    %741 = vst [vmem:[%s5 + $0x20] sm:$0xf] %v709
    %742 = vst [vmem:[%s5 + $0x24] sm:$0xf] %v710
    %743 = vst [vmem:[%s5 + $0x28] sm:$0xf] %v711
    %744 = vst [vmem:[%s5 + $0x2c] sm:$0xf] %v712
    %745 = vst [vmem:[%s5 + $0x30] sm:$0xf] %v713
    %746 = vst [vmem:[%s5 + $0x34] sm:$0xf] %v714
    %747 = vst [vmem:[%s5 + $0x38] sm:$0xf] %v715
    %748 = vst [vmem:[%s5 + $0x3c] sm:$0xf] %v716
  $region29: #{feature_imputer_forward.2} parent=0 // pred_fallthru
    _
  // Predicated region
  $region30: #{feature_imputer_forward.2} parent=0 // pred_check
    _
  $region31: #{feature_imputer_forward.2} parent=0 // pred_check_branch
    %750 = sbr.rel (0) target = $region33
  $region32: #{feature_imputer_forward.2} parent=0 // pred_region
    _
  $region33: #{feature_imputer_forward.2} parent=0 // pred_fallthru
    _
  // Predicated region
  $region34: #{feature_imputer_forward.2} parent=0 // pred_check
    _
  $region35: #{feature_imputer_forward.2} parent=0 // pred_check_branch
    %752 = sbr.rel (0) target = $region37
  $region36: #{feature_imputer_forward.2} parent=0 // pred_region
    _
  $region37: #{feature_imputer_forward.2} parent=0 // pred_fallthru
    _

// kernel: feature_imputer_forward.3
$region0: #{feature_imputer_forward.3}
  #allocation0 [shape = 'u32[]', space=smem, size = 0x4, offset = 0x4, fixed_abs, tag = 'smem constant byte address 0x4 - core index']
  #allocation1 [shape = 'u32[144,128]{1,0:T(1,128)}', space=vmem, size = 0x12000, scoped, tag = 'internal scratch']
  #allocation2 [shape = 'f32[128,128]{1,0:T(8,128)}', space=vmem, size = 0x10000, scoped, tag = 'scratch operand']
  %s0 = inlined_call_operand.vmem [shape: bf16[128,128], index: 0, kind: input, shape index: {}]
  %s1 = inlined_call_operand.vmem [shape: bf16[128,128], index: 1, kind: input, shape index: {}]
  %s2 = inlined_call_operand.vmem [shape: f32[128,1], index: 2, kind: input, shape index: {}]
  %s3 = inlined_call_operand.vmem [shape: f32[1,128], index: 3, kind: input, shape index: {}]
  %s4 = inlined_call_operand.vmem [shape: bf16[128,128], index: 4, kind: input, shape index: {}]
  %s5 = inlined_call_operand.vmem [shape: f32[1,128], index: 5, kind: input, shape index: {}]
  %s6 = inlined_call_operand.vmem [shape: f32[128,128], index: 6, kind: output, shape index: {}]
  %s7 = sld [smem:[#allocation0]]
  $region42: #{feature_imputer_forward.3} parent=0
    _
  %s9 = ssub.s32 1, %s7
  %s10 = scalar_select 0, %s9, %s7
  // Predicated region
  $region2: #{feature_imputer_forward.3} parent=0 // pred_check
    _
  $region3: #{feature_imputer_forward.3} parent=0 // pred_check_branch
    %12 = sbr.rel (0) target = $region5
  $region4: #{feature_imputer_forward.3} parent=0 // pred_region
    _
  $region5: #{feature_imputer_forward.3} parent=0 // pred_fallthru
    _
  // Predicated region
  $region6: #{feature_imputer_forward.3} parent=0 // pred_check
    _
  $region7: #{feature_imputer_forward.3} parent=0 // pred_check_branch
    %14 = sbr.rel (0) target = $region9
  $region8: #{feature_imputer_forward.3} parent=0 // pred_region
    _
  $region9: #{feature_imputer_forward.3} parent=0 // pred_fallthru
    _
  // Predicated region
  $region10: #{feature_imputer_forward.3} parent=0 // pred_check
    _
  $region11: #{feature_imputer_forward.3} parent=0 // pred_check_branch
    %16 = sbr.rel (0) target = $region13
  $region12: #{feature_imputer_forward.3} parent=0 // pred_region
    _
  $region13: #{feature_imputer_forward.3} parent=0 // pred_fallthru
    _
  // Predicated region
  $region14: #{feature_imputer_forward.3} parent=0 // pred_check
    _
  $region15: #{feature_imputer_forward.3} parent=0 // pred_check_branch
    %18 = sbr.rel (0) target = $region17
  $region16: #{feature_imputer_forward.3} parent=0 // pred_region
    _
  $region17: #{feature_imputer_forward.3} parent=0 // pred_fallthru
    _
  // Predicated region
  $region18: #{feature_imputer_forward.3} parent=0 // pred_check
    _
  $region19: #{feature_imputer_forward.3} parent=0 // pred_check_branch
    %20 = sbr.rel (0) target = $region21
  $region20: #{feature_imputer_forward.3} parent=0 // pred_region
    _
  $region21: #{feature_imputer_forward.3} parent=0 // pred_fallthru
    _
  // Predicated region
  $region22: #{feature_imputer_forward.3} parent=0 // pred_check
    _
  $region23: #{feature_imputer_forward.3} parent=0 // pred_check_branch
    %22 = sbr.rel (0) target = $region25
  $region24: #{feature_imputer_forward.3} parent=0 // pred_region
    _
  $region25: #{feature_imputer_forward.3} parent=0 // pred_fallthru
    _
  %p24 = scmp.eq.s32.totalorder 0, 0
  // Predicated region
  $region26: #{feature_imputer_forward.3} parent=0 // pred_check
    %p25 = pneg %p24
  $region27: #{feature_imputer_forward.3} parent=0 // pred_check_branch
    %27 = sbr.rel (%p25) target = $region29
  $region28: #{feature_imputer_forward.3} parent=0 // pred_region
    %28 = vst [vmem:[#allocation2] sm:$0xff] 0.0
    %29 = vst [vmem:[#allocation2 + $0x8] sm:$0xff] 0.0
    %30 = vst [vmem:[#allocation2 + $0x10] sm:$0xff] 0.0
    %31 = vst [vmem:[#allocation2 + $0x18] sm:$0xff] 0.0
    %32 = vst [vmem:[#allocation2 + $0x20] sm:$0xff] 0.0
    %33 = vst [vmem:[#allocation2 + $0x28] sm:$0xff] 0.0
    %34 = vst [vmem:[#allocation2 + $0x30] sm:$0xff] 0.0
    %35 = vst [vmem:[#allocation2 + $0x38] sm:$0xff] 0.0
    %36 = vst [vmem:[#allocation2 + $0x40] sm:$0xff] 0.0
    %37 = vst [vmem:[#allocation2 + $0x48] sm:$0xff] 0.0
    %38 = vst [vmem:[#allocation2 + $0x50] sm:$0xff] 0.0
    %39 = vst [vmem:[#allocation2 + $0x58] sm:$0xff] 0.0
    %40 = vst [vmem:[#allocation2 + $0x60] sm:$0xff] 0.0
    %41 = vst [vmem:[#allocation2 + $0x68] sm:$0xff] 0.0
    %42 = vst [vmem:[#allocation2 + $0x70] sm:$0xff] 0.0
    %43 = vst [vmem:[#allocation2 + $0x78] sm:$0xff] 0.0
  $region29: #{feature_imputer_forward.3} parent=0 // pred_fallthru
    _
  %v44 = vld [vmem:[#allocation2] sm:$0xff]
  %v45 = vld [vmem:[#allocation2 + $0x8] sm:$0xff]
  %v46 = vld [vmem:[#allocation2 + $0x10] sm:$0xff]
  %v47 = vld [vmem:[#allocation2 + $0x18] sm:$0xff]
  %v48 = vld [vmem:[#allocation2 + $0x20] sm:$0xff]
  %v49 = vld [vmem:[#allocation2 + $0x28] sm:$0xff]
  %v50 = vld [vmem:[#allocation2 + $0x30] sm:$0xff]
  %v51 = vld [vmem:[#allocation2 + $0x38] sm:$0xff]
  %v52 = vld [vmem:[#allocation2 + $0x40] sm:$0xff]
  %v53 = vld [vmem:[#allocation2 + $0x48] sm:$0xff]
  %v54 = vld [vmem:[#allocation2 + $0x50] sm:$0xff]
  %v55 = vld [vmem:[#allocation2 + $0x58] sm:$0xff]
  %v56 = vld [vmem:[#allocation2 + $0x60] sm:$0xff]
  %v57 = vld [vmem:[#allocation2 + $0x68] sm:$0xff]
  %v58 = vld [vmem:[#allocation2 + $0x70] sm:$0xff]
  %v59 = vld [vmem:[#allocation2 + $0x78] sm:$0xff]
  %v60 = vld [vmem:[%s0] sm:$0xf]
  %v61 = vld [vmem:[%s0 + $0x4] sm:$0xf]
  %v62 = vld [vmem:[%s0 + $0x8] sm:$0xf]
  %v63 = vld [vmem:[%s0 + $0xc] sm:$0xf]
  %v64 = vld [vmem:[%s0 + $0x10] sm:$0xf]
  %v65 = vld [vmem:[%s0 + $0x14] sm:$0xf]
  %v66 = vld [vmem:[%s0 + $0x18] sm:$0xf]
  %v67 = vld [vmem:[%s0 + $0x1c] sm:$0xf]
  %v68 = vld [vmem:[%s0 + $0x20] sm:$0xf]
  %v69 = vld [vmem:[%s0 + $0x24] sm:$0xf]
  %v70 = vld [vmem:[%s0 + $0x28] sm:$0xf]
  %v71 = vld [vmem:[%s0 + $0x2c] sm:$0xf]
  %v72 = vld [vmem:[%s0 + $0x30] sm:$0xf]
  %v73 = vld [vmem:[%s0 + $0x34] sm:$0xf]
  %v74 = vld [vmem:[%s0 + $0x38] sm:$0xf]
  %v75 = vld [vmem:[%s0 + $0x3c] sm:$0xf]
  %v76 = vld [vmem:[%s1] sm:$0xf]
  %v77 = vld [vmem:[%s1 + $0x4] sm:$0xf]
  %v78 = vld [vmem:[%s1 + $0x8] sm:$0xf]
  %v79 = vld [vmem:[%s1 + $0xc] sm:$0xf]
  %v80 = vld [vmem:[%s1 + $0x10] sm:$0xf]
  %v81 = vld [vmem:[%s1 + $0x14] sm:$0xf]
  %v82 = vld [vmem:[%s1 + $0x18] sm:$0xf]
  %v83 = vld [vmem:[%s1 + $0x1c] sm:$0xf]
  %v84 = vld [vmem:[%s1 + $0x20] sm:$0xf]
  %v85 = vld [vmem:[%s1 + $0x24] sm:$0xf]
  %v86 = vld [vmem:[%s1 + $0x28] sm:$0xf]
  %v87 = vld [vmem:[%s1 + $0x2c] sm:$0xf]
  %v88 = vld [vmem:[%s1 + $0x30] sm:$0xf]
  %v89 = vld [vmem:[%s1 + $0x34] sm:$0xf]
  %v90 = vld [vmem:[%s1 + $0x38] sm:$0xf]
  %v91 = vld [vmem:[%s1 + $0x3c] sm:$0xf]
  %v108 = vunpack.c.l.b16 %v60
  %v109 = vunpack.c.l.b16 %v61
  %v110 = vunpack.c.l.b16 %v62
  %v111 = vunpack.c.l.b16 %v63
  %v112 = vunpack.c.l.b16 %v64
  %v113 = vunpack.c.l.b16 %v65
  %v114 = vunpack.c.l.b16 %v66
  %v115 = vunpack.c.l.b16 %v67
  %v116 = vunpack.c.l.b16 %v68
  %v117 = vunpack.c.l.b16 %v69
  %v118 = vunpack.c.l.b16 %v70
  %v119 = vunpack.c.l.b16 %v71
  %v120 = vunpack.c.l.b16 %v72
  %v121 = vunpack.c.l.b16 %v73
  %v122 = vunpack.c.l.b16 %v74
  %v123 = vunpack.c.l.b16 %v75
  %v124 = vpack.c.b16 %v109, %v108
  %v125 = vpack.c.b16 %v111, %v110
  %v126 = vpack.c.b16 %v113, %v112
  %v127 = vpack.c.b16 %v115, %v114
  %v128 = vpack.c.b16 %v117, %v116
  %v129 = vpack.c.b16 %v119, %v118
  %v130 = vpack.c.b16 %v121, %v120
  %v131 = vpack.c.b16 %v123, %v122
  %v156 = vunpack.c.l.b16 %v76
  %v157 = vunpack.c.l.b16 %v77
  %v158 = vunpack.c.l.b16 %v78
  %v159 = vunpack.c.l.b16 %v79
  %v160 = vunpack.c.l.b16 %v80
  %v161 = vunpack.c.l.b16 %v81
  %v162 = vunpack.c.l.b16 %v82
  %v163 = vunpack.c.l.b16 %v83
  %v164 = vunpack.c.l.b16 %v84
  %v165 = vunpack.c.l.b16 %v85
  %v166 = vunpack.c.l.b16 %v86
  %v167 = vunpack.c.l.b16 %v87
  %v168 = vunpack.c.l.b16 %v88
  %v169 = vunpack.c.l.b16 %v89
  %v170 = vunpack.c.l.b16 %v90
  %v171 = vunpack.c.l.b16 %v91
  %v172 = vpack.c.b16 %v157, %v156
  %v173 = vpack.c.b16 %v159, %v158
  %v174 = vpack.c.b16 %v161, %v160
  %v175 = vpack.c.b16 %v163, %v162
  %v176 = vpack.c.b16 %v165, %v164
  %v177 = vpack.c.b16 %v167, %v166
  %v178 = vpack.c.b16 %v169, %v168
  %v179 = vpack.c.b16 %v171, %v170
  %188 = vmatprep.subr.bf16.mxu0 0
  %189 = vmatpush1.bf16.msra.mxu0 %v172
  %190 = vmatprep.subr.bf16.mxu0 0
  %191 = vmatpush1.bf16.msra.mxu0 %v173
  %192 = vmatprep.subr.bf16.mxu0 0
  %193 = vmatpush1.bf16.msra.mxu0 %v174
  %194 = vmatprep.subr.bf16.mxu0 0
  %195 = vmatpush1.bf16.msra.mxu0 %v175
  %196 = vmatprep.subr.bf16.mxu0 0
  %197 = vmatpush1.bf16.msra.mxu0 %v176
  %198 = vmatprep.subr.bf16.mxu0 0
  %199 = vmatpush1.bf16.msra.mxu0 %v177
  %200 = vmatprep.subr.bf16.mxu0 0
  %201 = vmatpush1.bf16.msra.mxu0 %v178
  %202 = vmatprep.subr.bf16.mxu0 0
  %203 = vmatpush1.bf16.msra.mxu0 %v179
  %204 = vmatprep.subr.bf16.mxu0 0
  %205 = vmatpush1.bf16.msra.mxu0 0
  %206 = vmatprep.subr.bf16.mxu0 0
  %207 = vmatpush1.bf16.msra.mxu0 0
  %208 = vmatprep.subr.bf16.mxu0 0
  %209 = vmatpush1.bf16.msra.mxu0 0
  %210 = vmatprep.subr.bf16.mxu0 0
  %211 = vmatpush1.bf16.msra.mxu0 0
  %212 = vmatprep.subr.bf16.mxu0 0
  %213 = vmatpush1.bf16.msra.mxu0 0
  %214 = vmatprep.subr.bf16.mxu0 0
  %215 = vmatpush1.bf16.msra.mxu0 0
  %216 = vmatprep.subr.bf16.mxu0 0
  %217 = vmatpush1.bf16.msra.mxu0 0
  %218 = vmatprep.subr.bf16.mxu0 0
  %219 = vmatpush1.bf16.msra.mxu0 0
  %220 = vmatprep.mubr.bf16.mxu0 0
  %221 = vmatmul.mubr.bf16.gmra.mrb[0].mxu0 %v124
  %v222 = vpop.f32.mrb[0].mxu0
  %v223 = vadd.f32 0.0, %v222
  %v224 = vpop.f32.mrb[0].mxu0
  %v225 = vpop.f32.mrb[0].mxu0
  %v226 = vadd.f32 0.0, %v225
  %v227 = vpop.f32.mrb[0].mxu0
  %228 = vmatprep.mubr.bf16.mxu0 0
  %229 = vmatmul.mubr.bf16.gmra.mrb[0].mxu0 %v125
  %v230 = vpop.f32.mrb[0].mxu0
  %v231 = vadd.f32 0.0, %v230
  %v232 = vpop.f32.mrb[0].mxu0
  %v233 = vpop.f32.mrb[0].mxu0
  %v234 = vadd.f32 0.0, %v233
  %v235 = vpop.f32.mrb[0].mxu0
  %236 = vmatprep.mubr.bf16.mxu0 0
  %237 = vmatmul.mubr.bf16.gmra.mrb[0].mxu0 %v126
  %v238 = vpop.f32.mrb[0].mxu0
  %v239 = vadd.f32 0.0, %v238
  %v240 = vpop.f32.mrb[0].mxu0
  %v241 = vpop.f32.mrb[0].mxu0
  %v242 = vadd.f32 0.0, %v241
  %v243 = vpop.f32.mrb[0].mxu0
  %244 = vmatprep.mubr.bf16.mxu0 0
  %245 = vmatmul.mubr.bf16.gmra.mrb[0].mxu0 %v127
  %v246 = vpop.f32.mrb[0].mxu0
  %v247 = vadd.f32 0.0, %v246
  %v248 = vpop.f32.mrb[0].mxu0
  %v249 = vpop.f32.mrb[0].mxu0
  %v250 = vadd.f32 0.0, %v249
  %v251 = vpop.f32.mrb[0].mxu0
  %252 = vmatprep.mubr.bf16.mxu0 0
  %253 = vmatmul.mubr.bf16.gmra.mrb[0].mxu0 %v128
  %v254 = vpop.f32.mrb[0].mxu0
  %v255 = vadd.f32 0.0, %v254
  %v256 = vpop.f32.mrb[0].mxu0
  %v257 = vpop.f32.mrb[0].mxu0
  %v258 = vadd.f32 0.0, %v257
  %v259 = vpop.f32.mrb[0].mxu0
  %260 = vmatprep.mubr.bf16.mxu0 0
  %261 = vmatmul.mubr.bf16.gmra.mrb[0].mxu0 %v129
  %v262 = vpop.f32.mrb[0].mxu0
  %v263 = vadd.f32 0.0, %v262
  %v264 = vpop.f32.mrb[0].mxu0
  %v265 = vpop.f32.mrb[0].mxu0
  %v266 = vadd.f32 0.0, %v265
  %v267 = vpop.f32.mrb[0].mxu0
  %268 = vmatprep.mubr.bf16.mxu0 0
  %269 = vmatmul.mubr.bf16.gmra.mrb[0].mxu0 %v130
  %v270 = vpop.f32.mrb[0].mxu0
  %v271 = vadd.f32 0.0, %v270
  %v272 = vpop.f32.mrb[0].mxu0
  %v273 = vpop.f32.mrb[0].mxu0
  %v274 = vadd.f32 0.0, %v273
  %v275 = vpop.f32.mrb[0].mxu0
  %276 = vmatprep.mubr.bf16.mxu0 0
  %277 = vmatmul.mubr.bf16.gmra.mrb[0].mxu0 %v131
  %v278 = vpop.f32.mrb[0].mxu0
  %v279 = vadd.f32 0.0, %v278
  %v280 = vpop.f32.mrb[0].mxu0
  %v281 = vpop.f32.mrb[0].mxu0
  %v282 = vadd.f32 0.0, %v281
  %v283 = vpop.f32.mrb[0].mxu0
  %284 = vdwg.mxu0
  %v285 = vadd.f32 %v44, %v223
  %v286 = vadd.f32 %v45, %v226
  %v287 = vadd.f32 %v46, %v231
  %v288 = vadd.f32 %v47, %v234
  %v289 = vadd.f32 %v48, %v239
  %v290 = vadd.f32 %v49, %v242
  %v291 = vadd.f32 %v50, %v247
  %v292 = vadd.f32 %v51, %v250
  %v293 = vadd.f32 %v52, %v255
  %v294 = vadd.f32 %v53, %v258
  %v295 = vadd.f32 %v54, %v263
  %v296 = vadd.f32 %v55, %v266
  %v297 = vadd.f32 %v56, %v271
  %v298 = vadd.f32 %v57, %v274
  %v299 = vadd.f32 %v58, %v279
  %v300 = vadd.f32 %v59, %v282
  %301 = vst [vmem:[#allocation2] sm:$0xff] %v285
  %302 = vst [vmem:[#allocation2 + $0x8] sm:$0xff] %v286
  %303 = vst [vmem:[#allocation2 + $0x10] sm:$0xff] %v287
  %304 = vst [vmem:[#allocation2 + $0x18] sm:$0xff] %v288
  %305 = vst [vmem:[#allocation2 + $0x20] sm:$0xff] %v289
  %306 = vst [vmem:[#allocation2 + $0x28] sm:$0xff] %v290
  %307 = vst [vmem:[#allocation2 + $0x30] sm:$0xff] %v291
  %308 = vst [vmem:[#allocation2 + $0x38] sm:$0xff] %v292
  %309 = vst [vmem:[#allocation2 + $0x40] sm:$0xff] %v293
  %310 = vst [vmem:[#allocation2 + $0x48] sm:$0xff] %v294
  %311 = vst [vmem:[#allocation2 + $0x50] sm:$0xff] %v295
  %312 = vst [vmem:[#allocation2 + $0x58] sm:$0xff] %v296
  %313 = vst [vmem:[#allocation2 + $0x60] sm:$0xff] %v297
  %314 = vst [vmem:[#allocation2 + $0x68] sm:$0xff] %v298
  %315 = vst [vmem:[#allocation2 + $0x70] sm:$0xff] %v299
  %316 = vst [vmem:[#allocation2 + $0x78] sm:$0xff] %v300
  // Predicated region
  $region30: #{feature_imputer_forward.3} parent=0 // pred_check
    %p317 = pneg %p24
  $region31: #{feature_imputer_forward.3} parent=0 // pred_check_branch
    %319 = sbr.rel (%p317) target = $region33
  $region32: #{feature_imputer_forward.3} parent=0 // pred_region
    %v320 = vld [vmem:[#allocation2] sm:$0xff]
    %v321 = vld [vmem:[#allocation2 + $0x8] sm:$0xff]
    %v322 = vld [vmem:[#allocation2 + $0x10] sm:$0xff]
    %v323 = vld [vmem:[#allocation2 + $0x18] sm:$0xff]
    %v324 = vld [vmem:[#allocation2 + $0x20] sm:$0xff]
    %v325 = vld [vmem:[#allocation2 + $0x28] sm:$0xff]
    %v326 = vld [vmem:[#allocation2 + $0x30] sm:$0xff]
    %v327 = vld [vmem:[#allocation2 + $0x38] sm:$0xff]
    %v328 = vld [vmem:[#allocation2 + $0x40] sm:$0xff]
    %v329 = vld [vmem:[#allocation2 + $0x48] sm:$0xff]
    %v330 = vld [vmem:[#allocation2 + $0x50] sm:$0xff]
    %v331 = vld [vmem:[#allocation2 + $0x58] sm:$0xff]
    %v332 = vld [vmem:[#allocation2 + $0x60] sm:$0xff]
    %v333 = vld [vmem:[#allocation2 + $0x68] sm:$0xff]
    %v334 = vld [vmem:[#allocation2 + $0x70] sm:$0xff]
    %v335 = vld [vmem:[#allocation2 + $0x78] sm:$0xff]
    %v336 = vld [vmem:[%s2] sm:$0xff]
    %v337 = vld [vmem:[%s2 + $0x8] sm:$0xff]
    %v338 = vld [vmem:[%s2 + $0x10] sm:$0xff]
    %v339 = vld [vmem:[%s2 + $0x18] sm:$0xff]
    %v340 = vld [vmem:[%s2 + $0x20] sm:$0xff]
    %v341 = vld [vmem:[%s2 + $0x28] sm:$0xff]
    %v342 = vld [vmem:[%s2 + $0x30] sm:$0xff]
    %v343 = vld [vmem:[%s2 + $0x38] sm:$0xff]
    %v344 = vld [vmem:[%s2 + $0x40] sm:$0xff]
    %v345 = vld [vmem:[%s2 + $0x48] sm:$0xff]
    %v346 = vld [vmem:[%s2 + $0x50] sm:$0xff]
    %v347 = vld [vmem:[%s2 + $0x58] sm:$0xff]
    %v348 = vld [vmem:[%s2 + $0x60] sm:$0xff]
    %v349 = vld [vmem:[%s2 + $0x68] sm:$0xff]
    %v350 = vld [vmem:[%s2 + $0x70] sm:$0xff]
    %v351 = vld [vmem:[%s2 + $0x78] sm:$0xff]
    %353 = vset.pattern.permute.xlu0 0
    %354 = vperm.xlu0 %353, %v336
    %v355 = vpop.permute.xlu0 %354
    %358 = vset.pattern.permute.xlu0 0
    %359 = vperm.xlu0 %358, %v337
    %v360 = vpop.permute.xlu0 %359
    %363 = vset.pattern.permute.xlu0 0
    %364 = vperm.xlu0 %363, %v338
    %v365 = vpop.permute.xlu0 %364
    %368 = vset.pattern.permute.xlu0 0
    %369 = vperm.xlu0 %368, %v339
    %v370 = vpop.permute.xlu0 %369
    %373 = vset.pattern.permute.xlu0 0
    %374 = vperm.xlu0 %373, %v340
    %v375 = vpop.permute.xlu0 %374
    %378 = vset.pattern.permute.xlu0 0
    %379 = vperm.xlu0 %378, %v341
    %v380 = vpop.permute.xlu0 %379
    %383 = vset.pattern.permute.xlu0 0
    %384 = vperm.xlu0 %383, %v342
    %v385 = vpop.permute.xlu0 %384
    %388 = vset.pattern.permute.xlu0 0
    %389 = vperm.xlu0 %388, %v343
    %v390 = vpop.permute.xlu0 %389
    %393 = vset.pattern.permute.xlu0 0
    %394 = vperm.xlu0 %393, %v344
    %v395 = vpop.permute.xlu0 %394
    %398 = vset.pattern.permute.xlu0 0
    %399 = vperm.xlu0 %398, %v345
    %v400 = vpop.permute.xlu0 %399
    %403 = vset.pattern.permute.xlu0 0
    %404 = vperm.xlu0 %403, %v346
    %v405 = vpop.permute.xlu0 %404
    %408 = vset.pattern.permute.xlu0 0
    %409 = vperm.xlu0 %408, %v347
    %v410 = vpop.permute.xlu0 %409
    %413 = vset.pattern.permute.xlu0 0
    %414 = vperm.xlu0 %413, %v348
    %v415 = vpop.permute.xlu0 %414
    %418 = vset.pattern.permute.xlu0 0
    %419 = vperm.xlu0 %418, %v349
    %v420 = vpop.permute.xlu0 %419
    %423 = vset.pattern.permute.xlu0 0
    %424 = vperm.xlu0 %423, %v350
    %v425 = vpop.permute.xlu0 %424
    %428 = vset.pattern.permute.xlu0 0
    %429 = vperm.xlu0 %428, %v351
    %v430 = vpop.permute.xlu0 %429
    %v432 = vmul.f32 %v320, %v355
    %v433 = vmul.f32 %v321, %v360
    %v434 = vmul.f32 %v322, %v365
    %v435 = vmul.f32 %v323, %v370
    %v436 = vmul.f32 %v324, %v375
    %v437 = vmul.f32 %v325, %v380
    %v438 = vmul.f32 %v326, %v385
    %v439 = vmul.f32 %v327, %v390
    %v440 = vmul.f32 %v328, %v395
    %v441 = vmul.f32 %v329, %v400
    %v442 = vmul.f32 %v330, %v405
    %v443 = vmul.f32 %v331, %v410
    %v444 = vmul.f32 %v332, %v415
    %v445 = vmul.f32 %v333, %v420
    %v446 = vmul.f32 %v334, %v425
    %v447 = vmul.f32 %v335, %v430
    %v448 = vld [vmem:[%s3] sm:$0x1]
    %v450 = vlaneseq
    %v451 = vshrl.u32 %v450, 7
    %v452 = vsub.s32 0, %v451
    %v453 = vrot.slane %v448, %v452
    %v455 = vadd.f32 %v432, %v453
    %v456 = vadd.f32 %v433, %v453
    %v457 = vadd.f32 %v434, %v453
    %v458 = vadd.f32 %v435, %v453
    %v459 = vadd.f32 %v436, %v453
    %v460 = vadd.f32 %v437, %v453
    %v461 = vadd.f32 %v438, %v453
    %v462 = vadd.f32 %v439, %v453
    %v463 = vadd.f32 %v440, %v453
    %v464 = vadd.f32 %v441, %v453
    %v465 = vadd.f32 %v442, %v453
    %v466 = vadd.f32 %v443, %v453
    %v467 = vadd.f32 %v444, %v453
    %v468 = vadd.f32 %v445, %v453
    %v469 = vadd.f32 %v446, %v453
    %v470 = vadd.f32 %v447, %v453
    %v471 = vmax.f32 %v455, 0.0
    %v472 = vmax.f32 %v456, 0.0
    %v473 = vmax.f32 %v457, 0.0
    %v474 = vmax.f32 %v458, 0.0
    %v475 = vmax.f32 %v459, 0.0
    %v476 = vmax.f32 %v460, 0.0
    %v477 = vmax.f32 %v461, 0.0
    %v478 = vmax.f32 %v462, 0.0
    %v479 = vmax.f32 %v463, 0.0
    %v480 = vmax.f32 %v464, 0.0
    %v481 = vmax.f32 %v465, 0.0
    %v482 = vmax.f32 %v466, 0.0
    %v483 = vmax.f32 %v467, 0.0
    %v484 = vmax.f32 %v468, 0.0
    %v485 = vmax.f32 %v469, 0.0
    %v486 = vmax.f32 %v470, 0.0
    %v487 = vpack.c.bf16 %v472, %v471
    %v488 = vpack.c.bf16 %v474, %v473
    %v489 = vpack.c.bf16 %v476, %v475
    %v490 = vpack.c.bf16 %v478, %v477
    %v491 = vpack.c.bf16 %v480, %v479
    %v492 = vpack.c.bf16 %v482, %v481
    %v493 = vpack.c.bf16 %v484, %v483
    %v494 = vpack.c.bf16 %v486, %v485
    %v495 = vld [vmem:[%s4] sm:$0xf]
    %v496 = vld [vmem:[%s4 + $0x4] sm:$0xf]
    %v497 = vld [vmem:[%s4 + $0x8] sm:$0xf]
    %v498 = vld [vmem:[%s4 + $0xc] sm:$0xf]
    %v499 = vld [vmem:[%s4 + $0x10] sm:$0xf]
    %v500 = vld [vmem:[%s4 + $0x14] sm:$0xf]
    %v501 = vld [vmem:[%s4 + $0x18] sm:$0xf]
    %v502 = vld [vmem:[%s4 + $0x1c] sm:$0xf]
    %v503 = vld [vmem:[%s4 + $0x20] sm:$0xf]
    %v504 = vld [vmem:[%s4 + $0x24] sm:$0xf]
    %v505 = vld [vmem:[%s4 + $0x28] sm:$0xf]
    %v506 = vld [vmem:[%s4 + $0x2c] sm:$0xf]
    %v507 = vld [vmem:[%s4 + $0x30] sm:$0xf]
    %v508 = vld [vmem:[%s4 + $0x34] sm:$0xf]
    %v509 = vld [vmem:[%s4 + $0x38] sm:$0xf]
    %v510 = vld [vmem:[%s4 + $0x3c] sm:$0xf]
    %v511 = vld [vmem:[%s5] sm:$0x1]
    %v513 = vlaneseq
    %v514 = vshrl.u32 %v513, 7
    %v515 = vsub.s32 0, %v514
    %v516 = vrot.slane %v511, %v515
    %v534 = vunpack.c.l.b16 %v495
    %v535 = vunpack.c.l.b16 %v496
    %v536 = vunpack.c.l.b16 %v497
    %v537 = vunpack.c.l.b16 %v498
    %v538 = vunpack.c.l.b16 %v499
    %v539 = vunpack.c.l.b16 %v500
    %v540 = vunpack.c.l.b16 %v501
    %v541 = vunpack.c.l.b16 %v502
    %v542 = vunpack.c.l.b16 %v503
    %v543 = vunpack.c.l.b16 %v504
    %v544 = vunpack.c.l.b16 %v505
    %v545 = vunpack.c.l.b16 %v506
    %v546 = vunpack.c.l.b16 %v507
    %v547 = vunpack.c.l.b16 %v508
    %v548 = vunpack.c.l.b16 %v509
    %v549 = vunpack.c.l.b16 %v510
    %v550 = vpack.c.b16 %v535, %v534
    %v551 = vpack.c.b16 %v537, %v536
    %v552 = vpack.c.b16 %v539, %v538
    %v553 = vpack.c.b16 %v541, %v540
    %v554 = vpack.c.b16 %v543, %v542
    %v555 = vpack.c.b16 %v545, %v544
    %v556 = vpack.c.b16 %v547, %v546
    %v557 = vpack.c.b16 %v549, %v548
    %566 = vmatprep.subr.bf16.mxu0 0
    %567 = vmatpush1.bf16.msra.mxu0 %v550
    %568 = vmatprep.subr.bf16.mxu0 0
    %569 = vmatpush1.bf16.msra.mxu0 %v551
    %570 = vmatprep.subr.bf16.mxu0 0
    %571 = vmatpush1.bf16.msra.mxu0 %v552
    %572 = vmatprep.subr.bf16.mxu0 0
    %573 = vmatpush1.bf16.msra.mxu0 %v553
    %574 = vmatprep.subr.bf16.mxu0 0
    %575 = vmatpush1.bf16.msra.mxu0 %v554
    %576 = vmatprep.subr.bf16.mxu0 0
    %577 = vmatpush1.bf16.msra.mxu0 %v555
    %578 = vmatprep.subr.bf16.mxu0 0
    %579 = vmatpush1.bf16.msra.mxu0 %v556
    %580 = vmatprep.subr.bf16.mxu0 0
    %581 = vmatpush1.bf16.msra.mxu0 %v557
    %582 = vmatprep.subr.bf16.mxu0 0
    %583 = vmatpush1.bf16.msra.mxu0 0
    %584 = vmatprep.subr.bf16.mxu0 0
    %585 = vmatpush1.bf16.msra.mxu0 0
    %586 = vmatprep.subr.bf16.mxu0 0
    %587 = vmatpush1.bf16.msra.mxu0 0
    %588 = vmatprep.subr.bf16.mxu0 0
    %589 = vmatpush1.bf16.msra.mxu0 0
    %590 = vmatprep.subr.bf16.mxu0 0
    %591 = vmatpush1.bf16.msra.mxu0 0
    %592 = vmatprep.subr.bf16.mxu0 0
    %593 = vmatpush1.bf16.msra.mxu0 0
    %594 = vmatprep.subr.bf16.mxu0 0
    %595 = vmatpush1.bf16.msra.mxu0 0
    %596 = vmatprep.subr.bf16.mxu0 0
    %597 = vmatpush1.bf16.msra.mxu0 0
    %598 = vmatprep.mubr.bf16.mxu0 0
    %599 = vmatmul.mubr.bf16.gmra.mrb[0].mxu0 %v487
    %v600 = vpop.f32.mrb[0].mxu0
    %v601 = vadd.f32 %v516, %v600
    %v602 = vpop.f32.mrb[0].mxu0
    %v603 = vpop.f32.mrb[0].mxu0
    %v604 = vadd.f32 %v516, %v603
    %v605 = vpop.f32.mrb[0].mxu0
    %606 = vmatprep.mubr.bf16.mxu0 0
    %607 = vmatmul.mubr.bf16.gmra.mrb[0].mxu0 %v488
    %v608 = vpop.f32.mrb[0].mxu0
    %v609 = vadd.f32 %v516, %v608
    %v610 = vpop.f32.mrb[0].mxu0
    %v611 = vpop.f32.mrb[0].mxu0
    %v612 = vadd.f32 %v516, %v611
    %v613 = vpop.f32.mrb[0].mxu0
    %614 = vmatprep.mubr.bf16.mxu0 0
    %615 = vmatmul.mubr.bf16.gmra.mrb[0].mxu0 %v489
    %v616 = vpop.f32.mrb[0].mxu0
    %v617 = vadd.f32 %v516, %v616
    %v618 = vpop.f32.mrb[0].mxu0
    %v619 = vpop.f32.mrb[0].mxu0
    %v620 = vadd.f32 %v516, %v619
    %v621 = vpop.f32.mrb[0].mxu0
    %622 = vmatprep.mubr.bf16.mxu0 0
    %623 = vmatmul.mubr.bf16.gmra.mrb[0].mxu0 %v490
    %v624 = vpop.f32.mrb[0].mxu0
    %v625 = vadd.f32 %v516, %v624
    %v626 = vpop.f32.mrb[0].mxu0
    %v627 = vpop.f32.mrb[0].mxu0
    %v628 = vadd.f32 %v516, %v627
    %v629 = vpop.f32.mrb[0].mxu0
    %630 = vmatprep.mubr.bf16.mxu0 0
    %631 = vmatmul.mubr.bf16.gmra.mrb[0].mxu0 %v491
    %v632 = vpop.f32.mrb[0].mxu0
    %v633 = vadd.f32 %v516, %v632
    %v634 = vpop.f32.mrb[0].mxu0
    %v635 = vpop.f32.mrb[0].mxu0
    %v636 = vadd.f32 %v516, %v635
    %v637 = vpop.f32.mrb[0].mxu0
    %638 = vmatprep.mubr.bf16.mxu0 0
    %639 = vmatmul.mubr.bf16.gmra.mrb[0].mxu0 %v492
    %v640 = vpop.f32.mrb[0].mxu0
    %v641 = vadd.f32 %v516, %v640
    %v642 = vpop.f32.mrb[0].mxu0
    %v643 = vpop.f32.mrb[0].mxu0
    %v644 = vadd.f32 %v516, %v643
    %v645 = vpop.f32.mrb[0].mxu0
    %646 = vmatprep.mubr.bf16.mxu0 0
    %647 = vmatmul.mubr.bf16.gmra.mrb[0].mxu0 %v493
    %v648 = vpop.f32.mrb[0].mxu0
    %v649 = vadd.f32 %v516, %v648
    %v650 = vpop.f32.mrb[0].mxu0
    %v651 = vpop.f32.mrb[0].mxu0
    %v652 = vadd.f32 %v516, %v651
    %v653 = vpop.f32.mrb[0].mxu0
    %654 = vmatprep.mubr.bf16.mxu0 0
    %655 = vmatmul.mubr.bf16.gmra.mrb[0].mxu0 %v494
    %v656 = vpop.f32.mrb[0].mxu0
    %v657 = vadd.f32 %v516, %v656
    %v658 = vpop.f32.mrb[0].mxu0
    %v659 = vpop.f32.mrb[0].mxu0
    %v660 = vadd.f32 %v516, %v659
    %v661 = vpop.f32.mrb[0].mxu0
    %662 = vdwg.mxu0
    %663 = vst [vmem:[%s6] sm:$0xff] %v601
    %664 = vst [vmem:[%s6 + $0x8] sm:$0xff] %v604
    %665 = vst [vmem:[%s6 + $0x10] sm:$0xff] %v609
    %666 = vst [vmem:[%s6 + $0x18] sm:$0xff] %v612
    %667 = vst [vmem:[%s6 + $0x20] sm:$0xff] %v617
    %668 = vst [vmem:[%s6 + $0x28] sm:$0xff] %v620
    %669 = vst [vmem:[%s6 + $0x30] sm:$0xff] %v625
    %670 = vst [vmem:[%s6 + $0x38] sm:$0xff] %v628
    %671 = vst [vmem:[%s6 + $0x40] sm:$0xff] %v633
    %672 = vst [vmem:[%s6 + $0x48] sm:$0xff] %v636
    %673 = vst [vmem:[%s6 + $0x50] sm:$0xff] %v641
    %674 = vst [vmem:[%s6 + $0x58] sm:$0xff] %v644
    %675 = vst [vmem:[%s6 + $0x60] sm:$0xff] %v649
    %676 = vst [vmem:[%s6 + $0x68] sm:$0xff] %v652
    %677 = vst [vmem:[%s6 + $0x70] sm:$0xff] %v657
    %678 = vst [vmem:[%s6 + $0x78] sm:$0xff] %v660
  $region33: #{feature_imputer_forward.3} parent=0 // pred_fallthru
    _
  // Predicated region
  $region34: #{feature_imputer_forward.3} parent=0 // pred_check
    _
  $region35: #{feature_imputer_forward.3} parent=0 // pred_check_branch
    %680 = sbr.rel (0) target = $region37
  $region36: #{feature_imputer_forward.3} parent=0 // pred_region
    _
  $region37: #{feature_imputer_forward.3} parent=0 // pred_fallthru
    _
  // Predicated region
  $region38: #{feature_imputer_forward.3} parent=0 // pred_check
    _
  $region39: #{feature_imputer_forward.3} parent=0 // pred_check_branch
    %682 = sbr.rel (0) target = $region41
  $region40: #{feature_imputer_forward.3} parent=0 // pred_region
    _
  $region41: #{feature_imputer_forward.3} parent=0 // pred_fallthru
    _

</llo_original>
